<compile_context>
chip_gen: v7x
topology: tpu7x:2x2x1
jax: 0.10.0
libtpu: 0.0.40
codegen_flags: <defaults>
</compile_context>

<pallas_src>
import functools

import numpy as np
import jax
import jax.numpy as jnp
from jax.experimental import pallas as pl
from jax.experimental.pallas import tpu as pltpu


# --------------------------------------------------------------------------
# Config (mirrors the torch `config` object)
# --------------------------------------------------------------------------
class Cfg:
    filter_width = 5        # must be odd so the Gaussian branch preserves H,W
    nsig = 3.0
    ratio = 4.0
    sub_low_ratio = 1.0
    n_filters = 8           # ngf
    n_downs = 5
    input_nc = 4            # = 2 * image channels (x concatenated with hfc(x))
    output_nc = 2


# --------------------------------------------------------------------------
# Fused conv matmul kernel:  out = post_act(pre_act(A) @ B + bias)
# A = im2col patches (bf16), B = weight matrix (bf16), f32 accumulation.
# --------------------------------------------------------------------------
def _fused_matmul_kernel(a_ref, b_ref, bias_ref, o_ref, acc_ref, *,
                         pre_act, post_act):
    k = pl.program_id(2)

    @pl.when(k == 0)
    def _():
        acc_ref[...] = jnp.zeros_like(acc_ref)

    a = a_ref[...]
    # pre-activation fused on the A side (LeakyReLU(0)=ReLU(0)=0, so it
    # commutes with the zero spatial / K / M padding).
    if pre_act == "lrelu":
        a = jnp.where(a >= 0, a, 0.2 * a)
    elif pre_act == "relu":
        a = jnp.maximum(a, 0.0)

    acc_ref[...] += jnp.dot(a, b_ref[...], preferred_element_type=jnp.float32)

    # epilogue: store only on the last k step (review item), fuse bias + act.
    @pl.when(k == pl.num_programs(2) - 1)
    def _():
        r = acc_ref[...] + bias_ref[...]
        if post_act == "tanh":
            r = jnp.tanh(r)
        elif post_act == "relu":
            r = jnp.maximum(r, 0.0)
        o_ref[...] = r.astype(o_ref.dtype)


def _round_up(x, m):
    return (x + m - 1) // m * m


def _pick_tile(size_padded, cands=(512, 256, 128)):
    for t in cands:
        if size_padded % t == 0:
            return t
    return 128


def fused_matmul(a, b, bias=None, pre_act=None, post_act=None):
    """out = post_act(pre_act(a) @ b + bias);  a:[M,K], b:[K,N] -> [M,N] f32."""
    M, K = a.shape
    K2, N = b.shape
    assert K == K2
    if bias is None:
        bias = jnp.zeros((N,), jnp.float32)

    if M < 128:
        # Tiny deep-UNet levels (spatial 4x4 / 2x2 / 1x1): padding M up to an
        # MXU tile wastes >75% of the work; let XLA handle them (review item).
        af = a.astype(jnp.float32)
        if pre_act == "lrelu":
            af = jnp.where(af >= 0, af, 0.2 * af)
        elif pre_act == "relu":
            af = jnp.maximum(af, 0.0)
        r = af @ b.astype(jnp.float32) + bias[None, :].astype(jnp.float32)
        if post_act == "tanh":
            r = jnp.tanh(r)
        elif post_act == "relu":
            r = jnp.maximum(r, 0.0)
        return r

    Mp = _round_up(M, 256) if M > 128 else 128
    Kp = _round_up(K, 128)
    Np = _round_up(N, 128)
    tm = _pick_tile(Mp)
    tk = _pick_tile(Kp)
    tn = min(Np, 512)
    if Np % tn:
        tn = 128
    # v7x megacore: keep >=2 blocks on a parallel axis when M allows it.
    if Mp // tm == 1 and Np // tn == 1 and Mp >= 256:
        tm = Mp // 2

    a_p = jnp.pad(a.astype(jnp.bfloat16), ((0, Mp - M), (0, Kp - K)))
    b_p = jnp.pad(b.astype(jnp.bfloat16), ((0, Kp - K), (0, Np - N)))
    bias_p = jnp.pad(bias.astype(jnp.float32), (0, Np - N)).reshape(1, Np)

    kern = functools.partial(_fused_matmul_kernel,
                             pre_act=pre_act, post_act=post_act)
    out = pl.pallas_call(
        kern,
        out_shape=jax.ShapeDtypeStruct((Mp, Np), jnp.float32),
        grid=(Mp // tm, Np // tn, Kp // tk),
        in_specs=[pl.BlockSpec((tm, tk), lambda i, j, k: (i, k)),
                  pl.BlockSpec((tk, tn), lambda i, j, k: (k, j)),
                  pl.BlockSpec((1, tn), lambda i, j, k: (0, j))],
        out_specs=pl.BlockSpec((tm, tn), lambda i, j, k: (i, j)),
        scratch_shapes=[pltpu.VMEM((tm, tn), jnp.float32)],
        compiler_params=pltpu.CompilerParams(
            dimension_semantics=("parallel", "parallel", "arbitrary")),
    )(a_p, b_p, bias_p)
    return out[:M, :N]


# --------------------------------------------------------------------------
# Element-wise Pallas kernels (HFC post-op and final mask): single
# full-array lane-dense block -> one launch, no (8,128) grid stepping.
# --------------------------------------------------------------------------
def _hfc_post_kernel(x_ref, g_ref, m_ref, o_ref, *, ratio, slr):
    res = ratio * (x_ref[...] - slr * g_ref[...])
    res = jnp.clip(res, -1.0, 1.0)
    o_ref[...] = (res + 1.0) * m_ref[...] - 1.0


def _mask_out_kernel(x_ref, m_ref, o_ref):
    o_ref[...] = (x_ref[...] + 1.0) * m_ref[...] - 1.0


def ew_full_block_call(kernel_fn, *arrays):
    shape = arrays[0].shape
    n = arrays[0].size
    pad = (-n) % 1024                       # 8 sublanes * 128 lanes
    rows = (n + pad) // 128
    two_d = [jnp.pad(jnp.ravel(a).astype(jnp.float32), (0, pad)).reshape(rows, 128)
             for a in arrays]
    out = pl.pallas_call(                   # whole array as one VMEM block
        kernel_fn,
        out_shape=jax.ShapeDtypeStruct((rows, 128), jnp.float32),
    )(*two_d)
    return out.reshape(-1)[:n].reshape(shape)


# --------------------------------------------------------------------------
# Convolutions: NHWC im2col (JAX glue) + fused Pallas matmul.
# --------------------------------------------------------------------------
def im2col_nhwc(xp, kh, kw, stride):
    """xp: [B, Hp, Wp, C] already padded -> ([B*Ho*Wo, kh*kw*C], Ho, Wo)."""
    B, Hp, Wp, C = xp.shape
    Ho = (Hp - kh) // stride + 1
    Wo = (Wp - kw) // stride + 1
    cols = []
    for di in range(kh):
        for dj in range(kw):
            cols.append(xp[:, di:di + stride * (Ho - 1) + 1:stride,
                           dj:dj + stride * (Wo - 1) + 1:stride, :])
    p = jnp.stack(cols, axis=3)             # [B, Ho, Wo, kh*kw, C]
    return p.reshape(B * Ho * Wo, kh * kw * C), Ho, Wo


def conv2d_down(x, w_mat, cout, pre_act=None):
    """x: [B,H,W,C] NHWC; w_mat: [16*Cin, Cout]; stride-2 4x4 conv, pad 1."""
    B, H, W, C = x.shape
    xp = jnp.pad(x.astype(jnp.bfloat16), ((0, 0), (1, 1), (1, 1), (0, 0)))
    patches, Ho, Wo = im2col_nhwc(xp, 4, 4, 2)
    out = fused_matmul(patches, w_mat, None, pre_act=pre_act)
    return out.reshape(B, Ho, Wo, cout)


def conv_transpose2d_up(x, w_packed, cout, bias_packed=None,
                        pre_act=None, post_act=None):
    """Stride-2 4x4 ConvTranspose via 4-phase sub-pixel decomposition.

    x: [B,H,W,Cin] NHWC; w_packed: [4*Cin, 4*Cout] (phase-packed along N);
    output: [B, 2H, 2W, Cout].
    """
    B, H, W, C = x.shape
    xp = jnp.pad(x.astype(jnp.bfloat16), ((0, 0), (1, 1), (1, 1), (0, 0)))
    patches, Hw, Ww = im2col_nhwc(xp, 2, 2, 1)          # Hw=H+1, Ww=W+1
    big = fused_matmul(patches, w_packed, bias_packed,
                       pre_act=pre_act, post_act=post_act)
    big = big.reshape(B, Hw, Ww, 2, 2, cout)            # (.., r, s, Cout)
    p00 = big[:, 0:H,     0:W,     0, 0, :]
    p01 = big[:, 0:H,     1:1 + W, 0, 1, :]
    p10 = big[:, 1:1 + H, 0:W,     1, 0, :]
    p11 = big[:, 1:1 + H, 1:1 + W, 1, 1, :]
    row0 = jnp.stack([p00, p01], axis=3).reshape(B, H, 2 * W, cout)
    row1 = jnp.stack([p10, p11], axis=3).reshape(B, H, 2 * W, cout)
    return jnp.stack([row0, row1], axis=2).reshape(B, 2 * H, 2 * W, cout)


# --------------------------------------------------------------------------
# Weight pre-packing (done once at parameter construction time)
# --------------------------------------------------------------------------
def pack_conv_weight(w):
    """torch Conv2d weight [Cout, Cin, kh, kw] -> [kh*kw*Cin, Cout]."""
    cout, cin, kh, kw = w.shape
    return w.transpose(2, 3, 1, 0).reshape(kh * kw * cin, cout)


def pack_convtranspose_weight(wt):
    """torch ConvTranspose2d weight [Cin, Cout, 4, 4] -> [4*Cin, 4*Cout].

    Row order matches im2col of a 2x2 window: (dh, dw, cin).
    Column block p = 2r+s holds the sub-kernel for output phase (2i+r, 2j+s):
      y[2i]   = wt[3]*x[i-1] + wt[1]*x[i]      (per dim, r = 0)
      y[2i+1] = wt[2]*x[i]   + wt[0]*x[i+1]    (per dim, r = 1)
    """
    cin, cout = wt.shape[:2]
    tap = ((3, 1), (2, 0))                  # tap[r][dh]
    cols = []
    for r in range(2):
        for s in range(2):
            rows = []
            for dh in range(2):
                for dw in range(2):
                    rows.append(wt[:, :, tap[r][dh], tap[s][dw]])  # [Cin,Cout]
            cols.append(jnp.concatenate(rows, axis=0))             # [4*Cin,Cout]
    return jnp.concatenate(cols, axis=1)                            # [4*Cin,4*Cout]


# --------------------------------------------------------------------------
# HFC filter (NHWC)
# --------------------------------------------------------------------------
def gaussian_kernel_1d(klen, nsig):
    i = np.arange(klen, dtype=np.float64)
    g = np.exp(-((i - (klen - 1) / 2.0) ** 2) / (2.0 * nsig ** 2))
    g = g / g.sum()
    return jnp.asarray(g, dtype=jnp.float32)


def gaussian_blur_nhwc(x, g1d):
    """Separable 5+5-tap depthwise blur with replication padding (VPU/XLA).

    Equivalent to the 2D outer(g,g) blur of the reference Gaussian_kernel;
    avoids the <1%-utilised N=1 matmul of the previous revision.
    """
    k = g1d.shape[0]
    p = k // 2
    B, H, W, C = x.shape
    xh = jnp.pad(x, ((0, 0), (p, p), (0, 0), (0, 0)), mode="edge")
    x1 = sum(g1d[t] * xh[:, t:t + H, :, :] for t in range(k))
    xw = jnp.pad(x1, ((0, 0), (0, 0), (p, p), (0, 0)), mode="edge")
    return sum(g1d[t] * xw[:, :, t:t + W, :] for t in range(k))


def median_padding_nhwc(x, mask):
    # TODO(synk): median is a sort-based reduction with no clean Pallas
    # equivalent; computed in plain JAX (torch.median = lower middle element).
    B, H, W, C = x.shape
    med = jnp.sort(x.reshape(B, H * W, C), axis=1)[:, (H * W - 1) // 2, :] + 0.2
    med = med[:, None, None, :]                          # [B,1,1,C]
    return mask * x + (1.0 - mask) * med


def hfc_filter_nhwc(x, mask, g1d, cfg):
    xm = median_padding_nhwc(x, mask)
    g = gaussian_blur_nhwc(xm, g1d)
    mask_b = jnp.broadcast_to(mask, xm.shape)
    return ew_full_block_call(
        functools.partial(_hfc_post_kernel, ratio=cfg.ratio, slr=cfg.sub_low_ratio),
        xm, g, mask_b)


# --------------------------------------------------------------------------
# UNet generator (norm_layer = BatchNorm2d, training-mode batch statistics)
# --------------------------------------------------------------------------
def batch_norm_nhwc(x, gamma, beta, eps=1e-5):
    mean = x.mean(axis=(0, 1, 2), keepdims=True)
    var = ((x - mean) ** 2).mean(axis=(0, 1, 2), keepdims=True)   # biased
    return gamma * (x - mean) * jax.lax.rsqrt(var + eps) + beta


def make_block_params(key, outer_nc, inner_nc, input_nc=None, sub=None,
                      outermost=False, innermost=False, scale=0.05):
    if input_nc is None:
        input_nc = outer_nc
    k0, k1 = jax.random.split(key)
    p = {"outermost": outermost, "innermost": innermost, "sub": sub,
         "inner_nc": inner_nc, "outer_nc": outer_nc}
    # downconv: Conv2d(input_nc, inner_nc, 4, 2, 1, bias=False)  (BatchNorm => no bias)
    dw = scale * jax.random.normal(k0, (inner_nc, input_nc, 4, 4), jnp.float32)
    p["down_w"] = pack_conv_weight(dw)                       # [16*Cin, Cout]
    up_in = inner_nc if innermost else inner_nc * 2
    uw = scale * jax.random.normal(k1, (up_in, outer_nc, 4, 4), jnp.float32)
    p["up_w"] = pack_convtranspose_weight(uw)                # [4*Cin, 4*Cout]
    if outermost:
        # ConvTranspose2d(inner_nc*2, outer_nc, 4, 2, 1, bias=True); phase-packed bias
        p["up_b"] = jnp.zeros((4 * outer_nc,), jnp.float32)
    else:
        p["up_b"] = None
        p["upnorm_g"] = jnp.ones((outer_nc,), jnp.float32)
        p["upnorm_b"] = jnp.zeros((outer_nc,), jnp.float32)
        if not innermost:
            p["downnorm_g"] = jnp.ones((inner_nc,), jnp.float32)
            p["downnorm_b"] = jnp.zeros((inner_nc,), jnp.float32)
    return p


def make_unet_params(key, cfg):
    ngf, nd = cfg.n_filters, cfg.n_downs
    keys = iter(jax.random.split(key, nd + 2))
    blk = make_block_params(next(keys), ngf * 8, ngf * 8, innermost=True)
    for _ in range(nd - 5):
        blk = make_block_params(next(keys), ngf * 8, ngf * 8, sub=blk)
    blk = make_block_params(next(keys), ngf * 4, ngf * 8, sub=blk)
    blk = make_block_params(next(keys), ngf * 2, ngf * 4, sub=blk)
    blk = make_block_params(next(keys), ngf, ngf * 2, sub=blk)
    blk = make_block_params(next(keys), cfg.output_nc, ngf,
                            input_nc=cfg.input_nc, sub=blk, outermost=True)
    return blk


def unet_block_forward(x, p):
    """x: NHWC.  Pre/post activations are fused into the conv matmul kernel."""
    inner, outer = p["inner_nc"], p["outer_nc"]
    if p["outermost"]:
        h = conv2d_down(x, p["down_w"], inner, pre_act=None)
        h = unet_block_forward(h, p["sub"])
        # ReLU fused on A side, bias + Tanh fused in the matmul epilogue.
        return conv_transpose2d_up(h, p["up_w"], outer, p["up_b"],
                                   pre_act="relu", post_act="tanh")
    elif p["innermost"]:
        h = conv2d_down(x, p["down_w"], inner, pre_act="lrelu")
        h = conv_transpose2d_up(h, p["up_w"], outer, None, pre_act="relu")
        h = batch_norm_nhwc(h, p["upnorm_g"], p["upnorm_b"])
        return jnp.concatenate([x, h], axis=-1)
    else:
        h = conv2d_down(x, p["down_w"], inner, pre_act="lrelu")
        h = batch_norm_nhwc(h, p["downnorm_g"], p["downnorm_b"])
        h = unet_block_forward(h, p["sub"])
        h = conv_transpose2d_up(h, p["up_w"], outer, None, pre_act="relu")
        h = batch_norm_nhwc(h, p["upnorm_g"], p["upnorm_b"])
        return jnp.concatenate([x, h], axis=-1)


# --------------------------------------------------------------------------
# ArcNetwork forward (NCHW in / NCHW out; NHWC internally)
# --------------------------------------------------------------------------
def arcnet_forward(x_nchw, mask_nchw, g1d, unet_params, cfg):
    x = jnp.transpose(x_nchw, (0, 2, 3, 1))          # boundary NCHW -> NHWC
    mask = jnp.transpose(mask_nchw, (0, 2, 3, 1))
    h_x = hfc_filter_nhwc(x, mask, g1d, cfg)
    xin = jnp.concatenate([x, h_x], axis=-1)         # -> cfg.input_nc channels
    out = unet_block_forward(xin, unet_params)
    mask_b = jnp.broadcast_to(mask, out.shape)
    out = ew_full_block_call(_mask_out_kernel, out, mask_b)   # (out+1)*mask - 1
    return jnp.transpose(out, (0, 3, 1, 2))          # boundary NHWC -> NCHW


# --------------------------------------------------------------------------
if __name__ == "__main__":
    cfg = Cfg()
    key = jax.random.PRNGKey(0)
    kx, km, kp = jax.random.split(key, 3)

    B, C, H, W = 2, 2, 32, 32                        # cfg.input_nc = 2*C
    x = jax.random.uniform(kx, (B, C, H, W), jnp.float32, -1.0, 1.0)
    mask = (jax.random.uniform(km, (B, 1, H, W), jnp.float32) > 0.3).astype(jnp.float32)

    g1d = gaussian_kernel_1d(cfg.filter_width, cfg.nsig)
    unet_params = make_unet_params(kp, cfg)

    fwd = jax.jit(lambda x_, m_: arcnet_forward(x_, m_, g1d, unet_params, cfg))
    y = jax.block_until_ready(fwd(x, mask))

    assert y.shape == (B, cfg.output_nc, H, W), y.shape
    assert bool(jnp.all(jnp.isfinite(y)))
    print("KERNEL_OK")
</pallas_src>

<mosaic_0001>
module attributes {stable_mosaic.version = 11 : i64} {
  func.func @_hfc_post_kernel(%arg0: memref<32x128xf32, #tpu.memory_space<vmem>>, %arg1: memref<32x128xf32, #tpu.memory_space<vmem>>, %arg2: memref<32x128xf32, #tpu.memory_space<vmem>>, %arg3: memref<32x128xf32, #tpu.memory_space<vmem>>) attributes {dimension_semantics = [], scalar_prefetch = 0 : i64, scratch_operands = 0 : i64, tpu.core_type = #tpu.core_type<tc>} {
    %c0 = arith.constant 0 : index
    %c0_0 = arith.constant 0 : index
    %0 = vector.load %arg0[%c0, %c0_0] : memref<32x128xf32, #tpu.memory_space<vmem>>, vector<32x128xf32>
    %c0_1 = arith.constant 0 : index
    %c0_2 = arith.constant 0 : index
    %1 = vector.load %arg1[%c0_1, %c0_2] : memref<32x128xf32, #tpu.memory_space<vmem>>, vector<32x128xf32>
    %cst = arith.constant 1.000000e+00 : f32
    %2 = vector.broadcast %cst : f32 to vector<32x128xf32>
    %3 = arith.mulf %2, %1 : vector<32x128xf32>
    %4 = arith.subf %0, %3 : vector<32x128xf32>
    %cst_3 = arith.constant 4.000000e+00 : f32
    %5 = vector.broadcast %cst_3 : f32 to vector<32x128xf32>
    %6 = arith.mulf %5, %4 : vector<32x128xf32>
    %cst_4 = arith.constant -1.000000e+00 : f32
    %cst_5 = arith.constant 1.000000e+00 : f32
    %7 = vector.broadcast %cst_4 : f32 to vector<32x128xf32>
    %8 = arith.maximumf %7, %6 : vector<32x128xf32>
    %9 = vector.broadcast %cst_5 : f32 to vector<32x128xf32>
    %10 = arith.minimumf %9, %8 : vector<32x128xf32>
    %cst_6 = arith.constant 1.000000e+00 : f32
    %11 = vector.broadcast %cst_6 : f32 to vector<32x128xf32>
    %12 = arith.addf %10, %11 : vector<32x128xf32>
    %c0_7 = arith.constant 0 : index
    %c0_8 = arith.constant 0 : index
    %13 = vector.load %arg2[%c0_7, %c0_8] : memref<32x128xf32, #tpu.memory_space<vmem>>, vector<32x128xf32>
    %14 = arith.mulf %12, %13 : vector<32x128xf32>
    %cst_9 = arith.constant 1.000000e+00 : f32
    %15 = vector.broadcast %cst_9 : f32 to vector<32x128xf32>
    %16 = arith.subf %14, %15 : vector<32x128xf32>
    %c0_10 = arith.constant 0 : index
    %c0_11 = arith.constant 0 : index
    %17 = vector.load %arg3[%c0_10, %c0_11] : memref<32x128xf32, #tpu.memory_space<vmem>>, vector<32x128xf32>
    tpu.vector_store %arg3[%c0_10, %c0_11], %16 {strides = array<i32>} : memref<32x128xf32, #tpu.memory_space<vmem>>, vector<32x128xf32>,
    return
  }
}

module attributes {stable_mosaic.version = 11 : i64} {
  func.func @_fused_matmul_kernel(%arg0: i32, %arg1: i32, %arg2: i32, %arg3: memref<256x128xbf16, #tpu.memory_space<vmem>>, %arg4: memref<128x128xbf16, #tpu.memory_space<vmem>>, %arg5: memref<1x128xf32, #tpu.memory_space<vmem>>, %arg6: memref<256x128xf32, #tpu.memory_space<vmem>>, %arg7: memref<256x128xf32, #tpu.memory_space<vmem>>) attributes {dimension_semantics = [#tpu.dimension_semantics<parallel>, #tpu.dimension_semantics<parallel>, #tpu.dimension_semantics<arbitrary>], iteration_bounds = array<i64: 2, 1, 1>, scalar_prefetch = 0 : i64, scratch_operands = 1 : i64, tpu.core_type = #tpu.core_type<tc>, window_params = [{transform_indices = @transform_0, window_bounds = array<i64: 256, 128>}, {transform_indices = @transform_1, window_bounds = array<i64: 128, 128>}, {transform_indices = @transform_2, window_bounds = array<i64: 1, 128>}, {transform_indices = @transform_3, window_bounds = array<i64: 256, 128>}]} {
    %c0_i32 = arith.constant 0 : i32
    %0 = arith.cmpi eq, %arg2, %c0_i32 : i32
    %1 = arith.extui %0 : i1 to i32
    %c0_i32_0 = arith.constant 0 : i32
    %2 = arith.cmpi ne, %1, %c0_i32_0 : i32
    scf.if %2 {
      %cst_10 = arith.constant 0.000000e+00 : f32
      %12 = vector.broadcast %cst_10 : f32 to vector<256x128xf32>
      %c0_11 = arith.constant 0 : index
      %c0_12 = arith.constant 0 : index
      %13 = vector.load %arg7[%c0_11, %c0_12] : memref<256x128xf32, #tpu.memory_space<vmem>>, vector<256x128xf32>
      tpu.vector_store %arg7[%c0_11, %c0_12], %12 {strides = array<i32>} : memref<256x128xf32, #tpu.memory_space<vmem>>, vector<256x128xf32>,
    } else {
    }
    %c0 = arith.constant 0 : index
    %c0_1 = arith.constant 0 : index
    %3 = vector.load %arg3[%c0, %c0_1] : memref<256x128xbf16, #tpu.memory_space<vmem>>, vector<256x128xbf16>
    %c0_2 = arith.constant 0 : index
    %c0_3 = arith.constant 0 : index
    %4 = vector.load %arg7[%c0_2, %c0_3] : memref<256x128xf32, #tpu.memory_space<vmem>>, vector<256x128xf32>
    %c0_4 = arith.constant 0 : index
    %c0_5 = arith.constant 0 : index
    %5 = vector.load %arg4[%c0_4, %c0_5] : memref<128x128xbf16, #tpu.memory_space<vmem>>, vector<128x128xbf16>
    %cst = arith.constant dense<0.000000e+00> : vector<256x128xf32>
    %6 = tpu.matmul %3, %5, %cst {dimension_numbers = #tpu.dot_dimension_numbers<[1], [0], [0], [1], [0, 0, 1, 1], [], []>} : vector<256x128xbf16>, vector<128x128xbf16>, vector<256x128xf32> -> vector<256x128xf32>
    %7 = arith.addf %4, %6 : vector<256x128xf32>
    %c0_6 = arith.constant 0 : index
    %c0_7 = arith.constant 0 : index
    %8 = vector.load %arg7[%c0_6, %c0_7] : memref<256x128xf32, #tpu.memory_space<vmem>>, vector<256x128xf32>
    tpu.vector_store %arg7[%c0_6, %c0_7], %7 {strides = array<i32>} : memref<256x128xf32, #tpu.memory_space<vmem>>, vector<256x128xf32>,
    %c0_i32_8 = arith.constant 0 : i32
    %9 = arith.cmpi eq, %arg2, %c0_i32_8 : i32
    %10 = arith.extui %9 : i1 to i32
    %c0_i32_9 = arith.constant 0 : i32
    %11 = arith.cmpi ne, %10, %c0_i32_9 : i32
    scf.if %11 {
      %c0_10 = arith.constant 0 : index
      %c0_11 = arith.constant 0 : index
      %12 = vector.load %arg7[%c0_10, %c0_11] : memref<256x128xf32, #tpu.memory_space<vmem>>, vector<256x128xf32>
      %c0_12 = arith.constant 0 : index
      %c0_13 = arith.constant 0 : index
      %13 = vector.load %arg5[%c0_12, %c0_13] : memref<1x128xf32, #tpu.memory_space<vmem>>, vector<1x128xf32>
      %14 = vector.broadcast %13 : vector<1x128xf32> to vector<256x128xf32>
      %15 = arith.addf %12, %14 : vector<256x128xf32>
      %c0_14 = arith.constant 0 : index
      %c0_15 = arith.constant 0 : index
      %16 = vector.load %arg6[%c0_14, %c0_15] : memref<256x128xf32, #tpu.memory_space<vmem>>, vector<256x128xf32>
      tpu.vector_store %arg6[%c0_14, %c0_15], %15 {strides = array<i32>} : memref<256x128xf32, #tpu.memory_space<vmem>>, vector<256x128xf32>,
    } else {
    }
    return
  }
  func.func @transform_0(%arg0: i32, %arg1: i32, %arg2: i32) -> (i32, i32) {
    %c0_i32 = arith.constant 0 : i32
    return %arg0, %arg2 : i32, i32
  }
  func.func @transform_1(%arg0: i32, %arg1: i32, %arg2: i32) -> (i32, i32) {
    %c0_i32 = arith.constant 0 : i32
    return %arg2, %arg1 : i32, i32
  }
  func.func @transform_2(%arg0: i32, %arg1: i32, %arg2: i32) -> (i32, i32) {
    %c0_i32 = arith.constant 0 : i32
    %c0_i32_0 = arith.constant 0 : i32
    return %c0_i32, %arg1 : i32, i32
  }
  func.func @transform_3(%arg0: i32, %arg1: i32, %arg2: i32) -> (i32, i32) {
    %c0_i32 = arith.constant 0 : i32
    return %arg0, %arg1 : i32, i32
  }
}

module attributes {stable_mosaic.version = 11 : i64} {
  func.func @_fused_matmul_kernel(%arg0: i32, %arg1: i32, %arg2: i32, %arg3: memref<128x128xbf16, #tpu.memory_space<vmem>>, %arg4: memref<128x128xbf16, #tpu.memory_space<vmem>>, %arg5: memref<1x128xf32, #tpu.memory_space<vmem>>, %arg6: memref<128x128xf32, #tpu.memory_space<vmem>>, %arg7: memref<128x128xf32, #tpu.memory_space<vmem>>) attributes {dimension_semantics = [#tpu.dimension_semantics<parallel>, #tpu.dimension_semantics<parallel>, #tpu.dimension_semantics<arbitrary>], iteration_bounds = array<i64: 1, 1, 1>, scalar_prefetch = 0 : i64, scratch_operands = 1 : i64, tpu.core_type = #tpu.core_type<tc>, window_params = [{transform_indices = @transform_0, window_bounds = array<i64: 128, 128>}, {transform_indices = @transform_1, window_bounds = array<i64: 128, 128>}, {transform_indices = @transform_2, window_bounds = array<i64: 1, 128>}, {transform_indices = @transform_3, window_bounds = array<i64: 128, 128>}]} {
    %c0_i32 = arith.constant 0 : i32
    %0 = arith.cmpi eq, %arg2, %c0_i32 : i32
    %1 = arith.extui %0 : i1 to i32
    %c0_i32_0 = arith.constant 0 : i32
    %2 = arith.cmpi ne, %1, %c0_i32_0 : i32
    scf.if %2 {
      %cst_12 = arith.constant 0.000000e+00 : f32
      %17 = vector.broadcast %cst_12 : f32 to vector<128x128xf32>
      %c0_13 = arith.constant 0 : index
      %c0_14 = arith.constant 0 : index
      %18 = vector.load %arg7[%c0_13, %c0_14] : memref<128x128xf32, #tpu.memory_space<vmem>>, vector<128x128xf32>
      tpu.vector_store %arg7[%c0_13, %c0_14], %17 {strides = array<i32>} : memref<128x128xf32, #tpu.memory_space<vmem>>, vector<128x128xf32>,
    } else {
    }
    %c0 = arith.constant 0 : index
    %c0_1 = arith.constant 0 : index
    %3 = vector.load %arg3[%c0, %c0_1] : memref<128x128xbf16, #tpu.memory_space<vmem>>, vector<128x128xbf16>
    %cst = arith.constant 0.000000e+00 : bf16
    %4 = vector.broadcast %cst : bf16 to vector<128x128xbf16>
    %5 = arith.cmpf oge, %3, %4 : vector<128x128xbf16>
    %cst_2 = arith.constant 2.001950e-01 : bf16
    %6 = vector.broadcast %cst_2 : bf16 to vector<128x128xbf16>
    %7 = arith.mulf %6, %3 : vector<128x128xbf16>
    %8 = arith.select %5, %3, %7 : vector<128x128xi1>, vector<128x128xbf16>
    %c0_3 = arith.constant 0 : index
    %c0_4 = arith.constant 0 : index
    %9 = vector.load %arg7[%c0_3, %c0_4] : memref<128x128xf32, #tpu.memory_space<vmem>>, vector<128x128xf32>
    %c0_5 = arith.constant 0 : index
    %c0_6 = arith.constant 0 : index
    %10 = vector.load %arg4[%c0_5, %c0_6] : memref<128x128xbf16, #tpu.memory_space<vmem>>, vector<128x128xbf16>
    %cst_7 = arith.constant dense<0.000000e+00> : vector<128x128xf32>
    %11 = tpu.matmul %8, %10, %cst_7 {dimension_numbers = #tpu.dot_dimension_numbers<[1], [0], [0], [1], [0, 0, 1, 1], [], []>} : vector<128x128xbf16>, vector<128x128xbf16>, vector<128x128xf32> -> vector<128x128xf32>
    %12 = arith.addf %9, %11 : vector<128x128xf32>
    %c0_8 = arith.constant 0 : index
    %c0_9 = arith.constant 0 : index
    %13 = vector.load %arg7[%c0_8, %c0_9] : memref<128x128xf32, #tpu.memory_space<vmem>>, vector<128x128xf32>
    tpu.vector_store %arg7[%c0_8, %c0_9], %12 {strides = array<i32>} : memref<128x128xf32, #tpu.memory_space<vmem>>, vector<128x128xf32>,
    %c0_i32_10 = arith.constant 0 : i32
    %14 = arith.cmpi eq, %arg2, %c0_i32_10 : i32
    %15 = arith.extui %14 : i1 to i32
    %c0_i32_11 = arith.constant 0 : i32
    %16 = arith.cmpi ne, %15, %c0_i32_11 : i32
    scf.if %16 {
      %c0_12 = arith.constant 0 : index
      %c0_13 = arith.constant 0 : index
      %17 = vector.load %arg7[%c0_12, %c0_13] : memref<128x128xf32, #tpu.memory_space<vmem>>, vector<128x128xf32>
      %c0_14 = arith.constant 0 : index
      %c0_15 = arith.constant 0 : index
      %18 = vector.load %arg5[%c0_14, %c0_15] : memref<1x128xf32, #tpu.memory_space<vmem>>, vector<1x128xf32>
      %19 = vector.broadcast %18 : vector<1x128xf32> to vector<128x128xf32>
      %20 = arith.addf %17, %19 : vector<128x128xf32>
      %c0_16 = arith.constant 0 : index
      %c0_17 = arith.constant 0 : index
      %21 = vector.load %arg6[%c0_16, %c0_17] : memref<128x128xf32, #tpu.memory_space<vmem>>, vector<128x128xf32>
      tpu.vector_store %arg6[%c0_16, %c0_17], %20 {strides = array<i32>} : memref<128x128xf32, #tpu.memory_space<vmem>>, vector<128x128xf32>,
    } else {
    }
    return
  }
  func.func @transform_0(%arg0: i32, %arg1: i32, %arg2: i32) -> (i32, i32) {
    %c0_i32 = arith.constant 0 : i32
    return %arg0, %arg2 : i32, i32
  }
  func.func @transform_1(%arg0: i32, %arg1: i32, %arg2: i32) -> (i32, i32) {
    %c0_i32 = arith.constant 0 : i32
    return %arg2, %arg1 : i32, i32
  }
  func.func @transform_2(%arg0: i32, %arg1: i32, %arg2: i32) -> (i32, i32) {
    %c0_i32 = arith.constant 0 : i32
    %c0_i32_0 = arith.constant 0 : i32
    return %c0_i32, %arg1 : i32, i32
  }
  func.func @transform_3(%arg0: i32, %arg1: i32, %arg2: i32) -> (i32, i32) {
    %c0_i32 = arith.constant 0 : i32
    return %arg0, %arg1 : i32, i32
  }
}

module attributes {stable_mosaic.version = 11 : i64} {
  func.func @_fused_matmul_kernel(%arg0: i32, %arg1: i32, %arg2: i32, %arg3: memref<128x128xbf16, #tpu.memory_space<vmem>>, %arg4: memref<128x128xbf16, #tpu.memory_space<vmem>>, %arg5: memref<1x128xf32, #tpu.memory_space<vmem>>, %arg6: memref<128x128xf32, #tpu.memory_space<vmem>>, %arg7: memref<128x128xf32, #tpu.memory_space<vmem>>) attributes {dimension_semantics = [#tpu.dimension_semantics<parallel>, #tpu.dimension_semantics<parallel>, #tpu.dimension_semantics<arbitrary>], iteration_bounds = array<i64: 2, 1, 1>, scalar_prefetch = 0 : i64, scratch_operands = 1 : i64, tpu.core_type = #tpu.core_type<tc>, window_params = [{transform_indices = @transform_0, window_bounds = array<i64: 128, 128>}, {transform_indices = @transform_1, window_bounds = array<i64: 128, 128>}, {transform_indices = @transform_2, window_bounds = array<i64: 1, 128>}, {transform_indices = @transform_3, window_bounds = array<i64: 128, 128>}]} {
    %c0_i32 = arith.constant 0 : i32
    %0 = arith.cmpi eq, %arg2, %c0_i32 : i32
    %1 = arith.extui %0 : i1 to i32
    %c0_i32_0 = arith.constant 0 : i32
    %2 = arith.cmpi ne, %1, %c0_i32_0 : i32
    scf.if %2 {
      %cst_11 = arith.constant 0.000000e+00 : f32
      %14 = vector.broadcast %cst_11 : f32 to vector<128x128xf32>
      %c0_12 = arith.constant 0 : index
      %c0_13 = arith.constant 0 : index
      %15 = vector.load %arg7[%c0_12, %c0_13] : memref<128x128xf32, #tpu.memory_space<vmem>>, vector<128x128xf32>
      tpu.vector_store %arg7[%c0_12, %c0_13], %14 {strides = array<i32>} : memref<128x128xf32, #tpu.memory_space<vmem>>, vector<128x128xf32>,
    } else {
    }
    %c0 = arith.constant 0 : index
    %c0_1 = arith.constant 0 : index
    %3 = vector.load %arg3[%c0, %c0_1] : memref<128x128xbf16, #tpu.memory_space<vmem>>, vector<128x128xbf16>
    %cst = arith.constant 0.000000e+00 : bf16
    %4 = vector.broadcast %cst : bf16 to vector<128x128xbf16>
    %5 = arith.maximumf %3, %4 : vector<128x128xbf16>
    %c0_2 = arith.constant 0 : index
    %c0_3 = arith.constant 0 : index
    %6 = vector.load %arg7[%c0_2, %c0_3] : memref<128x128xf32, #tpu.memory_space<vmem>>, vector<128x128xf32>
    %c0_4 = arith.constant 0 : index
    %c0_5 = arith.constant 0 : index
    %7 = vector.load %arg4[%c0_4, %c0_5] : memref<128x128xbf16, #tpu.memory_space<vmem>>, vector<128x128xbf16>
    %cst_6 = arith.constant dense<0.000000e+00> : vector<128x128xf32>
    %8 = tpu.matmul %5, %7, %cst_6 {dimension_numbers = #tpu.dot_dimension_numbers<[1], [0], [0], [1], [0, 0, 1, 1], [], []>} : vector<128x128xbf16>, vector<128x128xbf16>, vector<128x128xf32> -> vector<128x128xf32>
    %9 = arith.addf %6, %8 : vector<128x128xf32>
    %c0_7 = arith.constant 0 : index
    %c0_8 = arith.constant 0 : index
    %10 = vector.load %arg7[%c0_7, %c0_8] : memref<128x128xf32, #tpu.memory_space<vmem>>, vector<128x128xf32>
    tpu.vector_store %arg7[%c0_7, %c0_8], %9 {strides = array<i32>} : memref<128x128xf32, #tpu.memory_space<vmem>>, vector<128x128xf32>,
    %c0_i32_9 = arith.constant 0 : i32
    %11 = arith.cmpi eq, %arg2, %c0_i32_9 : i32
    %12 = arith.extui %11 : i1 to i32
    %c0_i32_10 = arith.constant 0 : i32
    %13 = arith.cmpi ne, %12, %c0_i32_10 : i32
    scf.if %13 {
      %c0_11 = arith.constant 0 : index
      %c0_12 = arith.constant 0 : index
      %14 = vector.load %arg7[%c0_11, %c0_12] : memref<128x128xf32, #tpu.memory_space<vmem>>, vector<128x128xf32>
      %c0_13 = arith.constant 0 : index
      %c0_14 = arith.constant 0 : index
      %15 = vector.load %arg5[%c0_13, %c0_14] : memref<1x128xf32, #tpu.memory_space<vmem>>, vector<1x128xf32>
      %16 = vector.broadcast %15 : vector<1x128xf32> to vector<128x128xf32>
      %17 = arith.addf %14, %16 : vector<128x128xf32>
      %c0_15 = arith.constant 0 : index
      %c0_16 = arith.constant 0 : index
      %18 = vector.load %arg6[%c0_15, %c0_16] : memref<128x128xf32, #tpu.memory_space<vmem>>, vector<128x128xf32>
      tpu.vector_store %arg6[%c0_15, %c0_16], %17 {strides = array<i32>} : memref<128x128xf32, #tpu.memory_space<vmem>>, vector<128x128xf32>,
    } else {
    }
    return
  }
  func.func @transform_0(%arg0: i32, %arg1: i32, %arg2: i32) -> (i32, i32) {
    %c0_i32 = arith.constant 0 : i32
    return %arg0, %arg2 : i32, i32
  }
  func.func @transform_1(%arg0: i32, %arg1: i32, %arg2: i32) -> (i32, i32) {
    %c0_i32 = arith.constant 0 : i32
    return %arg2, %arg1 : i32, i32
  }
  func.func @transform_2(%arg0: i32, %arg1: i32, %arg2: i32) -> (i32, i32) {
    %c0_i32 = arith.constant 0 : i32
    %c0_i32_0 = arith.constant 0 : i32
    return %c0_i32, %arg1 : i32, i32
  }
  func.func @transform_3(%arg0: i32, %arg1: i32, %arg2: i32) -> (i32, i32) {
    %c0_i32 = arith.constant 0 : i32
    return %arg0, %arg1 : i32, i32
  }
}

module attributes {stable_mosaic.version = 11 : i64} {
  func.func @_fused_matmul_kernel(%arg0: i32, %arg1: i32, %arg2: i32, %arg3: memref<256x128xbf16, #tpu.memory_space<vmem>>, %arg4: memref<128x128xbf16, #tpu.memory_space<vmem>>, %arg5: memref<1x128xf32, #tpu.memory_space<vmem>>, %arg6: memref<256x128xf32, #tpu.memory_space<vmem>>, %arg7: memref<256x128xf32, #tpu.memory_space<vmem>>) attributes {dimension_semantics = [#tpu.dimension_semantics<parallel>, #tpu.dimension_semantics<parallel>, #tpu.dimension_semantics<arbitrary>], iteration_bounds = array<i64: 3, 1, 1>, scalar_prefetch = 0 : i64, scratch_operands = 1 : i64, tpu.core_type = #tpu.core_type<tc>, window_params = [{transform_indices = @transform_0, window_bounds = array<i64: 256, 128>}, {transform_indices = @transform_1, window_bounds = array<i64: 128, 128>}, {transform_indices = @transform_2, window_bounds = array<i64: 1, 128>}, {transform_indices = @transform_3, window_bounds = array<i64: 256, 128>}]} {
    %c0_i32 = arith.constant 0 : i32
    %0 = arith.cmpi eq, %arg2, %c0_i32 : i32
    %1 = arith.extui %0 : i1 to i32
    %c0_i32_0 = arith.constant 0 : i32
    %2 = arith.cmpi ne, %1, %c0_i32_0 : i32
    scf.if %2 {
      %cst_11 = arith.constant 0.000000e+00 : f32
      %14 = vector.broadcast %cst_11 : f32 to vector<256x128xf32>
      %c0_12 = arith.constant 0 : index
      %c0_13 = arith.constant 0 : index
      %15 = vector.load %arg7[%c0_12, %c0_13] : memref<256x128xf32, #tpu.memory_space<vmem>>, vector<256x128xf32>
      tpu.vector_store %arg7[%c0_12, %c0_13], %14 {strides = array<i32>} : memref<256x128xf32, #tpu.memory_space<vmem>>, vector<256x128xf32>,
    } else {
    }
    %c0 = arith.constant 0 : index
    %c0_1 = arith.constant 0 : index
    %3 = vector.load %arg3[%c0, %c0_1] : memref<256x128xbf16, #tpu.memory_space<vmem>>, vector<256x128xbf16>
    %cst = arith.constant 0.000000e+00 : bf16
    %4 = vector.broadcast %cst : bf16 to vector<256x128xbf16>
    %5 = arith.maximumf %3, %4 : vector<256x128xbf16>
    %c0_2 = arith.constant 0 : index
    %c0_3 = arith.constant 0 : index
    %6 = vector.load %arg7[%c0_2, %c0_3] : memref<256x128xf32, #tpu.memory_space<vmem>>, vector<256x128xf32>
    %c0_4 = arith.constant 0 : index
    %c0_5 = arith.constant 0 : index
    %7 = vector.load %arg4[%c0_4, %c0_5] : memref<128x128xbf16, #tpu.memory_space<vmem>>, vector<128x128xbf16>
    %cst_6 = arith.constant dense<0.000000e+00> : vector<256x128xf32>
    %8 = tpu.matmul %5, %7, %cst_6 {dimension_numbers = #tpu.dot_dimension_numbers<[1], [0], [0], [1], [0, 0, 1, 1], [], []>} : vector<256x128xbf16>, vector<128x128xbf16>, vector<256x128xf32> -> vector<256x128xf32>
    %9 = arith.addf %6, %8 : vector<256x128xf32>
    %c0_7 = arith.constant 0 : index
    %c0_8 = arith.constant 0 : index
    %10 = vector.load %arg7[%c0_7, %c0_8] : memref<256x128xf32, #tpu.memory_space<vmem>>, vector<256x128xf32>
    tpu.vector_store %arg7[%c0_7, %c0_8], %9 {strides = array<i32>} : memref<256x128xf32, #tpu.memory_space<vmem>>, vector<256x128xf32>,
    %c0_i32_9 = arith.constant 0 : i32
    %11 = arith.cmpi eq, %arg2, %c0_i32_9 : i32
    %12 = arith.extui %11 : i1 to i32
    %c0_i32_10 = arith.constant 0 : i32
    %13 = arith.cmpi ne, %12, %c0_i32_10 : i32
    scf.if %13 {
      %c0_11 = arith.constant 0 : index
      %c0_12 = arith.constant 0 : index
      %14 = vector.load %arg7[%c0_11, %c0_12] : memref<256x128xf32, #tpu.memory_space<vmem>>, vector<256x128xf32>
      %c0_13 = arith.constant 0 : index
      %c0_14 = arith.constant 0 : index
      %15 = vector.load %arg5[%c0_13, %c0_14] : memref<1x128xf32, #tpu.memory_space<vmem>>, vector<1x128xf32>
      %16 = vector.broadcast %15 : vector<1x128xf32> to vector<256x128xf32>
      %17 = arith.addf %14, %16 : vector<256x128xf32>
      %18 = math.tanh %17 : vector<256x128xf32>
      %c0_15 = arith.constant 0 : index
      %c0_16 = arith.constant 0 : index
      %19 = vector.load %arg6[%c0_15, %c0_16] : memref<256x128xf32, #tpu.memory_space<vmem>>, vector<256x128xf32>
      tpu.vector_store %arg6[%c0_15, %c0_16], %18 {strides = array<i32>} : memref<256x128xf32, #tpu.memory_space<vmem>>, vector<256x128xf32>,
    } else {
    }
    return
  }
  func.func @transform_0(%arg0: i32, %arg1: i32, %arg2: i32) -> (i32, i32) {
    %c0_i32 = arith.constant 0 : i32
    return %arg0, %arg2 : i32, i32
  }
  func.func @transform_1(%arg0: i32, %arg1: i32, %arg2: i32) -> (i32, i32) {
    %c0_i32 = arith.constant 0 : i32
    return %arg2, %arg1 : i32, i32
  }
  func.func @transform_2(%arg0: i32, %arg1: i32, %arg2: i32) -> (i32, i32) {
    %c0_i32 = arith.constant 0 : i32
    %c0_i32_0 = arith.constant 0 : i32
    return %c0_i32, %arg1 : i32, i32
  }
  func.func @transform_3(%arg0: i32, %arg1: i32, %arg2: i32) -> (i32, i32) {
    %c0_i32 = arith.constant 0 : i32
    return %arg0, %arg1 : i32, i32
  }
}

module attributes {stable_mosaic.version = 11 : i64} {
  func.func @_mask_out_kernel(%arg0: memref<32x128xf32, #tpu.memory_space<vmem>>, %arg1: memref<32x128xf32, #tpu.memory_space<vmem>>, %arg2: memref<32x128xf32, #tpu.memory_space<vmem>>) attributes {dimension_semantics = [], scalar_prefetch = 0 : i64, scratch_operands = 0 : i64, tpu.core_type = #tpu.core_type<tc>} {
    %c0 = arith.constant 0 : index
    %c0_0 = arith.constant 0 : index
    %0 = vector.load %arg0[%c0, %c0_0] : memref<32x128xf32, #tpu.memory_space<vmem>>, vector<32x128xf32>
    %cst = arith.constant 1.000000e+00 : f32
    %1 = vector.broadcast %cst : f32 to vector<32x128xf32>
    %2 = arith.addf %0, %1 : vector<32x128xf32>
    %c0_1 = arith.constant 0 : index
    %c0_2 = arith.constant 0 : index
    %3 = vector.load %arg1[%c0_1, %c0_2] : memref<32x128xf32, #tpu.memory_space<vmem>>, vector<32x128xf32>
    %4 = arith.mulf %2, %3 : vector<32x128xf32>
    %cst_3 = arith.constant 1.000000e+00 : f32
    %5 = vector.broadcast %cst_3 : f32 to vector<32x128xf32>
    %6 = arith.subf %4, %5 : vector<32x128xf32>
    %c0_4 = arith.constant 0 : index
    %c0_5 = arith.constant 0 : index
    %7 = vector.load %arg2[%c0_4, %c0_5] : memref<32x128xf32, #tpu.memory_space<vmem>>, vector<32x128xf32>
    tpu.vector_store %arg2[%c0_4, %c0_5], %6 {strides = array<i32>} : memref<32x128xf32, #tpu.memory_space<vmem>>, vector<32x128xf32>,
    return
  }
}

</mosaic_0001>

<llo_original>
// kernel: mul.60.clone
$region0: #{mul.60.clone}
  #allocation0 [shape = 's32[1]{0}', space=sflag, size = 0x4, scoped, tag = 'scoped memory for mul.60.clone']
  %s0 = inlined_call_operand.vmem [shape: f32[2,32,32], index: 0, kind: input, shape index: {}]
  %s1 = inlined_call_operand.vmem [shape: f32[2,32,32,2], index: 1, kind: output, shape index: {}]
  // Predicated region
  $region2: #{mul.60.clone} parent=0 // pred_check
    _
  $region3: #{mul.60.clone} parent=0 // pred_check_branch
    %3 = sbr.rel (0) target = $region5
  $region4: #{mul.60.clone} parent=0 // pred_region
    _
  $region5: #{mul.60.clone} parent=0 // pred_fallthru
    _
  %v4 = vld [vmem:[%s0] ss:$0 sm:$0xff]
  %6 = vbcast.lane.b32.xlu0 %v4, 256
  %v7 = vpop.permute.xlu0 %6
  %8 = vst [vmem:[%s1] sm:$0xff] %v7
  %s9 = scalar_lea.vmem %s0, 32
  %v10 = vld [vmem:[%s9] ss:$0 sm:$0xff]
  %12 = vbcast.lane.b32.xlu0 %v10, 256
  %v13 = vpop.permute.xlu0 %12
  %s14 = scalar_lea.vmem %s1, 1024
  %15 = vst [vmem:[%s14] sm:$0xff] %v13
  %s16 = scalar_lea.vmem %s0, 1
  %v17 = vld [vmem:[%s16] ss:$0 sm:$0xff]
  %19 = vbcast.lane.b32.xlu0 %v17, 256
  %v20 = vpop.permute.xlu0 %19
  %s21 = scalar_lea.vmem %s1, 32
  %22 = vst [vmem:[%s21] sm:$0xff] %v20
  %s23 = scalar_lea.vmem %s0, 32
  %s24 = scalar_lea.vmem %s23, 1
  %v25 = vld [vmem:[%s24] ss:$0 sm:$0xff]
  %27 = vbcast.lane.b32.xlu0 %v25, 256
  %v28 = vpop.permute.xlu0 %27
  %s29 = scalar_lea.vmem %s1, 1056
  %30 = vst [vmem:[%s29] sm:$0xff] %v28
  %s31 = scalar_lea.vmem %s0, 2
  %v32 = vld [vmem:[%s31] ss:$0 sm:$0xff]
  %34 = vbcast.lane.b32.xlu0 %v32, 256
  %v35 = vpop.permute.xlu0 %34
  %s36 = scalar_lea.vmem %s1, 64
  %37 = vst [vmem:[%s36] sm:$0xff] %v35
  %s38 = scalar_lea.vmem %s0, 32
  %s39 = scalar_lea.vmem %s38, 2
  %v40 = vld [vmem:[%s39] ss:$0 sm:$0xff]
  %42 = vbcast.lane.b32.xlu0 %v40, 256
  %v43 = vpop.permute.xlu0 %42
  %s44 = scalar_lea.vmem %s1, 1088
  %45 = vst [vmem:[%s44] sm:$0xff] %v43
  %s46 = scalar_lea.vmem %s0, 3
  %v47 = vld [vmem:[%s46] ss:$0 sm:$0xff]
  %49 = vbcast.lane.b32.xlu0 %v47, 256
  %v50 = vpop.permute.xlu0 %49
  %s51 = scalar_lea.vmem %s1, 96
  %52 = vst [vmem:[%s51] sm:$0xff] %v50
  %s53 = scalar_lea.vmem %s0, 32
  %s54 = scalar_lea.vmem %s53, 3
  %v55 = vld [vmem:[%s54] ss:$0 sm:$0xff]
  %57 = vbcast.lane.b32.xlu0 %v55, 256
  %v58 = vpop.permute.xlu0 %57
  %s59 = scalar_lea.vmem %s1, 1120
  %60 = vst [vmem:[%s59] sm:$0xff] %v58
  %s61 = scalar_lea.vmem %s0, 4
  %v62 = vld [vmem:[%s61] ss:$0 sm:$0xff]
  %64 = vbcast.lane.b32.xlu0 %v62, 256
  %v65 = vpop.permute.xlu0 %64
  %s66 = scalar_lea.vmem %s1, 128
  %67 = vst [vmem:[%s66] sm:$0xff] %v65
  %s68 = scalar_lea.vmem %s0, 32
  %s69 = scalar_lea.vmem %s68, 4
  %v70 = vld [vmem:[%s69] ss:$0 sm:$0xff]
  %72 = vbcast.lane.b32.xlu0 %v70, 256
  %v73 = vpop.permute.xlu0 %72
  %s74 = scalar_lea.vmem %s1, 1152
  %75 = vst [vmem:[%s74] sm:$0xff] %v73
  %s76 = scalar_lea.vmem %s0, 5
  %v77 = vld [vmem:[%s76] ss:$0 sm:$0xff]
  %79 = vbcast.lane.b32.xlu0 %v77, 256
  %v80 = vpop.permute.xlu0 %79
  %s81 = scalar_lea.vmem %s1, 160
  %82 = vst [vmem:[%s81] sm:$0xff] %v80
  %s83 = scalar_lea.vmem %s0, 32
  %s84 = scalar_lea.vmem %s83, 5
  %v85 = vld [vmem:[%s84] ss:$0 sm:$0xff]
  %87 = vbcast.lane.b32.xlu0 %v85, 256
  %v88 = vpop.permute.xlu0 %87
  %s89 = scalar_lea.vmem %s1, 1184
  %90 = vst [vmem:[%s89] sm:$0xff] %v88
  %s91 = scalar_lea.vmem %s0, 6
  %v92 = vld [vmem:[%s91] ss:$0 sm:$0xff]
  %94 = vbcast.lane.b32.xlu0 %v92, 256
  %v95 = vpop.permute.xlu0 %94
  %s96 = scalar_lea.vmem %s1, 192
  %97 = vst [vmem:[%s96] sm:$0xff] %v95
  %s98 = scalar_lea.vmem %s0, 32
  %s99 = scalar_lea.vmem %s98, 6
  %v100 = vld [vmem:[%s99] ss:$0 sm:$0xff]
  %102 = vbcast.lane.b32.xlu0 %v100, 256
  %v103 = vpop.permute.xlu0 %102
  %s104 = scalar_lea.vmem %s1, 1216
  %105 = vst [vmem:[%s104] sm:$0xff] %v103
  %s106 = scalar_lea.vmem %s0, 7
  %v107 = vld [vmem:[%s106] ss:$0 sm:$0xff]
  %109 = vbcast.lane.b32.xlu0 %v107, 256
  %v110 = vpop.permute.xlu0 %109
  %s111 = scalar_lea.vmem %s1, 224
  %112 = vst [vmem:[%s111] sm:$0xff] %v110
  %s113 = scalar_lea.vmem %s0, 32
  %s114 = scalar_lea.vmem %s113, 7
  %v115 = vld [vmem:[%s114] ss:$0 sm:$0xff]
  %117 = vbcast.lane.b32.xlu0 %v115, 256
  %v118 = vpop.permute.xlu0 %117
  %s119 = scalar_lea.vmem %s1, 1248
  %120 = vst [vmem:[%s119] sm:$0xff] %v118
  %s121 = scalar_lea.vmem %s0, 8
  %v122 = vld [vmem:[%s121] ss:$0 sm:$0xff]
  %124 = vbcast.lane.b32.xlu0 %v122, 256
  %v125 = vpop.permute.xlu0 %124
  %s126 = scalar_lea.vmem %s1, 256
  %127 = vst [vmem:[%s126] sm:$0xff] %v125
  %s128 = scalar_lea.vmem %s0, 40
  %v129 = vld [vmem:[%s128] ss:$0 sm:$0xff]
  %131 = vbcast.lane.b32.xlu0 %v129, 256
  %v132 = vpop.permute.xlu0 %131
  %s133 = scalar_lea.vmem %s1, 1280
  %134 = vst [vmem:[%s133] sm:$0xff] %v132
  %s135 = scalar_lea.vmem %s0, 8
  %s136 = scalar_lea.vmem %s135, 1
  %v137 = vld [vmem:[%s136] ss:$0 sm:$0xff]
  %139 = vbcast.lane.b32.xlu0 %v137, 256
  %v140 = vpop.permute.xlu0 %139
  %s141 = scalar_lea.vmem %s1, 288
  %142 = vst [vmem:[%s141] sm:$0xff] %v140
  %s143 = scalar_lea.vmem %s0, 40
  %s144 = scalar_lea.vmem %s143, 1
  %v145 = vld [vmem:[%s144] ss:$0 sm:$0xff]
  %147 = vbcast.lane.b32.xlu0 %v145, 256
  %v148 = vpop.permute.xlu0 %147
  %s149 = scalar_lea.vmem %s1, 1312
  %150 = vst [vmem:[%s149] sm:$0xff] %v148
  %s151 = scalar_lea.vmem %s0, 8
  %s152 = scalar_lea.vmem %s151, 2
  %v153 = vld [vmem:[%s152] ss:$0 sm:$0xff]
  %155 = vbcast.lane.b32.xlu0 %v153, 256
  %v156 = vpop.permute.xlu0 %155
  %s157 = scalar_lea.vmem %s1, 320
  %158 = vst [vmem:[%s157] sm:$0xff] %v156
  %s159 = scalar_lea.vmem %s0, 40
  %s160 = scalar_lea.vmem %s159, 2
  %v161 = vld [vmem:[%s160] ss:$0 sm:$0xff]
  %163 = vbcast.lane.b32.xlu0 %v161, 256
  %v164 = vpop.permute.xlu0 %163
  %s165 = scalar_lea.vmem %s1, 1344
  %166 = vst [vmem:[%s165] sm:$0xff] %v164
  %s167 = scalar_lea.vmem %s0, 8
  %s168 = scalar_lea.vmem %s167, 3
  %v169 = vld [vmem:[%s168] ss:$0 sm:$0xff]
  %171 = vbcast.lane.b32.xlu0 %v169, 256
  %v172 = vpop.permute.xlu0 %171
  %s173 = scalar_lea.vmem %s1, 352
  %174 = vst [vmem:[%s173] sm:$0xff] %v172
  %s175 = scalar_lea.vmem %s0, 40
  %s176 = scalar_lea.vmem %s175, 3
  %v177 = vld [vmem:[%s176] ss:$0 sm:$0xff]
  %179 = vbcast.lane.b32.xlu0 %v177, 256
  %v180 = vpop.permute.xlu0 %179
  %s181 = scalar_lea.vmem %s1, 1376
  %182 = vst [vmem:[%s181] sm:$0xff] %v180
  %s183 = scalar_lea.vmem %s0, 8
  %s184 = scalar_lea.vmem %s183, 4
  %v185 = vld [vmem:[%s184] ss:$0 sm:$0xff]
  %187 = vbcast.lane.b32.xlu0 %v185, 256
  %v188 = vpop.permute.xlu0 %187
  %s189 = scalar_lea.vmem %s1, 384
  %190 = vst [vmem:[%s189] sm:$0xff] %v188
  %s191 = scalar_lea.vmem %s0, 40
  %s192 = scalar_lea.vmem %s191, 4
  %v193 = vld [vmem:[%s192] ss:$0 sm:$0xff]
  %195 = vbcast.lane.b32.xlu0 %v193, 256
  %v196 = vpop.permute.xlu0 %195
  %s197 = scalar_lea.vmem %s1, 1408
  %198 = vst [vmem:[%s197] sm:$0xff] %v196
  %s199 = scalar_lea.vmem %s0, 8
  %s200 = scalar_lea.vmem %s199, 5
  %v201 = vld [vmem:[%s200] ss:$0 sm:$0xff]
  %203 = vbcast.lane.b32.xlu0 %v201, 256
  %v204 = vpop.permute.xlu0 %203
  %s205 = scalar_lea.vmem %s1, 416
  %206 = vst [vmem:[%s205] sm:$0xff] %v204
  %s207 = scalar_lea.vmem %s0, 40
  %s208 = scalar_lea.vmem %s207, 5
  %v209 = vld [vmem:[%s208] ss:$0 sm:$0xff]
  %211 = vbcast.lane.b32.xlu0 %v209, 256
  %v212 = vpop.permute.xlu0 %211
  %s213 = scalar_lea.vmem %s1, 1440
  %214 = vst [vmem:[%s213] sm:$0xff] %v212
  %s215 = scalar_lea.vmem %s0, 8
  %s216 = scalar_lea.vmem %s215, 6
  %v217 = vld [vmem:[%s216] ss:$0 sm:$0xff]
  %219 = vbcast.lane.b32.xlu0 %v217, 256
  %v220 = vpop.permute.xlu0 %219
  %s221 = scalar_lea.vmem %s1, 448
  %222 = vst [vmem:[%s221] sm:$0xff] %v220
  %s223 = scalar_lea.vmem %s0, 40
  %s224 = scalar_lea.vmem %s223, 6
  %v225 = vld [vmem:[%s224] ss:$0 sm:$0xff]
  %227 = vbcast.lane.b32.xlu0 %v225, 256
  %v228 = vpop.permute.xlu0 %227
  %s229 = scalar_lea.vmem %s1, 1472
  %230 = vst [vmem:[%s229] sm:$0xff] %v228
  %s231 = scalar_lea.vmem %s0, 8
  %s232 = scalar_lea.vmem %s231, 7
  %v233 = vld [vmem:[%s232] ss:$0 sm:$0xff]
  %235 = vbcast.lane.b32.xlu0 %v233, 256
  %v236 = vpop.permute.xlu0 %235
  %s237 = scalar_lea.vmem %s1, 480
  %238 = vst [vmem:[%s237] sm:$0xff] %v236
  %s239 = scalar_lea.vmem %s0, 40
  %s240 = scalar_lea.vmem %s239, 7
  %v241 = vld [vmem:[%s240] ss:$0 sm:$0xff]
  %243 = vbcast.lane.b32.xlu0 %v241, 256
  %v244 = vpop.permute.xlu0 %243
  %s245 = scalar_lea.vmem %s1, 1504
  %246 = vst [vmem:[%s245] sm:$0xff] %v244
  %s247 = scalar_lea.vmem %s0, 16
  %v248 = vld [vmem:[%s247] ss:$0 sm:$0xff]
  %250 = vbcast.lane.b32.xlu0 %v248, 256
  %v251 = vpop.permute.xlu0 %250
  %s252 = scalar_lea.vmem %s1, 512
  %253 = vst [vmem:[%s252] sm:$0xff] %v251
  %s254 = scalar_lea.vmem %s0, 48
  %v255 = vld [vmem:[%s254] ss:$0 sm:$0xff]
  %257 = vbcast.lane.b32.xlu0 %v255, 256
  %v258 = vpop.permute.xlu0 %257
  %s259 = scalar_lea.vmem %s1, 1536
  %260 = vst [vmem:[%s259] sm:$0xff] %v258
  %s261 = scalar_lea.vmem %s0, 16
  %s262 = scalar_lea.vmem %s261, 1
  %v263 = vld [vmem:[%s262] ss:$0 sm:$0xff]
  %265 = vbcast.lane.b32.xlu0 %v263, 256
  %v266 = vpop.permute.xlu0 %265
  %s267 = scalar_lea.vmem %s1, 544
  %268 = vst [vmem:[%s267] sm:$0xff] %v266
  %s269 = scalar_lea.vmem %s0, 48
  %s270 = scalar_lea.vmem %s269, 1
  %v271 = vld [vmem:[%s270] ss:$0 sm:$0xff]
  %273 = vbcast.lane.b32.xlu0 %v271, 256
  %v274 = vpop.permute.xlu0 %273
  %s275 = scalar_lea.vmem %s1, 1568
  %276 = vst [vmem:[%s275] sm:$0xff] %v274
  %s277 = scalar_lea.vmem %s0, 16
  %s278 = scalar_lea.vmem %s277, 2
  %v279 = vld [vmem:[%s278] ss:$0 sm:$0xff]
  %281 = vbcast.lane.b32.xlu0 %v279, 256
  %v282 = vpop.permute.xlu0 %281
  %s283 = scalar_lea.vmem %s1, 576
  %284 = vst [vmem:[%s283] sm:$0xff] %v282
  %s285 = scalar_lea.vmem %s0, 48
  %s286 = scalar_lea.vmem %s285, 2
  %v287 = vld [vmem:[%s286] ss:$0 sm:$0xff]
  %289 = vbcast.lane.b32.xlu0 %v287, 256
  %v290 = vpop.permute.xlu0 %289
  %s291 = scalar_lea.vmem %s1, 1600
  %292 = vst [vmem:[%s291] sm:$0xff] %v290
  %s293 = scalar_lea.vmem %s0, 16
  %s294 = scalar_lea.vmem %s293, 3
  %v295 = vld [vmem:[%s294] ss:$0 sm:$0xff]
  %297 = vbcast.lane.b32.xlu0 %v295, 256
  %v298 = vpop.permute.xlu0 %297
  %s299 = scalar_lea.vmem %s1, 608
  %300 = vst [vmem:[%s299] sm:$0xff] %v298
  %s301 = scalar_lea.vmem %s0, 48
  %s302 = scalar_lea.vmem %s301, 3
  %v303 = vld [vmem:[%s302] ss:$0 sm:$0xff]
  %305 = vbcast.lane.b32.xlu0 %v303, 256
  %v306 = vpop.permute.xlu0 %305
  %s307 = scalar_lea.vmem %s1, 1632
  %308 = vst [vmem:[%s307] sm:$0xff] %v306
  %s309 = scalar_lea.vmem %s0, 16
  %s310 = scalar_lea.vmem %s309, 4
  %v311 = vld [vmem:[%s310] ss:$0 sm:$0xff]
  %313 = vbcast.lane.b32.xlu0 %v311, 256
  %v314 = vpop.permute.xlu0 %313
  %s315 = scalar_lea.vmem %s1, 640
  %316 = vst [vmem:[%s315] sm:$0xff] %v314
  %s317 = scalar_lea.vmem %s0, 48
  %s318 = scalar_lea.vmem %s317, 4
  %v319 = vld [vmem:[%s318] ss:$0 sm:$0xff]
  %321 = vbcast.lane.b32.xlu0 %v319, 256
  %v322 = vpop.permute.xlu0 %321
  %s323 = scalar_lea.vmem %s1, 1664
  %324 = vst [vmem:[%s323] sm:$0xff] %v322
  %s325 = scalar_lea.vmem %s0, 16
  %s326 = scalar_lea.vmem %s325, 5
  %v327 = vld [vmem:[%s326] ss:$0 sm:$0xff]
  %329 = vbcast.lane.b32.xlu0 %v327, 256
  %v330 = vpop.permute.xlu0 %329
  %s331 = scalar_lea.vmem %s1, 672
  %332 = vst [vmem:[%s331] sm:$0xff] %v330
  %s333 = scalar_lea.vmem %s0, 48
  %s334 = scalar_lea.vmem %s333, 5
  %v335 = vld [vmem:[%s334] ss:$0 sm:$0xff]
  %337 = vbcast.lane.b32.xlu0 %v335, 256
  %v338 = vpop.permute.xlu0 %337
  %s339 = scalar_lea.vmem %s1, 1696
  %340 = vst [vmem:[%s339] sm:$0xff] %v338
  %s341 = scalar_lea.vmem %s0, 16
  %s342 = scalar_lea.vmem %s341, 6
  %v343 = vld [vmem:[%s342] ss:$0 sm:$0xff]
  %345 = vbcast.lane.b32.xlu0 %v343, 256
  %v346 = vpop.permute.xlu0 %345
  %s347 = scalar_lea.vmem %s1, 704
  %348 = vst [vmem:[%s347] sm:$0xff] %v346
  %s349 = scalar_lea.vmem %s0, 48
  %s350 = scalar_lea.vmem %s349, 6
  %v351 = vld [vmem:[%s350] ss:$0 sm:$0xff]
  %353 = vbcast.lane.b32.xlu0 %v351, 256
  %v354 = vpop.permute.xlu0 %353
  %s355 = scalar_lea.vmem %s1, 1728
  %356 = vst [vmem:[%s355] sm:$0xff] %v354
  %s357 = scalar_lea.vmem %s0, 16
  %s358 = scalar_lea.vmem %s357, 7
  %v359 = vld [vmem:[%s358] ss:$0 sm:$0xff]
  %361 = vbcast.lane.b32.xlu0 %v359, 256
  %v362 = vpop.permute.xlu0 %361
  %s363 = scalar_lea.vmem %s1, 736
  %364 = vst [vmem:[%s363] sm:$0xff] %v362
  %s365 = scalar_lea.vmem %s0, 48
  %s366 = scalar_lea.vmem %s365, 7
  %v367 = vld [vmem:[%s366] ss:$0 sm:$0xff]
  %369 = vbcast.lane.b32.xlu0 %v367, 256
  %v370 = vpop.permute.xlu0 %369
  %s371 = scalar_lea.vmem %s1, 1760
  %372 = vst [vmem:[%s371] sm:$0xff] %v370
  %s373 = scalar_lea.vmem %s0, 24
  %v374 = vld [vmem:[%s373] ss:$0 sm:$0xff]
  %376 = vbcast.lane.b32.xlu0 %v374, 256
  %v377 = vpop.permute.xlu0 %376
  %s378 = scalar_lea.vmem %s1, 768
  %379 = vst [vmem:[%s378] sm:$0xff] %v377
  %s380 = scalar_lea.vmem %s0, 56
  %v381 = vld [vmem:[%s380] ss:$0 sm:$0xff]
  %383 = vbcast.lane.b32.xlu0 %v381, 256
  %v384 = vpop.permute.xlu0 %383
  %s385 = scalar_lea.vmem %s1, 1792
  %386 = vst [vmem:[%s385] sm:$0xff] %v384
  %s387 = scalar_lea.vmem %s0, 24
  %s388 = scalar_lea.vmem %s387, 1
  %v389 = vld [vmem:[%s388] ss:$0 sm:$0xff]
  %391 = vbcast.lane.b32.xlu0 %v389, 256
  %v392 = vpop.permute.xlu0 %391
  %s393 = scalar_lea.vmem %s1, 800
  %394 = vst [vmem:[%s393] sm:$0xff] %v392
  %s395 = scalar_lea.vmem %s0, 56
  %s396 = scalar_lea.vmem %s395, 1
  %v397 = vld [vmem:[%s396] ss:$0 sm:$0xff]
  %399 = vbcast.lane.b32.xlu0 %v397, 256
  %v400 = vpop.permute.xlu0 %399
  %s401 = scalar_lea.vmem %s1, 1824
  %402 = vst [vmem:[%s401] sm:$0xff] %v400
  %s403 = scalar_lea.vmem %s0, 24
  %s404 = scalar_lea.vmem %s403, 2
  %v405 = vld [vmem:[%s404] ss:$0 sm:$0xff]
  %407 = vbcast.lane.b32.xlu0 %v405, 256
  %v408 = vpop.permute.xlu0 %407
  %s409 = scalar_lea.vmem %s1, 832
  %410 = vst [vmem:[%s409] sm:$0xff] %v408
  %s411 = scalar_lea.vmem %s0, 56
  %s412 = scalar_lea.vmem %s411, 2
  %v413 = vld [vmem:[%s412] ss:$0 sm:$0xff]
  %415 = vbcast.lane.b32.xlu0 %v413, 256
  %v416 = vpop.permute.xlu0 %415
  %s417 = scalar_lea.vmem %s1, 1856
  %418 = vst [vmem:[%s417] sm:$0xff] %v416
  %s419 = scalar_lea.vmem %s0, 24
  %s420 = scalar_lea.vmem %s419, 3
  %v421 = vld [vmem:[%s420] ss:$0 sm:$0xff]
  %423 = vbcast.lane.b32.xlu0 %v421, 256
  %v424 = vpop.permute.xlu0 %423
  %s425 = scalar_lea.vmem %s1, 864
  %426 = vst [vmem:[%s425] sm:$0xff] %v424
  %s427 = scalar_lea.vmem %s0, 56
  %s428 = scalar_lea.vmem %s427, 3
  %v429 = vld [vmem:[%s428] ss:$0 sm:$0xff]
  %431 = vbcast.lane.b32.xlu0 %v429, 256
  %v432 = vpop.permute.xlu0 %431
  %s433 = scalar_lea.vmem %s1, 1888
  %434 = vst [vmem:[%s433] sm:$0xff] %v432
  %s435 = scalar_lea.vmem %s0, 24
  %s436 = scalar_lea.vmem %s435, 4
  %v437 = vld [vmem:[%s436] ss:$0 sm:$0xff]
  %439 = vbcast.lane.b32.xlu0 %v437, 256
  %v440 = vpop.permute.xlu0 %439
  %s441 = scalar_lea.vmem %s1, 896
  %442 = vst [vmem:[%s441] sm:$0xff] %v440
  %s443 = scalar_lea.vmem %s0, 56
  %s444 = scalar_lea.vmem %s443, 4
  %v445 = vld [vmem:[%s444] ss:$0 sm:$0xff]
  %447 = vbcast.lane.b32.xlu0 %v445, 256
  %v448 = vpop.permute.xlu0 %447
  %s449 = scalar_lea.vmem %s1, 1920
  %450 = vst [vmem:[%s449] sm:$0xff] %v448
  %s451 = scalar_lea.vmem %s0, 24
  %s452 = scalar_lea.vmem %s451, 5
  %v453 = vld [vmem:[%s452] ss:$0 sm:$0xff]
  %455 = vbcast.lane.b32.xlu0 %v453, 256
  %v456 = vpop.permute.xlu0 %455
  %s457 = scalar_lea.vmem %s1, 928
  %458 = vst [vmem:[%s457] sm:$0xff] %v456
  %s459 = scalar_lea.vmem %s0, 56
  %s460 = scalar_lea.vmem %s459, 5
  %v461 = vld [vmem:[%s460] ss:$0 sm:$0xff]
  %463 = vbcast.lane.b32.xlu0 %v461, 256
  %v464 = vpop.permute.xlu0 %463
  %s465 = scalar_lea.vmem %s1, 1952
  %466 = vst [vmem:[%s465] sm:$0xff] %v464
  %s467 = scalar_lea.vmem %s0, 24
  %s468 = scalar_lea.vmem %s467, 6
  %v469 = vld [vmem:[%s468] ss:$0 sm:$0xff]
  %471 = vbcast.lane.b32.xlu0 %v469, 256
  %v472 = vpop.permute.xlu0 %471
  %s473 = scalar_lea.vmem %s1, 960
  %474 = vst [vmem:[%s473] sm:$0xff] %v472
  %s475 = scalar_lea.vmem %s0, 56
  %s476 = scalar_lea.vmem %s475, 6
  %v477 = vld [vmem:[%s476] ss:$0 sm:$0xff]
  %479 = vbcast.lane.b32.xlu0 %v477, 256
  %v480 = vpop.permute.xlu0 %479
  %s481 = scalar_lea.vmem %s1, 1984
  %482 = vst [vmem:[%s481] sm:$0xff] %v480
  %s483 = scalar_lea.vmem %s0, 24
  %s484 = scalar_lea.vmem %s483, 7
  %v485 = vld [vmem:[%s484] ss:$0 sm:$0xff]
  %487 = vbcast.lane.b32.xlu0 %v485, 256
  %v488 = vpop.permute.xlu0 %487
  %s489 = scalar_lea.vmem %s1, 992
  %490 = vst [vmem:[%s489] sm:$0xff] %v488
  %s491 = scalar_lea.vmem %s0, 56
  %s492 = scalar_lea.vmem %s491, 7
  %v493 = vld [vmem:[%s492] ss:$0 sm:$0xff]
  %495 = vbcast.lane.b32.xlu0 %v493, 256
  %v496 = vpop.permute.xlu0 %495
  %s497 = scalar_lea.vmem %s1, 2016
  %498 = vst [vmem:[%s497] sm:$0xff] %v496
  %v499 = vld [vmem:[%s0] ss:$0 sm:$0xff]
  %s501 = sor.u32 256, 8
  %502 = vbcast.lane.b32.xlu0 %v499, %s501
  %v503 = vpop.permute.xlu0 %502
  %s504 = scalar_lea.vmem %s1, 8
  %505 = vst [vmem:[%s504] sm:$0xff] %v503
  %s506 = scalar_lea.vmem %s0, 32
  %v507 = vld [vmem:[%s506] ss:$0 sm:$0xff]
  %s509 = sor.u32 256, 8
  %510 = vbcast.lane.b32.xlu0 %v507, %s509
  %v511 = vpop.permute.xlu0 %510
  %s512 = scalar_lea.vmem %s1, 1032
  %513 = vst [vmem:[%s512] sm:$0xff] %v511
  %s514 = scalar_lea.vmem %s0, 1
  %v515 = vld [vmem:[%s514] ss:$0 sm:$0xff]
  %s517 = sor.u32 256, 8
  %518 = vbcast.lane.b32.xlu0 %v515, %s517
  %v519 = vpop.permute.xlu0 %518
  %s520 = scalar_lea.vmem %s1, 40
  %521 = vst [vmem:[%s520] sm:$0xff] %v519
  %s522 = scalar_lea.vmem %s0, 32
  %s523 = scalar_lea.vmem %s522, 1
  %v524 = vld [vmem:[%s523] ss:$0 sm:$0xff]
  %s526 = sor.u32 256, 8
  %527 = vbcast.lane.b32.xlu0 %v524, %s526
  %v528 = vpop.permute.xlu0 %527
  %s529 = scalar_lea.vmem %s1, 1064
  %530 = vst [vmem:[%s529] sm:$0xff] %v528
  %s531 = scalar_lea.vmem %s0, 2
  %v532 = vld [vmem:[%s531] ss:$0 sm:$0xff]
  %s534 = sor.u32 256, 8
  %535 = vbcast.lane.b32.xlu0 %v532, %s534
  %v536 = vpop.permute.xlu0 %535
  %s537 = scalar_lea.vmem %s1, 72
  %538 = vst [vmem:[%s537] sm:$0xff] %v536
  %s539 = scalar_lea.vmem %s0, 32
  %s540 = scalar_lea.vmem %s539, 2
  %v541 = vld [vmem:[%s540] ss:$0 sm:$0xff]
  %s543 = sor.u32 256, 8
  %544 = vbcast.lane.b32.xlu0 %v541, %s543
  %v545 = vpop.permute.xlu0 %544
  %s546 = scalar_lea.vmem %s1, 1096
  %547 = vst [vmem:[%s546] sm:$0xff] %v545
  %s548 = scalar_lea.vmem %s0, 3
  %v549 = vld [vmem:[%s548] ss:$0 sm:$0xff]
  %s551 = sor.u32 256, 8
  %552 = vbcast.lane.b32.xlu0 %v549, %s551
  %v553 = vpop.permute.xlu0 %552
  %s554 = scalar_lea.vmem %s1, 104
  %555 = vst [vmem:[%s554] sm:$0xff] %v553
  %s556 = scalar_lea.vmem %s0, 32
  %s557 = scalar_lea.vmem %s556, 3
  %v558 = vld [vmem:[%s557] ss:$0 sm:$0xff]
  %s560 = sor.u32 256, 8
  %561 = vbcast.lane.b32.xlu0 %v558, %s560
  %v562 = vpop.permute.xlu0 %561
  %s563 = scalar_lea.vmem %s1, 1128
  %564 = vst [vmem:[%s563] sm:$0xff] %v562
  %s565 = scalar_lea.vmem %s0, 4
  %v566 = vld [vmem:[%s565] ss:$0 sm:$0xff]
  %s568 = sor.u32 256, 8
  %569 = vbcast.lane.b32.xlu0 %v566, %s568
  %v570 = vpop.permute.xlu0 %569
  %s571 = scalar_lea.vmem %s1, 136
  %572 = vst [vmem:[%s571] sm:$0xff] %v570
  %s573 = scalar_lea.vmem %s0, 32
  %s574 = scalar_lea.vmem %s573, 4
  %v575 = vld [vmem:[%s574] ss:$0 sm:$0xff]
  %s577 = sor.u32 256, 8
  %578 = vbcast.lane.b32.xlu0 %v575, %s577
  %v579 = vpop.permute.xlu0 %578
  %s580 = scalar_lea.vmem %s1, 1160
  %581 = vst [vmem:[%s580] sm:$0xff] %v579
  %s582 = scalar_lea.vmem %s0, 5
  %v583 = vld [vmem:[%s582] ss:$0 sm:$0xff]
  %s585 = sor.u32 256, 8
  %586 = vbcast.lane.b32.xlu0 %v583, %s585
  %v587 = vpop.permute.xlu0 %586
  %s588 = scalar_lea.vmem %s1, 168
  %589 = vst [vmem:[%s588] sm:$0xff] %v587
  %s590 = scalar_lea.vmem %s0, 32
  %s591 = scalar_lea.vmem %s590, 5
  %v592 = vld [vmem:[%s591] ss:$0 sm:$0xff]
  %s594 = sor.u32 256, 8
  %595 = vbcast.lane.b32.xlu0 %v592, %s594
  %v596 = vpop.permute.xlu0 %595
  %s597 = scalar_lea.vmem %s1, 1192
  %598 = vst [vmem:[%s597] sm:$0xff] %v596
  %s599 = scalar_lea.vmem %s0, 6
  %v600 = vld [vmem:[%s599] ss:$0 sm:$0xff]
  %s602 = sor.u32 256, 8
  %603 = vbcast.lane.b32.xlu0 %v600, %s602
  %v604 = vpop.permute.xlu0 %603
  %s605 = scalar_lea.vmem %s1, 200
  %606 = vst [vmem:[%s605] sm:$0xff] %v604
  %s607 = scalar_lea.vmem %s0, 32
  %s608 = scalar_lea.vmem %s607, 6
  %v609 = vld [vmem:[%s608] ss:$0 sm:$0xff]
  %s611 = sor.u32 256, 8
  %612 = vbcast.lane.b32.xlu0 %v609, %s611
  %v613 = vpop.permute.xlu0 %612
  %s614 = scalar_lea.vmem %s1, 1224
  %615 = vst [vmem:[%s614] sm:$0xff] %v613
  %s616 = scalar_lea.vmem %s0, 7
  %v617 = vld [vmem:[%s616] ss:$0 sm:$0xff]
  %s619 = sor.u32 256, 8
  %620 = vbcast.lane.b32.xlu0 %v617, %s619
  %v621 = vpop.permute.xlu0 %620
  %s622 = scalar_lea.vmem %s1, 232
  %623 = vst [vmem:[%s622] sm:$0xff] %v621
  %s624 = scalar_lea.vmem %s0, 32
  %s625 = scalar_lea.vmem %s624, 7
  %v626 = vld [vmem:[%s625] ss:$0 sm:$0xff]
  %s628 = sor.u32 256, 8
  %629 = vbcast.lane.b32.xlu0 %v626, %s628
  %v630 = vpop.permute.xlu0 %629
  %s631 = scalar_lea.vmem %s1, 1256
  %632 = vst [vmem:[%s631] sm:$0xff] %v630
  %s633 = scalar_lea.vmem %s0, 8
  %v634 = vld [vmem:[%s633] ss:$0 sm:$0xff]
  %s636 = sor.u32 256, 8
  %637 = vbcast.lane.b32.xlu0 %v634, %s636
  %v638 = vpop.permute.xlu0 %637
  %s639 = scalar_lea.vmem %s1, 264
  %640 = vst [vmem:[%s639] sm:$0xff] %v638
  %s641 = scalar_lea.vmem %s0, 40
  %v642 = vld [vmem:[%s641] ss:$0 sm:$0xff]
  %s644 = sor.u32 256, 8
  %645 = vbcast.lane.b32.xlu0 %v642, %s644
  %v646 = vpop.permute.xlu0 %645
  %s647 = scalar_lea.vmem %s1, 1288
  %648 = vst [vmem:[%s647] sm:$0xff] %v646
  %s649 = scalar_lea.vmem %s0, 8
  %s650 = scalar_lea.vmem %s649, 1
  %v651 = vld [vmem:[%s650] ss:$0 sm:$0xff]
  %s653 = sor.u32 256, 8
  %654 = vbcast.lane.b32.xlu0 %v651, %s653
  %v655 = vpop.permute.xlu0 %654
  %s656 = scalar_lea.vmem %s1, 296
  %657 = vst [vmem:[%s656] sm:$0xff] %v655
  %s658 = scalar_lea.vmem %s0, 40
  %s659 = scalar_lea.vmem %s658, 1
  %v660 = vld [vmem:[%s659] ss:$0 sm:$0xff]
  %s662 = sor.u32 256, 8
  %663 = vbcast.lane.b32.xlu0 %v660, %s662
  %v664 = vpop.permute.xlu0 %663
  %s665 = scalar_lea.vmem %s1, 1320
  %666 = vst [vmem:[%s665] sm:$0xff] %v664
  %s667 = scalar_lea.vmem %s0, 8
  %s668 = scalar_lea.vmem %s667, 2
  %v669 = vld [vmem:[%s668] ss:$0 sm:$0xff]
  %s671 = sor.u32 256, 8
  %672 = vbcast.lane.b32.xlu0 %v669, %s671
  %v673 = vpop.permute.xlu0 %672
  %s674 = scalar_lea.vmem %s1, 328
  %675 = vst [vmem:[%s674] sm:$0xff] %v673
  %s676 = scalar_lea.vmem %s0, 40
  %s677 = scalar_lea.vmem %s676, 2
  %v678 = vld [vmem:[%s677] ss:$0 sm:$0xff]
  %s680 = sor.u32 256, 8
  %681 = vbcast.lane.b32.xlu0 %v678, %s680
  %v682 = vpop.permute.xlu0 %681
  %s683 = scalar_lea.vmem %s1, 1352
  %684 = vst [vmem:[%s683] sm:$0xff] %v682
  %s685 = scalar_lea.vmem %s0, 8
  %s686 = scalar_lea.vmem %s685, 3
  %v687 = vld [vmem:[%s686] ss:$0 sm:$0xff]
  %s689 = sor.u32 256, 8
  %690 = vbcast.lane.b32.xlu0 %v687, %s689
  %v691 = vpop.permute.xlu0 %690
  %s692 = scalar_lea.vmem %s1, 360
  %693 = vst [vmem:[%s692] sm:$0xff] %v691
  %s694 = scalar_lea.vmem %s0, 40
  %s695 = scalar_lea.vmem %s694, 3
  %v696 = vld [vmem:[%s695] ss:$0 sm:$0xff]
  %s698 = sor.u32 256, 8
  %699 = vbcast.lane.b32.xlu0 %v696, %s698
  %v700 = vpop.permute.xlu0 %699
  %s701 = scalar_lea.vmem %s1, 1384
  %702 = vst [vmem:[%s701] sm:$0xff] %v700
  %s703 = scalar_lea.vmem %s0, 8
  %s704 = scalar_lea.vmem %s703, 4
  %v705 = vld [vmem:[%s704] ss:$0 sm:$0xff]
  %s707 = sor.u32 256, 8
  %708 = vbcast.lane.b32.xlu0 %v705, %s707
  %v709 = vpop.permute.xlu0 %708
  %s710 = scalar_lea.vmem %s1, 392
  %711 = vst [vmem:[%s710] sm:$0xff] %v709
  %s712 = scalar_lea.vmem %s0, 40
  %s713 = scalar_lea.vmem %s712, 4
  %v714 = vld [vmem:[%s713] ss:$0 sm:$0xff]
  %s716 = sor.u32 256, 8
  %717 = vbcast.lane.b32.xlu0 %v714, %s716
  %v718 = vpop.permute.xlu0 %717
  %s719 = scalar_lea.vmem %s1, 1416
  %720 = vst [vmem:[%s719] sm:$0xff] %v718
  %s721 = scalar_lea.vmem %s0, 8
  %s722 = scalar_lea.vmem %s721, 5
  %v723 = vld [vmem:[%s722] ss:$0 sm:$0xff]
  %s725 = sor.u32 256, 8
  %726 = vbcast.lane.b32.xlu0 %v723, %s725
  %v727 = vpop.permute.xlu0 %726
  %s728 = scalar_lea.vmem %s1, 424
  %729 = vst [vmem:[%s728] sm:$0xff] %v727
  %s730 = scalar_lea.vmem %s0, 40
  %s731 = scalar_lea.vmem %s730, 5
  %v732 = vld [vmem:[%s731] ss:$0 sm:$0xff]
  %s734 = sor.u32 256, 8
  %735 = vbcast.lane.b32.xlu0 %v732, %s734
  %v736 = vpop.permute.xlu0 %735
  %s737 = scalar_lea.vmem %s1, 1448
  %738 = vst [vmem:[%s737] sm:$0xff] %v736
  %s739 = scalar_lea.vmem %s0, 8
  %s740 = scalar_lea.vmem %s739, 6
  %v741 = vld [vmem:[%s740] ss:$0 sm:$0xff]
  %s743 = sor.u32 256, 8
  %744 = vbcast.lane.b32.xlu0 %v741, %s743
  %v745 = vpop.permute.xlu0 %744
  %s746 = scalar_lea.vmem %s1, 456
  %747 = vst [vmem:[%s746] sm:$0xff] %v745
  %s748 = scalar_lea.vmem %s0, 40
  %s749 = scalar_lea.vmem %s748, 6
  %v750 = vld [vmem:[%s749] ss:$0 sm:$0xff]
  %s752 = sor.u32 256, 8
  %753 = vbcast.lane.b32.xlu0 %v750, %s752
  %v754 = vpop.permute.xlu0 %753
  %s755 = scalar_lea.vmem %s1, 1480
  %756 = vst [vmem:[%s755] sm:$0xff] %v754
  %s757 = scalar_lea.vmem %s0, 8
  %s758 = scalar_lea.vmem %s757, 7
  %v759 = vld [vmem:[%s758] ss:$0 sm:$0xff]
  %s761 = sor.u32 256, 8
  %762 = vbcast.lane.b32.xlu0 %v759, %s761
  %v763 = vpop.permute.xlu0 %762
  %s764 = scalar_lea.vmem %s1, 488
  %765 = vst [vmem:[%s764] sm:$0xff] %v763
  %s766 = scalar_lea.vmem %s0, 40
  %s767 = scalar_lea.vmem %s766, 7
  %v768 = vld [vmem:[%s767] ss:$0 sm:$0xff]
  %s770 = sor.u32 256, 8
  %771 = vbcast.lane.b32.xlu0 %v768, %s770
  %v772 = vpop.permute.xlu0 %771
  %s773 = scalar_lea.vmem %s1, 1512
  %774 = vst [vmem:[%s773] sm:$0xff] %v772
  %s775 = scalar_lea.vmem %s0, 16
  %v776 = vld [vmem:[%s775] ss:$0 sm:$0xff]
  %s778 = sor.u32 256, 8
  %779 = vbcast.lane.b32.xlu0 %v776, %s778
  %v780 = vpop.permute.xlu0 %779
  %s781 = scalar_lea.vmem %s1, 520
  %782 = vst [vmem:[%s781] sm:$0xff] %v780
  %s783 = scalar_lea.vmem %s0, 48
  %v784 = vld [vmem:[%s783] ss:$0 sm:$0xff]
  %s786 = sor.u32 256, 8
  %787 = vbcast.lane.b32.xlu0 %v784, %s786
  %v788 = vpop.permute.xlu0 %787
  %s789 = scalar_lea.vmem %s1, 1544
  %790 = vst [vmem:[%s789] sm:$0xff] %v788
  %s791 = scalar_lea.vmem %s0, 16
  %s792 = scalar_lea.vmem %s791, 1
  %v793 = vld [vmem:[%s792] ss:$0 sm:$0xff]
  %s795 = sor.u32 256, 8
  %796 = vbcast.lane.b32.xlu0 %v793, %s795
  %v797 = vpop.permute.xlu0 %796
  %s798 = scalar_lea.vmem %s1, 552
  %799 = vst [vmem:[%s798] sm:$0xff] %v797
  %s800 = scalar_lea.vmem %s0, 48
  %s801 = scalar_lea.vmem %s800, 1
  %v802 = vld [vmem:[%s801] ss:$0 sm:$0xff]
  %s804 = sor.u32 256, 8
  %805 = vbcast.lane.b32.xlu0 %v802, %s804
  %v806 = vpop.permute.xlu0 %805
  %s807 = scalar_lea.vmem %s1, 1576
  %808 = vst [vmem:[%s807] sm:$0xff] %v806
  %s809 = scalar_lea.vmem %s0, 16
  %s810 = scalar_lea.vmem %s809, 2
  %v811 = vld [vmem:[%s810] ss:$0 sm:$0xff]
  %s813 = sor.u32 256, 8
  %814 = vbcast.lane.b32.xlu0 %v811, %s813
  %v815 = vpop.permute.xlu0 %814
  %s816 = scalar_lea.vmem %s1, 584
  %817 = vst [vmem:[%s816] sm:$0xff] %v815
  %s818 = scalar_lea.vmem %s0, 48
  %s819 = scalar_lea.vmem %s818, 2
  %v820 = vld [vmem:[%s819] ss:$0 sm:$0xff]
  %s822 = sor.u32 256, 8
  %823 = vbcast.lane.b32.xlu0 %v820, %s822
  %v824 = vpop.permute.xlu0 %823
  %s825 = scalar_lea.vmem %s1, 1608
  %826 = vst [vmem:[%s825] sm:$0xff] %v824
  %s827 = scalar_lea.vmem %s0, 16
  %s828 = scalar_lea.vmem %s827, 3
  %v829 = vld [vmem:[%s828] ss:$0 sm:$0xff]
  %s831 = sor.u32 256, 8
  %832 = vbcast.lane.b32.xlu0 %v829, %s831
  %v833 = vpop.permute.xlu0 %832
  %s834 = scalar_lea.vmem %s1, 616
  %835 = vst [vmem:[%s834] sm:$0xff] %v833
  %s836 = scalar_lea.vmem %s0, 48
  %s837 = scalar_lea.vmem %s836, 3
  %v838 = vld [vmem:[%s837] ss:$0 sm:$0xff]
  %s840 = sor.u32 256, 8
  %841 = vbcast.lane.b32.xlu0 %v838, %s840
  %v842 = vpop.permute.xlu0 %841
  %s843 = scalar_lea.vmem %s1, 1640
  %844 = vst [vmem:[%s843] sm:$0xff] %v842
  %s845 = scalar_lea.vmem %s0, 16
  %s846 = scalar_lea.vmem %s845, 4
  %v847 = vld [vmem:[%s846] ss:$0 sm:$0xff]
  %s849 = sor.u32 256, 8
  %850 = vbcast.lane.b32.xlu0 %v847, %s849
  %v851 = vpop.permute.xlu0 %850
  %s852 = scalar_lea.vmem %s1, 648
  %853 = vst [vmem:[%s852] sm:$0xff] %v851
  %s854 = scalar_lea.vmem %s0, 48
  %s855 = scalar_lea.vmem %s854, 4
  %v856 = vld [vmem:[%s855] ss:$0 sm:$0xff]
  %s858 = sor.u32 256, 8
  %859 = vbcast.lane.b32.xlu0 %v856, %s858
  %v860 = vpop.permute.xlu0 %859
  %s861 = scalar_lea.vmem %s1, 1672
  %862 = vst [vmem:[%s861] sm:$0xff] %v860
  %s863 = scalar_lea.vmem %s0, 16
  %s864 = scalar_lea.vmem %s863, 5
  %v865 = vld [vmem:[%s864] ss:$0 sm:$0xff]
  %s867 = sor.u32 256, 8
  %868 = vbcast.lane.b32.xlu0 %v865, %s867
  %v869 = vpop.permute.xlu0 %868
  %s870 = scalar_lea.vmem %s1, 680
  %871 = vst [vmem:[%s870] sm:$0xff] %v869
  %s872 = scalar_lea.vmem %s0, 48
  %s873 = scalar_lea.vmem %s872, 5
  %v874 = vld [vmem:[%s873] ss:$0 sm:$0xff]
  %s876 = sor.u32 256, 8
  %877 = vbcast.lane.b32.xlu0 %v874, %s876
  %v878 = vpop.permute.xlu0 %877
  %s879 = scalar_lea.vmem %s1, 1704
  %880 = vst [vmem:[%s879] sm:$0xff] %v878
  %s881 = scalar_lea.vmem %s0, 16
  %s882 = scalar_lea.vmem %s881, 6
  %v883 = vld [vmem:[%s882] ss:$0 sm:$0xff]
  %s885 = sor.u32 256, 8
  %886 = vbcast.lane.b32.xlu0 %v883, %s885
  %v887 = vpop.permute.xlu0 %886
  %s888 = scalar_lea.vmem %s1, 712
  %889 = vst [vmem:[%s888] sm:$0xff] %v887
  %s890 = scalar_lea.vmem %s0, 48
  %s891 = scalar_lea.vmem %s890, 6
  %v892 = vld [vmem:[%s891] ss:$0 sm:$0xff]
  %s894 = sor.u32 256, 8
  %895 = vbcast.lane.b32.xlu0 %v892, %s894
  %v896 = vpop.permute.xlu0 %895
  %s897 = scalar_lea.vmem %s1, 1736
  %898 = vst [vmem:[%s897] sm:$0xff] %v896
  %s899 = scalar_lea.vmem %s0, 16
  %s900 = scalar_lea.vmem %s899, 7
  %v901 = vld [vmem:[%s900] ss:$0 sm:$0xff]
  %s903 = sor.u32 256, 8
  %904 = vbcast.lane.b32.xlu0 %v901, %s903
  %v905 = vpop.permute.xlu0 %904
  %s906 = scalar_lea.vmem %s1, 744
  %907 = vst [vmem:[%s906] sm:$0xff] %v905
  %s908 = scalar_lea.vmem %s0, 48
  %s909 = scalar_lea.vmem %s908, 7
  %v910 = vld [vmem:[%s909] ss:$0 sm:$0xff]
  %s912 = sor.u32 256, 8
  %913 = vbcast.lane.b32.xlu0 %v910, %s912
  %v914 = vpop.permute.xlu0 %913
  %s915 = scalar_lea.vmem %s1, 1768
  %916 = vst [vmem:[%s915] sm:$0xff] %v914
  %s917 = scalar_lea.vmem %s0, 24
  %v918 = vld [vmem:[%s917] ss:$0 sm:$0xff]
  %s920 = sor.u32 256, 8
  %921 = vbcast.lane.b32.xlu0 %v918, %s920
  %v922 = vpop.permute.xlu0 %921
  %s923 = scalar_lea.vmem %s1, 776
  %924 = vst [vmem:[%s923] sm:$0xff] %v922
  %s925 = scalar_lea.vmem %s0, 56
  %v926 = vld [vmem:[%s925] ss:$0 sm:$0xff]
  %s928 = sor.u32 256, 8
  %929 = vbcast.lane.b32.xlu0 %v926, %s928
  %v930 = vpop.permute.xlu0 %929
  %s931 = scalar_lea.vmem %s1, 1800
  %932 = vst [vmem:[%s931] sm:$0xff] %v930
  %s933 = scalar_lea.vmem %s0, 24
  %s934 = scalar_lea.vmem %s933, 1
  %v935 = vld [vmem:[%s934] ss:$0 sm:$0xff]
  %s937 = sor.u32 256, 8
  %938 = vbcast.lane.b32.xlu0 %v935, %s937
  %v939 = vpop.permute.xlu0 %938
  %s940 = scalar_lea.vmem %s1, 808
  %941 = vst [vmem:[%s940] sm:$0xff] %v939
  %s942 = scalar_lea.vmem %s0, 56
  %s943 = scalar_lea.vmem %s942, 1
  %v944 = vld [vmem:[%s943] ss:$0 sm:$0xff]
  %s946 = sor.u32 256, 8
  %947 = vbcast.lane.b32.xlu0 %v944, %s946
  %v948 = vpop.permute.xlu0 %947
  %s949 = scalar_lea.vmem %s1, 1832
  %950 = vst [vmem:[%s949] sm:$0xff] %v948
  %s951 = scalar_lea.vmem %s0, 24
  %s952 = scalar_lea.vmem %s951, 2
  %v953 = vld [vmem:[%s952] ss:$0 sm:$0xff]
  %s955 = sor.u32 256, 8
  %956 = vbcast.lane.b32.xlu0 %v953, %s955
  %v957 = vpop.permute.xlu0 %956
  %s958 = scalar_lea.vmem %s1, 840
  %959 = vst [vmem:[%s958] sm:$0xff] %v957
  %s960 = scalar_lea.vmem %s0, 56
  %s961 = scalar_lea.vmem %s960, 2
  %v962 = vld [vmem:[%s961] ss:$0 sm:$0xff]
  %s964 = sor.u32 256, 8
  %965 = vbcast.lane.b32.xlu0 %v962, %s964
  %v966 = vpop.permute.xlu0 %965
  %s967 = scalar_lea.vmem %s1, 1864
  %968 = vst [vmem:[%s967] sm:$0xff] %v966
  %s969 = scalar_lea.vmem %s0, 24
  %s970 = scalar_lea.vmem %s969, 3
  %v971 = vld [vmem:[%s970] ss:$0 sm:$0xff]
  %s973 = sor.u32 256, 8
  %974 = vbcast.lane.b32.xlu0 %v971, %s973
  %v975 = vpop.permute.xlu0 %974
  %s976 = scalar_lea.vmem %s1, 872
  %977 = vst [vmem:[%s976] sm:$0xff] %v975
  %s978 = scalar_lea.vmem %s0, 56
  %s979 = scalar_lea.vmem %s978, 3
  %v980 = vld [vmem:[%s979] ss:$0 sm:$0xff]
  %s982 = sor.u32 256, 8
  %983 = vbcast.lane.b32.xlu0 %v980, %s982
  %v984 = vpop.permute.xlu0 %983
  %s985 = scalar_lea.vmem %s1, 1896
  %986 = vst [vmem:[%s985] sm:$0xff] %v984
  %s987 = scalar_lea.vmem %s0, 24
  %s988 = scalar_lea.vmem %s987, 4
  %v989 = vld [vmem:[%s988] ss:$0 sm:$0xff]
  %s991 = sor.u32 256, 8
  %992 = vbcast.lane.b32.xlu0 %v989, %s991
  %v993 = vpop.permute.xlu0 %992
  %s994 = scalar_lea.vmem %s1, 904
  %995 = vst [vmem:[%s994] sm:$0xff] %v993
  %s996 = scalar_lea.vmem %s0, 56
  %s997 = scalar_lea.vmem %s996, 4
  %v998 = vld [vmem:[%s997] ss:$0 sm:$0xff]
  %s1000 = sor.u32 256, 8
  %1001 = vbcast.lane.b32.xlu0 %v998, %s1000
  %v1002 = vpop.permute.xlu0 %1001
  %s1003 = scalar_lea.vmem %s1, 1928
  %1004 = vst [vmem:[%s1003] sm:$0xff] %v1002
  %s1005 = scalar_lea.vmem %s0, 24
  %s1006 = scalar_lea.vmem %s1005, 5
  %v1007 = vld [vmem:[%s1006] ss:$0 sm:$0xff]
  %s1009 = sor.u32 256, 8
  %1010 = vbcast.lane.b32.xlu0 %v1007, %s1009
  %v1011 = vpop.permute.xlu0 %1010
  %s1012 = scalar_lea.vmem %s1, 936
  %1013 = vst [vmem:[%s1012] sm:$0xff] %v1011
  %s1014 = scalar_lea.vmem %s0, 56
  %s1015 = scalar_lea.vmem %s1014, 5
  %v1016 = vld [vmem:[%s1015] ss:$0 sm:$0xff]
  %s1018 = sor.u32 256, 8
  %1019 = vbcast.lane.b32.xlu0 %v1016, %s1018
  %v1020 = vpop.permute.xlu0 %1019
  %s1021 = scalar_lea.vmem %s1, 1960
  %1022 = vst [vmem:[%s1021] sm:$0xff] %v1020
  %s1023 = scalar_lea.vmem %s0, 24
  %s1024 = scalar_lea.vmem %s1023, 6
  %v1025 = vld [vmem:[%s1024] ss:$0 sm:$0xff]
  %s1027 = sor.u32 256, 8
  %1028 = vbcast.lane.b32.xlu0 %v1025, %s1027
  %v1029 = vpop.permute.xlu0 %1028
  %s1030 = scalar_lea.vmem %s1, 968
  %1031 = vst [vmem:[%s1030] sm:$0xff] %v1029
  %s1032 = scalar_lea.vmem %s0, 56
  %s1033 = scalar_lea.vmem %s1032, 6
  %v1034 = vld [vmem:[%s1033] ss:$0 sm:$0xff]
  %s1036 = sor.u32 256, 8
  %1037 = vbcast.lane.b32.xlu0 %v1034, %s1036
  %v1038 = vpop.permute.xlu0 %1037
  %s1039 = scalar_lea.vmem %s1, 1992
  %1040 = vst [vmem:[%s1039] sm:$0xff] %v1038
  %s1041 = scalar_lea.vmem %s0, 24
  %s1042 = scalar_lea.vmem %s1041, 7
  %v1043 = vld [vmem:[%s1042] ss:$0 sm:$0xff]
  %s1045 = sor.u32 256, 8
  %1046 = vbcast.lane.b32.xlu0 %v1043, %s1045
  %v1047 = vpop.permute.xlu0 %1046
  %s1048 = scalar_lea.vmem %s1, 1000
  %1049 = vst [vmem:[%s1048] sm:$0xff] %v1047
  %s1050 = scalar_lea.vmem %s0, 56
  %s1051 = scalar_lea.vmem %s1050, 7
  %v1052 = vld [vmem:[%s1051] ss:$0 sm:$0xff]
  %s1054 = sor.u32 256, 8
  %1055 = vbcast.lane.b32.xlu0 %v1052, %s1054
  %v1056 = vpop.permute.xlu0 %1055
  %s1057 = scalar_lea.vmem %s1, 2024
  %1058 = vst [vmem:[%s1057] sm:$0xff] %v1056
  %v1059 = vld [vmem:[%s0] ss:$0 sm:$0xff]
  %s1061 = sor.u32 256, 16
  %1062 = vbcast.lane.b32.xlu0 %v1059, %s1061
  %v1063 = vpop.permute.xlu0 %1062
  %s1064 = scalar_lea.vmem %s1, 16
  %1065 = vst [vmem:[%s1064] sm:$0xff] %v1063
  %s1066 = scalar_lea.vmem %s0, 32
  %v1067 = vld [vmem:[%s1066] ss:$0 sm:$0xff]
  %s1069 = sor.u32 256, 16
  %1070 = vbcast.lane.b32.xlu0 %v1067, %s1069
  %v1071 = vpop.permute.xlu0 %1070
  %s1072 = scalar_lea.vmem %s1, 1040
  %1073 = vst [vmem:[%s1072] sm:$0xff] %v1071
  %s1074 = scalar_lea.vmem %s0, 1
  %v1075 = vld [vmem:[%s1074] ss:$0 sm:$0xff]
  %s1077 = sor.u32 256, 16
  %1078 = vbcast.lane.b32.xlu0 %v1075, %s1077
  %v1079 = vpop.permute.xlu0 %1078
  %s1080 = scalar_lea.vmem %s1, 48
  %1081 = vst [vmem:[%s1080] sm:$0xff] %v1079
  %s1082 = scalar_lea.vmem %s0, 32
  %s1083 = scalar_lea.vmem %s1082, 1
  %v1084 = vld [vmem:[%s1083] ss:$0 sm:$0xff]
  %s1086 = sor.u32 256, 16
  %1087 = vbcast.lane.b32.xlu0 %v1084, %s1086
  %v1088 = vpop.permute.xlu0 %1087
  %s1089 = scalar_lea.vmem %s1, 1072
  %1090 = vst [vmem:[%s1089] sm:$0xff] %v1088
  %s1091 = scalar_lea.vmem %s0, 2
  %v1092 = vld [vmem:[%s1091] ss:$0 sm:$0xff]
  %s1094 = sor.u32 256, 16
  %1095 = vbcast.lane.b32.xlu0 %v1092, %s1094
  %v1096 = vpop.permute.xlu0 %1095
  %s1097 = scalar_lea.vmem %s1, 80
  %1098 = vst [vmem:[%s1097] sm:$0xff] %v1096
  %s1099 = scalar_lea.vmem %s0, 32
  %s1100 = scalar_lea.vmem %s1099, 2
  %v1101 = vld [vmem:[%s1100] ss:$0 sm:$0xff]
  %s1103 = sor.u32 256, 16
  %1104 = vbcast.lane.b32.xlu0 %v1101, %s1103
  %v1105 = vpop.permute.xlu0 %1104
  %s1106 = scalar_lea.vmem %s1, 1104
  %1107 = vst [vmem:[%s1106] sm:$0xff] %v1105
  %s1108 = scalar_lea.vmem %s0, 3
  %v1109 = vld [vmem:[%s1108] ss:$0 sm:$0xff]
  %s1111 = sor.u32 256, 16
  %1112 = vbcast.lane.b32.xlu0 %v1109, %s1111
  %v1113 = vpop.permute.xlu0 %1112
  %s1114 = scalar_lea.vmem %s1, 112
  %1115 = vst [vmem:[%s1114] sm:$0xff] %v1113
  %s1116 = scalar_lea.vmem %s0, 32
  %s1117 = scalar_lea.vmem %s1116, 3
  %v1118 = vld [vmem:[%s1117] ss:$0 sm:$0xff]
  %s1120 = sor.u32 256, 16
  %1121 = vbcast.lane.b32.xlu0 %v1118, %s1120
  %v1122 = vpop.permute.xlu0 %1121
  %s1123 = scalar_lea.vmem %s1, 1136
  %1124 = vst [vmem:[%s1123] sm:$0xff] %v1122
  %s1125 = scalar_lea.vmem %s0, 4
  %v1126 = vld [vmem:[%s1125] ss:$0 sm:$0xff]
  %s1128 = sor.u32 256, 16
  %1129 = vbcast.lane.b32.xlu0 %v1126, %s1128
  %v1130 = vpop.permute.xlu0 %1129
  %s1131 = scalar_lea.vmem %s1, 144
  %1132 = vst [vmem:[%s1131] sm:$0xff] %v1130
  %s1133 = scalar_lea.vmem %s0, 32
  %s1134 = scalar_lea.vmem %s1133, 4
  %v1135 = vld [vmem:[%s1134] ss:$0 sm:$0xff]
  %s1137 = sor.u32 256, 16
  %1138 = vbcast.lane.b32.xlu0 %v1135, %s1137
  %v1139 = vpop.permute.xlu0 %1138
  %s1140 = scalar_lea.vmem %s1, 1168
  %1141 = vst [vmem:[%s1140] sm:$0xff] %v1139
  %s1142 = scalar_lea.vmem %s0, 5
  %v1143 = vld [vmem:[%s1142] ss:$0 sm:$0xff]
  %s1145 = sor.u32 256, 16
  %1146 = vbcast.lane.b32.xlu0 %v1143, %s1145
  %v1147 = vpop.permute.xlu0 %1146
  %s1148 = scalar_lea.vmem %s1, 176
  %1149 = vst [vmem:[%s1148] sm:$0xff] %v1147
  %s1150 = scalar_lea.vmem %s0, 32
  %s1151 = scalar_lea.vmem %s1150, 5
  %v1152 = vld [vmem:[%s1151] ss:$0 sm:$0xff]
  %s1154 = sor.u32 256, 16
  %1155 = vbcast.lane.b32.xlu0 %v1152, %s1154
  %v1156 = vpop.permute.xlu0 %1155
  %s1157 = scalar_lea.vmem %s1, 1200
  %1158 = vst [vmem:[%s1157] sm:$0xff] %v1156
  %s1159 = scalar_lea.vmem %s0, 6
  %v1160 = vld [vmem:[%s1159] ss:$0 sm:$0xff]
  %s1162 = sor.u32 256, 16
  %1163 = vbcast.lane.b32.xlu0 %v1160, %s1162
  %v1164 = vpop.permute.xlu0 %1163
  %s1165 = scalar_lea.vmem %s1, 208
  %1166 = vst [vmem:[%s1165] sm:$0xff] %v1164
  %s1167 = scalar_lea.vmem %s0, 32
  %s1168 = scalar_lea.vmem %s1167, 6
  %v1169 = vld [vmem:[%s1168] ss:$0 sm:$0xff]
  %s1171 = sor.u32 256, 16
  %1172 = vbcast.lane.b32.xlu0 %v1169, %s1171
  %v1173 = vpop.permute.xlu0 %1172
  %s1174 = scalar_lea.vmem %s1, 1232
  %1175 = vst [vmem:[%s1174] sm:$0xff] %v1173
  %s1176 = scalar_lea.vmem %s0, 7
  %v1177 = vld [vmem:[%s1176] ss:$0 sm:$0xff]
  %s1179 = sor.u32 256, 16
  %1180 = vbcast.lane.b32.xlu0 %v1177, %s1179
  %v1181 = vpop.permute.xlu0 %1180
  %s1182 = scalar_lea.vmem %s1, 240
  %1183 = vst [vmem:[%s1182] sm:$0xff] %v1181
  %s1184 = scalar_lea.vmem %s0, 32
  %s1185 = scalar_lea.vmem %s1184, 7
  %v1186 = vld [vmem:[%s1185] ss:$0 sm:$0xff]
  %s1188 = sor.u32 256, 16
  %1189 = vbcast.lane.b32.xlu0 %v1186, %s1188
  %v1190 = vpop.permute.xlu0 %1189
  %s1191 = scalar_lea.vmem %s1, 1264
  %1192 = vst [vmem:[%s1191] sm:$0xff] %v1190
  %s1193 = scalar_lea.vmem %s0, 8
  %v1194 = vld [vmem:[%s1193] ss:$0 sm:$0xff]
  %s1196 = sor.u32 256, 16
  %1197 = vbcast.lane.b32.xlu0 %v1194, %s1196
  %v1198 = vpop.permute.xlu0 %1197
  %s1199 = scalar_lea.vmem %s1, 272
  %1200 = vst [vmem:[%s1199] sm:$0xff] %v1198
  %s1201 = scalar_lea.vmem %s0, 40
  %v1202 = vld [vmem:[%s1201] ss:$0 sm:$0xff]
  %s1204 = sor.u32 256, 16
  %1205 = vbcast.lane.b32.xlu0 %v1202, %s1204
  %v1206 = vpop.permute.xlu0 %1205
  %s1207 = scalar_lea.vmem %s1, 1296
  %1208 = vst [vmem:[%s1207] sm:$0xff] %v1206
  %s1209 = scalar_lea.vmem %s0, 8
  %s1210 = scalar_lea.vmem %s1209, 1
  %v1211 = vld [vmem:[%s1210] ss:$0 sm:$0xff]
  %s1213 = sor.u32 256, 16
  %1214 = vbcast.lane.b32.xlu0 %v1211, %s1213
  %v1215 = vpop.permute.xlu0 %1214
  %s1216 = scalar_lea.vmem %s1, 304
  %1217 = vst [vmem:[%s1216] sm:$0xff] %v1215
  %s1218 = scalar_lea.vmem %s0, 40
  %s1219 = scalar_lea.vmem %s1218, 1
  %v1220 = vld [vmem:[%s1219] ss:$0 sm:$0xff]
  %s1222 = sor.u32 256, 16
  %1223 = vbcast.lane.b32.xlu0 %v1220, %s1222
  %v1224 = vpop.permute.xlu0 %1223
  %s1225 = scalar_lea.vmem %s1, 1328
  %1226 = vst [vmem:[%s1225] sm:$0xff] %v1224
  %s1227 = scalar_lea.vmem %s0, 8
  %s1228 = scalar_lea.vmem %s1227, 2
  %v1229 = vld [vmem:[%s1228] ss:$0 sm:$0xff]
  %s1231 = sor.u32 256, 16
  %1232 = vbcast.lane.b32.xlu0 %v1229, %s1231
  %v1233 = vpop.permute.xlu0 %1232
  %s1234 = scalar_lea.vmem %s1, 336
  %1235 = vst [vmem:[%s1234] sm:$0xff] %v1233
  %s1236 = scalar_lea.vmem %s0, 40
  %s1237 = scalar_lea.vmem %s1236, 2
  %v1238 = vld [vmem:[%s1237] ss:$0 sm:$0xff]
  %s1240 = sor.u32 256, 16
  %1241 = vbcast.lane.b32.xlu0 %v1238, %s1240
  %v1242 = vpop.permute.xlu0 %1241
  %s1243 = scalar_lea.vmem %s1, 1360
  %1244 = vst [vmem:[%s1243] sm:$0xff] %v1242
  %s1245 = scalar_lea.vmem %s0, 8
  %s1246 = scalar_lea.vmem %s1245, 3
  %v1247 = vld [vmem:[%s1246] ss:$0 sm:$0xff]
  %s1249 = sor.u32 256, 16
  %1250 = vbcast.lane.b32.xlu0 %v1247, %s1249
  %v1251 = vpop.permute.xlu0 %1250
  %s1252 = scalar_lea.vmem %s1, 368
  %1253 = vst [vmem:[%s1252] sm:$0xff] %v1251
  %s1254 = scalar_lea.vmem %s0, 40
  %s1255 = scalar_lea.vmem %s1254, 3
  %v1256 = vld [vmem:[%s1255] ss:$0 sm:$0xff]
  %s1258 = sor.u32 256, 16
  %1259 = vbcast.lane.b32.xlu0 %v1256, %s1258
  %v1260 = vpop.permute.xlu0 %1259
  %s1261 = scalar_lea.vmem %s1, 1392
  %1262 = vst [vmem:[%s1261] sm:$0xff] %v1260
  %s1263 = scalar_lea.vmem %s0, 8
  %s1264 = scalar_lea.vmem %s1263, 4
  %v1265 = vld [vmem:[%s1264] ss:$0 sm:$0xff]
  %s1267 = sor.u32 256, 16
  %1268 = vbcast.lane.b32.xlu0 %v1265, %s1267
  %v1269 = vpop.permute.xlu0 %1268
  %s1270 = scalar_lea.vmem %s1, 400
  %1271 = vst [vmem:[%s1270] sm:$0xff] %v1269
  %s1272 = scalar_lea.vmem %s0, 40
  %s1273 = scalar_lea.vmem %s1272, 4
  %v1274 = vld [vmem:[%s1273] ss:$0 sm:$0xff]
  %s1276 = sor.u32 256, 16
  %1277 = vbcast.lane.b32.xlu0 %v1274, %s1276
  %v1278 = vpop.permute.xlu0 %1277
  %s1279 = scalar_lea.vmem %s1, 1424
  %1280 = vst [vmem:[%s1279] sm:$0xff] %v1278
  %s1281 = scalar_lea.vmem %s0, 8
  %s1282 = scalar_lea.vmem %s1281, 5
  %v1283 = vld [vmem:[%s1282] ss:$0 sm:$0xff]
  %s1285 = sor.u32 256, 16
  %1286 = vbcast.lane.b32.xlu0 %v1283, %s1285
  %v1287 = vpop.permute.xlu0 %1286
  %s1288 = scalar_lea.vmem %s1, 432
  %1289 = vst [vmem:[%s1288] sm:$0xff] %v1287
  %s1290 = scalar_lea.vmem %s0, 40
  %s1291 = scalar_lea.vmem %s1290, 5
  %v1292 = vld [vmem:[%s1291] ss:$0 sm:$0xff]
  %s1294 = sor.u32 256, 16
  %1295 = vbcast.lane.b32.xlu0 %v1292, %s1294
  %v1296 = vpop.permute.xlu0 %1295
  %s1297 = scalar_lea.vmem %s1, 1456
  %1298 = vst [vmem:[%s1297] sm:$0xff] %v1296
  %s1299 = scalar_lea.vmem %s0, 8
  %s1300 = scalar_lea.vmem %s1299, 6
  %v1301 = vld [vmem:[%s1300] ss:$0 sm:$0xff]
  %s1303 = sor.u32 256, 16
  %1304 = vbcast.lane.b32.xlu0 %v1301, %s1303
  %v1305 = vpop.permute.xlu0 %1304
  %s1306 = scalar_lea.vmem %s1, 464
  %1307 = vst [vmem:[%s1306] sm:$0xff] %v1305
  %s1308 = scalar_lea.vmem %s0, 40
  %s1309 = scalar_lea.vmem %s1308, 6
  %v1310 = vld [vmem:[%s1309] ss:$0 sm:$0xff]
  %s1312 = sor.u32 256, 16
  %1313 = vbcast.lane.b32.xlu0 %v1310, %s1312
  %v1314 = vpop.permute.xlu0 %1313
  %s1315 = scalar_lea.vmem %s1, 1488
  %1316 = vst [vmem:[%s1315] sm:$0xff] %v1314
  %s1317 = scalar_lea.vmem %s0, 8
  %s1318 = scalar_lea.vmem %s1317, 7
  %v1319 = vld [vmem:[%s1318] ss:$0 sm:$0xff]
  %s1321 = sor.u32 256, 16
  %1322 = vbcast.lane.b32.xlu0 %v1319, %s1321
  %v1323 = vpop.permute.xlu0 %1322
  %s1324 = scalar_lea.vmem %s1, 496
  %1325 = vst [vmem:[%s1324] sm:$0xff] %v1323
  %s1326 = scalar_lea.vmem %s0, 40
  %s1327 = scalar_lea.vmem %s1326, 7
  %v1328 = vld [vmem:[%s1327] ss:$0 sm:$0xff]
  %s1330 = sor.u32 256, 16
  %1331 = vbcast.lane.b32.xlu0 %v1328, %s1330
  %v1332 = vpop.permute.xlu0 %1331
  %s1333 = scalar_lea.vmem %s1, 1520
  %1334 = vst [vmem:[%s1333] sm:$0xff] %v1332
  %s1335 = scalar_lea.vmem %s0, 16
  %v1336 = vld [vmem:[%s1335] ss:$0 sm:$0xff]
  %s1338 = sor.u32 256, 16
  %1339 = vbcast.lane.b32.xlu0 %v1336, %s1338
  %v1340 = vpop.permute.xlu0 %1339
  %s1341 = scalar_lea.vmem %s1, 528
  %1342 = vst [vmem:[%s1341] sm:$0xff] %v1340
  %s1343 = scalar_lea.vmem %s0, 48
  %v1344 = vld [vmem:[%s1343] ss:$0 sm:$0xff]
  %s1346 = sor.u32 256, 16
  %1347 = vbcast.lane.b32.xlu0 %v1344, %s1346
  %v1348 = vpop.permute.xlu0 %1347
  %s1349 = scalar_lea.vmem %s1, 1552
  %1350 = vst [vmem:[%s1349] sm:$0xff] %v1348
  %s1351 = scalar_lea.vmem %s0, 16
  %s1352 = scalar_lea.vmem %s1351, 1
  %v1353 = vld [vmem:[%s1352] ss:$0 sm:$0xff]
  %s1355 = sor.u32 256, 16
  %1356 = vbcast.lane.b32.xlu0 %v1353, %s1355
  %v1357 = vpop.permute.xlu0 %1356
  %s1358 = scalar_lea.vmem %s1, 560
  %1359 = vst [vmem:[%s1358] sm:$0xff] %v1357
  %s1360 = scalar_lea.vmem %s0, 48
  %s1361 = scalar_lea.vmem %s1360, 1
  %v1362 = vld [vmem:[%s1361] ss:$0 sm:$0xff]
  %s1364 = sor.u32 256, 16
  %1365 = vbcast.lane.b32.xlu0 %v1362, %s1364
  %v1366 = vpop.permute.xlu0 %1365
  %s1367 = scalar_lea.vmem %s1, 1584
  %1368 = vst [vmem:[%s1367] sm:$0xff] %v1366
  %s1369 = scalar_lea.vmem %s0, 16
  %s1370 = scalar_lea.vmem %s1369, 2
  %v1371 = vld [vmem:[%s1370] ss:$0 sm:$0xff]
  %s1373 = sor.u32 256, 16
  %1374 = vbcast.lane.b32.xlu0 %v1371, %s1373
  %v1375 = vpop.permute.xlu0 %1374
  %s1376 = scalar_lea.vmem %s1, 592
  %1377 = vst [vmem:[%s1376] sm:$0xff] %v1375
  %s1378 = scalar_lea.vmem %s0, 48
  %s1379 = scalar_lea.vmem %s1378, 2
  %v1380 = vld [vmem:[%s1379] ss:$0 sm:$0xff]
  %s1382 = sor.u32 256, 16
  %1383 = vbcast.lane.b32.xlu0 %v1380, %s1382
  %v1384 = vpop.permute.xlu0 %1383
  %s1385 = scalar_lea.vmem %s1, 1616
  %1386 = vst [vmem:[%s1385] sm:$0xff] %v1384
  %s1387 = scalar_lea.vmem %s0, 16
  %s1388 = scalar_lea.vmem %s1387, 3
  %v1389 = vld [vmem:[%s1388] ss:$0 sm:$0xff]
  %s1391 = sor.u32 256, 16
  %1392 = vbcast.lane.b32.xlu0 %v1389, %s1391
  %v1393 = vpop.permute.xlu0 %1392
  %s1394 = scalar_lea.vmem %s1, 624
  %1395 = vst [vmem:[%s1394] sm:$0xff] %v1393
  %s1396 = scalar_lea.vmem %s0, 48
  %s1397 = scalar_lea.vmem %s1396, 3
  %v1398 = vld [vmem:[%s1397] ss:$0 sm:$0xff]
  %s1400 = sor.u32 256, 16
  %1401 = vbcast.lane.b32.xlu0 %v1398, %s1400
  %v1402 = vpop.permute.xlu0 %1401
  %s1403 = scalar_lea.vmem %s1, 1648
  %1404 = vst [vmem:[%s1403] sm:$0xff] %v1402
  %s1405 = scalar_lea.vmem %s0, 16
  %s1406 = scalar_lea.vmem %s1405, 4
  %v1407 = vld [vmem:[%s1406] ss:$0 sm:$0xff]
  %s1409 = sor.u32 256, 16
  %1410 = vbcast.lane.b32.xlu0 %v1407, %s1409
  %v1411 = vpop.permute.xlu0 %1410
  %s1412 = scalar_lea.vmem %s1, 656
  %1413 = vst [vmem:[%s1412] sm:$0xff] %v1411
  %s1414 = scalar_lea.vmem %s0, 48
  %s1415 = scalar_lea.vmem %s1414, 4
  %v1416 = vld [vmem:[%s1415] ss:$0 sm:$0xff]
  %s1418 = sor.u32 256, 16
  %1419 = vbcast.lane.b32.xlu0 %v1416, %s1418
  %v1420 = vpop.permute.xlu0 %1419
  %s1421 = scalar_lea.vmem %s1, 1680
  %1422 = vst [vmem:[%s1421] sm:$0xff] %v1420
  %s1423 = scalar_lea.vmem %s0, 16
  %s1424 = scalar_lea.vmem %s1423, 5
  %v1425 = vld [vmem:[%s1424] ss:$0 sm:$0xff]
  %s1427 = sor.u32 256, 16
  %1428 = vbcast.lane.b32.xlu0 %v1425, %s1427
  %v1429 = vpop.permute.xlu0 %1428
  %s1430 = scalar_lea.vmem %s1, 688
  %1431 = vst [vmem:[%s1430] sm:$0xff] %v1429
  %s1432 = scalar_lea.vmem %s0, 48
  %s1433 = scalar_lea.vmem %s1432, 5
  %v1434 = vld [vmem:[%s1433] ss:$0 sm:$0xff]
  %s1436 = sor.u32 256, 16
  %1437 = vbcast.lane.b32.xlu0 %v1434, %s1436
  %v1438 = vpop.permute.xlu0 %1437
  %s1439 = scalar_lea.vmem %s1, 1712
  %1440 = vst [vmem:[%s1439] sm:$0xff] %v1438
  %s1441 = scalar_lea.vmem %s0, 16
  %s1442 = scalar_lea.vmem %s1441, 6
  %v1443 = vld [vmem:[%s1442] ss:$0 sm:$0xff]
  %s1445 = sor.u32 256, 16
  %1446 = vbcast.lane.b32.xlu0 %v1443, %s1445
  %v1447 = vpop.permute.xlu0 %1446
  %s1448 = scalar_lea.vmem %s1, 720
  %1449 = vst [vmem:[%s1448] sm:$0xff] %v1447
  %s1450 = scalar_lea.vmem %s0, 48
  %s1451 = scalar_lea.vmem %s1450, 6
  %v1452 = vld [vmem:[%s1451] ss:$0 sm:$0xff]
  %s1454 = sor.u32 256, 16
  %1455 = vbcast.lane.b32.xlu0 %v1452, %s1454
  %v1456 = vpop.permute.xlu0 %1455
  %s1457 = scalar_lea.vmem %s1, 1744
  %1458 = vst [vmem:[%s1457] sm:$0xff] %v1456
  %s1459 = scalar_lea.vmem %s0, 16
  %s1460 = scalar_lea.vmem %s1459, 7
  %v1461 = vld [vmem:[%s1460] ss:$0 sm:$0xff]
  %s1463 = sor.u32 256, 16
  %1464 = vbcast.lane.b32.xlu0 %v1461, %s1463
  %v1465 = vpop.permute.xlu0 %1464
  %s1466 = scalar_lea.vmem %s1, 752
  %1467 = vst [vmem:[%s1466] sm:$0xff] %v1465
  %s1468 = scalar_lea.vmem %s0, 48
  %s1469 = scalar_lea.vmem %s1468, 7
  %v1470 = vld [vmem:[%s1469] ss:$0 sm:$0xff]
  %s1472 = sor.u32 256, 16
  %1473 = vbcast.lane.b32.xlu0 %v1470, %s1472
  %v1474 = vpop.permute.xlu0 %1473
  %s1475 = scalar_lea.vmem %s1, 1776
  %1476 = vst [vmem:[%s1475] sm:$0xff] %v1474
  %s1477 = scalar_lea.vmem %s0, 24
  %v1478 = vld [vmem:[%s1477] ss:$0 sm:$0xff]
  %s1480 = sor.u32 256, 16
  %1481 = vbcast.lane.b32.xlu0 %v1478, %s1480
  %v1482 = vpop.permute.xlu0 %1481
  %s1483 = scalar_lea.vmem %s1, 784
  %1484 = vst [vmem:[%s1483] sm:$0xff] %v1482
  %s1485 = scalar_lea.vmem %s0, 56
  %v1486 = vld [vmem:[%s1485] ss:$0 sm:$0xff]
  %s1488 = sor.u32 256, 16
  %1489 = vbcast.lane.b32.xlu0 %v1486, %s1488
  %v1490 = vpop.permute.xlu0 %1489
  %s1491 = scalar_lea.vmem %s1, 1808
  %1492 = vst [vmem:[%s1491] sm:$0xff] %v1490
  %s1493 = scalar_lea.vmem %s0, 24
  %s1494 = scalar_lea.vmem %s1493, 1
  %v1495 = vld [vmem:[%s1494] ss:$0 sm:$0xff]
  %s1497 = sor.u32 256, 16
  %1498 = vbcast.lane.b32.xlu0 %v1495, %s1497
  %v1499 = vpop.permute.xlu0 %1498
  %s1500 = scalar_lea.vmem %s1, 816
  %1501 = vst [vmem:[%s1500] sm:$0xff] %v1499
  %s1502 = scalar_lea.vmem %s0, 56
  %s1503 = scalar_lea.vmem %s1502, 1
  %v1504 = vld [vmem:[%s1503] ss:$0 sm:$0xff]
  %s1506 = sor.u32 256, 16
  %1507 = vbcast.lane.b32.xlu0 %v1504, %s1506
  %v1508 = vpop.permute.xlu0 %1507
  %s1509 = scalar_lea.vmem %s1, 1840
  %1510 = vst [vmem:[%s1509] sm:$0xff] %v1508
  %s1511 = scalar_lea.vmem %s0, 24
  %s1512 = scalar_lea.vmem %s1511, 2
  %v1513 = vld [vmem:[%s1512] ss:$0 sm:$0xff]
  %s1515 = sor.u32 256, 16
  %1516 = vbcast.lane.b32.xlu0 %v1513, %s1515
  %v1517 = vpop.permute.xlu0 %1516
  %s1518 = scalar_lea.vmem %s1, 848
  %1519 = vst [vmem:[%s1518] sm:$0xff] %v1517
  %s1520 = scalar_lea.vmem %s0, 56
  %s1521 = scalar_lea.vmem %s1520, 2
  %v1522 = vld [vmem:[%s1521] ss:$0 sm:$0xff]
  %s1524 = sor.u32 256, 16
  %1525 = vbcast.lane.b32.xlu0 %v1522, %s1524
  %v1526 = vpop.permute.xlu0 %1525
  %s1527 = scalar_lea.vmem %s1, 1872
  %1528 = vst [vmem:[%s1527] sm:$0xff] %v1526
  %s1529 = scalar_lea.vmem %s0, 24
  %s1530 = scalar_lea.vmem %s1529, 3
  %v1531 = vld [vmem:[%s1530] ss:$0 sm:$0xff]
  %s1533 = sor.u32 256, 16
  %1534 = vbcast.lane.b32.xlu0 %v1531, %s1533
  %v1535 = vpop.permute.xlu0 %1534
  %s1536 = scalar_lea.vmem %s1, 880
  %1537 = vst [vmem:[%s1536] sm:$0xff] %v1535
  %s1538 = scalar_lea.vmem %s0, 56
  %s1539 = scalar_lea.vmem %s1538, 3
  %v1540 = vld [vmem:[%s1539] ss:$0 sm:$0xff]
  %s1542 = sor.u32 256, 16
  %1543 = vbcast.lane.b32.xlu0 %v1540, %s1542
  %v1544 = vpop.permute.xlu0 %1543
  %s1545 = scalar_lea.vmem %s1, 1904
  %1546 = vst [vmem:[%s1545] sm:$0xff] %v1544
  %s1547 = scalar_lea.vmem %s0, 24
  %s1548 = scalar_lea.vmem %s1547, 4
  %v1549 = vld [vmem:[%s1548] ss:$0 sm:$0xff]
  %s1551 = sor.u32 256, 16
  %1552 = vbcast.lane.b32.xlu0 %v1549, %s1551
  %v1553 = vpop.permute.xlu0 %1552
  %s1554 = scalar_lea.vmem %s1, 912
  %1555 = vst [vmem:[%s1554] sm:$0xff] %v1553
  %s1556 = scalar_lea.vmem %s0, 56
  %s1557 = scalar_lea.vmem %s1556, 4
  %v1558 = vld [vmem:[%s1557] ss:$0 sm:$0xff]
  %s1560 = sor.u32 256, 16
  %1561 = vbcast.lane.b32.xlu0 %v1558, %s1560
  %v1562 = vpop.permute.xlu0 %1561
  %s1563 = scalar_lea.vmem %s1, 1936
  %1564 = vst [vmem:[%s1563] sm:$0xff] %v1562
  %s1565 = scalar_lea.vmem %s0, 24
  %s1566 = scalar_lea.vmem %s1565, 5
  %v1567 = vld [vmem:[%s1566] ss:$0 sm:$0xff]
  %s1569 = sor.u32 256, 16
  %1570 = vbcast.lane.b32.xlu0 %v1567, %s1569
  %v1571 = vpop.permute.xlu0 %1570
  %s1572 = scalar_lea.vmem %s1, 944
  %1573 = vst [vmem:[%s1572] sm:$0xff] %v1571
  %s1574 = scalar_lea.vmem %s0, 56
  %s1575 = scalar_lea.vmem %s1574, 5
  %v1576 = vld [vmem:[%s1575] ss:$0 sm:$0xff]
  %s1578 = sor.u32 256, 16
  %1579 = vbcast.lane.b32.xlu0 %v1576, %s1578
  %v1580 = vpop.permute.xlu0 %1579
  %s1581 = scalar_lea.vmem %s1, 1968
  %1582 = vst [vmem:[%s1581] sm:$0xff] %v1580
  %s1583 = scalar_lea.vmem %s0, 24
  %s1584 = scalar_lea.vmem %s1583, 6
  %v1585 = vld [vmem:[%s1584] ss:$0 sm:$0xff]
  %s1587 = sor.u32 256, 16
  %1588 = vbcast.lane.b32.xlu0 %v1585, %s1587
  %v1589 = vpop.permute.xlu0 %1588
  %s1590 = scalar_lea.vmem %s1, 976
  %1591 = vst [vmem:[%s1590] sm:$0xff] %v1589
  %s1592 = scalar_lea.vmem %s0, 56
  %s1593 = scalar_lea.vmem %s1592, 6
  %v1594 = vld [vmem:[%s1593] ss:$0 sm:$0xff]
  %s1596 = sor.u32 256, 16
  %1597 = vbcast.lane.b32.xlu0 %v1594, %s1596
  %v1598 = vpop.permute.xlu0 %1597
  %s1599 = scalar_lea.vmem %s1, 2000
  %1600 = vst [vmem:[%s1599] sm:$0xff] %v1598
  %s1601 = scalar_lea.vmem %s0, 24
  %s1602 = scalar_lea.vmem %s1601, 7
  %v1603 = vld [vmem:[%s1602] ss:$0 sm:$0xff]
  %s1605 = sor.u32 256, 16
  %1606 = vbcast.lane.b32.xlu0 %v1603, %s1605
  %v1607 = vpop.permute.xlu0 %1606
  %s1608 = scalar_lea.vmem %s1, 1008
  %1609 = vst [vmem:[%s1608] sm:$0xff] %v1607
  %s1610 = scalar_lea.vmem %s0, 56
  %s1611 = scalar_lea.vmem %s1610, 7
  %v1612 = vld [vmem:[%s1611] ss:$0 sm:$0xff]
  %s1614 = sor.u32 256, 16
  %1615 = vbcast.lane.b32.xlu0 %v1612, %s1614
  %v1616 = vpop.permute.xlu0 %1615
  %s1617 = scalar_lea.vmem %s1, 2032
  %1618 = vst [vmem:[%s1617] sm:$0xff] %v1616
  %v1619 = vld [vmem:[%s0] ss:$0 sm:$0xff]
  %s1621 = sor.u32 256, 24
  %1622 = vbcast.lane.b32.xlu0 %v1619, %s1621
  %v1623 = vpop.permute.xlu0 %1622
  %s1624 = scalar_lea.vmem %s1, 24
  %1625 = vst [vmem:[%s1624] sm:$0xff] %v1623
  %s1626 = scalar_lea.vmem %s0, 32
  %v1627 = vld [vmem:[%s1626] ss:$0 sm:$0xff]
  %s1629 = sor.u32 256, 24
  %1630 = vbcast.lane.b32.xlu0 %v1627, %s1629
  %v1631 = vpop.permute.xlu0 %1630
  %s1632 = scalar_lea.vmem %s1, 1048
  %1633 = vst [vmem:[%s1632] sm:$0xff] %v1631
  %s1634 = scalar_lea.vmem %s0, 1
  %v1635 = vld [vmem:[%s1634] ss:$0 sm:$0xff]
  %s1637 = sor.u32 256, 24
  %1638 = vbcast.lane.b32.xlu0 %v1635, %s1637
  %v1639 = vpop.permute.xlu0 %1638
  %s1640 = scalar_lea.vmem %s1, 56
  %1641 = vst [vmem:[%s1640] sm:$0xff] %v1639
  %s1642 = scalar_lea.vmem %s0, 32
  %s1643 = scalar_lea.vmem %s1642, 1
  %v1644 = vld [vmem:[%s1643] ss:$0 sm:$0xff]
  %s1646 = sor.u32 256, 24
  %1647 = vbcast.lane.b32.xlu0 %v1644, %s1646
  %v1648 = vpop.permute.xlu0 %1647
  %s1649 = scalar_lea.vmem %s1, 1080
  %1650 = vst [vmem:[%s1649] sm:$0xff] %v1648
  %s1651 = scalar_lea.vmem %s0, 2
  %v1652 = vld [vmem:[%s1651] ss:$0 sm:$0xff]
  %s1654 = sor.u32 256, 24
  %1655 = vbcast.lane.b32.xlu0 %v1652, %s1654
  %v1656 = vpop.permute.xlu0 %1655
  %s1657 = scalar_lea.vmem %s1, 88
  %1658 = vst [vmem:[%s1657] sm:$0xff] %v1656
  %s1659 = scalar_lea.vmem %s0, 32
  %s1660 = scalar_lea.vmem %s1659, 2
  %v1661 = vld [vmem:[%s1660] ss:$0 sm:$0xff]
  %s1663 = sor.u32 256, 24
  %1664 = vbcast.lane.b32.xlu0 %v1661, %s1663
  %v1665 = vpop.permute.xlu0 %1664
  %s1666 = scalar_lea.vmem %s1, 1112
  %1667 = vst [vmem:[%s1666] sm:$0xff] %v1665
  %s1668 = scalar_lea.vmem %s0, 3
  %v1669 = vld [vmem:[%s1668] ss:$0 sm:$0xff]
  %s1671 = sor.u32 256, 24
  %1672 = vbcast.lane.b32.xlu0 %v1669, %s1671
  %v1673 = vpop.permute.xlu0 %1672
  %s1674 = scalar_lea.vmem %s1, 120
  %1675 = vst [vmem:[%s1674] sm:$0xff] %v1673
  %s1676 = scalar_lea.vmem %s0, 32
  %s1677 = scalar_lea.vmem %s1676, 3
  %v1678 = vld [vmem:[%s1677] ss:$0 sm:$0xff]
  %s1680 = sor.u32 256, 24
  %1681 = vbcast.lane.b32.xlu0 %v1678, %s1680
  %v1682 = vpop.permute.xlu0 %1681
  %s1683 = scalar_lea.vmem %s1, 1144
  %1684 = vst [vmem:[%s1683] sm:$0xff] %v1682
  %s1685 = scalar_lea.vmem %s0, 4
  %v1686 = vld [vmem:[%s1685] ss:$0 sm:$0xff]
  %s1688 = sor.u32 256, 24
  %1689 = vbcast.lane.b32.xlu0 %v1686, %s1688
  %v1690 = vpop.permute.xlu0 %1689
  %s1691 = scalar_lea.vmem %s1, 152
  %1692 = vst [vmem:[%s1691] sm:$0xff] %v1690
  %s1693 = scalar_lea.vmem %s0, 32
  %s1694 = scalar_lea.vmem %s1693, 4
  %v1695 = vld [vmem:[%s1694] ss:$0 sm:$0xff]
  %s1697 = sor.u32 256, 24
  %1698 = vbcast.lane.b32.xlu0 %v1695, %s1697
  %v1699 = vpop.permute.xlu0 %1698
  %s1700 = scalar_lea.vmem %s1, 1176
  %1701 = vst [vmem:[%s1700] sm:$0xff] %v1699
  %s1702 = scalar_lea.vmem %s0, 5
  %v1703 = vld [vmem:[%s1702] ss:$0 sm:$0xff]
  %s1705 = sor.u32 256, 24
  %1706 = vbcast.lane.b32.xlu0 %v1703, %s1705
  %v1707 = vpop.permute.xlu0 %1706
  %s1708 = scalar_lea.vmem %s1, 184
  %1709 = vst [vmem:[%s1708] sm:$0xff] %v1707
  %s1710 = scalar_lea.vmem %s0, 32
  %s1711 = scalar_lea.vmem %s1710, 5
  %v1712 = vld [vmem:[%s1711] ss:$0 sm:$0xff]
  %s1714 = sor.u32 256, 24
  %1715 = vbcast.lane.b32.xlu0 %v1712, %s1714
  %v1716 = vpop.permute.xlu0 %1715
  %s1717 = scalar_lea.vmem %s1, 1208
  %1718 = vst [vmem:[%s1717] sm:$0xff] %v1716
  %s1719 = scalar_lea.vmem %s0, 6
  %v1720 = vld [vmem:[%s1719] ss:$0 sm:$0xff]
  %s1722 = sor.u32 256, 24
  %1723 = vbcast.lane.b32.xlu0 %v1720, %s1722
  %v1724 = vpop.permute.xlu0 %1723
  %s1725 = scalar_lea.vmem %s1, 216
  %1726 = vst [vmem:[%s1725] sm:$0xff] %v1724
  %s1727 = scalar_lea.vmem %s0, 32
  %s1728 = scalar_lea.vmem %s1727, 6
  %v1729 = vld [vmem:[%s1728] ss:$0 sm:$0xff]
  %s1731 = sor.u32 256, 24
  %1732 = vbcast.lane.b32.xlu0 %v1729, %s1731
  %v1733 = vpop.permute.xlu0 %1732
  %s1734 = scalar_lea.vmem %s1, 1240
  %1735 = vst [vmem:[%s1734] sm:$0xff] %v1733
  %s1736 = scalar_lea.vmem %s0, 7
  %v1737 = vld [vmem:[%s1736] ss:$0 sm:$0xff]
  %s1739 = sor.u32 256, 24
  %1740 = vbcast.lane.b32.xlu0 %v1737, %s1739
  %v1741 = vpop.permute.xlu0 %1740
  %s1742 = scalar_lea.vmem %s1, 248
  %1743 = vst [vmem:[%s1742] sm:$0xff] %v1741
  %s1744 = scalar_lea.vmem %s0, 32
  %s1745 = scalar_lea.vmem %s1744, 7
  %v1746 = vld [vmem:[%s1745] ss:$0 sm:$0xff]
  %s1748 = sor.u32 256, 24
  %1749 = vbcast.lane.b32.xlu0 %v1746, %s1748
  %v1750 = vpop.permute.xlu0 %1749
  %s1751 = scalar_lea.vmem %s1, 1272
  %1752 = vst [vmem:[%s1751] sm:$0xff] %v1750
  %s1753 = scalar_lea.vmem %s0, 8
  %v1754 = vld [vmem:[%s1753] ss:$0 sm:$0xff]
  %s1756 = sor.u32 256, 24
  %1757 = vbcast.lane.b32.xlu0 %v1754, %s1756
  %v1758 = vpop.permute.xlu0 %1757
  %s1759 = scalar_lea.vmem %s1, 280
  %1760 = vst [vmem:[%s1759] sm:$0xff] %v1758
  %s1761 = scalar_lea.vmem %s0, 40
  %v1762 = vld [vmem:[%s1761] ss:$0 sm:$0xff]
  %s1764 = sor.u32 256, 24
  %1765 = vbcast.lane.b32.xlu0 %v1762, %s1764
  %v1766 = vpop.permute.xlu0 %1765
  %s1767 = scalar_lea.vmem %s1, 1304
  %1768 = vst [vmem:[%s1767] sm:$0xff] %v1766
  %s1769 = scalar_lea.vmem %s0, 8
  %s1770 = scalar_lea.vmem %s1769, 1
  %v1771 = vld [vmem:[%s1770] ss:$0 sm:$0xff]
  %s1773 = sor.u32 256, 24
  %1774 = vbcast.lane.b32.xlu0 %v1771, %s1773
  %v1775 = vpop.permute.xlu0 %1774
  %s1776 = scalar_lea.vmem %s1, 312
  %1777 = vst [vmem:[%s1776] sm:$0xff] %v1775
  %s1778 = scalar_lea.vmem %s0, 40
  %s1779 = scalar_lea.vmem %s1778, 1
  %v1780 = vld [vmem:[%s1779] ss:$0 sm:$0xff]
  %s1782 = sor.u32 256, 24
  %1783 = vbcast.lane.b32.xlu0 %v1780, %s1782
  %v1784 = vpop.permute.xlu0 %1783
  %s1785 = scalar_lea.vmem %s1, 1336
  %1786 = vst [vmem:[%s1785] sm:$0xff] %v1784
  %s1787 = scalar_lea.vmem %s0, 8
  %s1788 = scalar_lea.vmem %s1787, 2
  %v1789 = vld [vmem:[%s1788] ss:$0 sm:$0xff]
  %s1791 = sor.u32 256, 24
  %1792 = vbcast.lane.b32.xlu0 %v1789, %s1791
  %v1793 = vpop.permute.xlu0 %1792
  %s1794 = scalar_lea.vmem %s1, 344
  %1795 = vst [vmem:[%s1794] sm:$0xff] %v1793
  %s1796 = scalar_lea.vmem %s0, 40
  %s1797 = scalar_lea.vmem %s1796, 2
  %v1798 = vld [vmem:[%s1797] ss:$0 sm:$0xff]
  %s1800 = sor.u32 256, 24
  %1801 = vbcast.lane.b32.xlu0 %v1798, %s1800
  %v1802 = vpop.permute.xlu0 %1801
  %s1803 = scalar_lea.vmem %s1, 1368
  %1804 = vst [vmem:[%s1803] sm:$0xff] %v1802
  %s1805 = scalar_lea.vmem %s0, 8
  %s1806 = scalar_lea.vmem %s1805, 3
  %v1807 = vld [vmem:[%s1806] ss:$0 sm:$0xff]
  %s1809 = sor.u32 256, 24
  %1810 = vbcast.lane.b32.xlu0 %v1807, %s1809
  %v1811 = vpop.permute.xlu0 %1810
  %s1812 = scalar_lea.vmem %s1, 376
  %1813 = vst [vmem:[%s1812] sm:$0xff] %v1811
  %s1814 = scalar_lea.vmem %s0, 40
  %s1815 = scalar_lea.vmem %s1814, 3
  %v1816 = vld [vmem:[%s1815] ss:$0 sm:$0xff]
  %s1818 = sor.u32 256, 24
  %1819 = vbcast.lane.b32.xlu0 %v1816, %s1818
  %v1820 = vpop.permute.xlu0 %1819
  %s1821 = scalar_lea.vmem %s1, 1400
  %1822 = vst [vmem:[%s1821] sm:$0xff] %v1820
  %s1823 = scalar_lea.vmem %s0, 8
  %s1824 = scalar_lea.vmem %s1823, 4
  %v1825 = vld [vmem:[%s1824] ss:$0 sm:$0xff]
  %s1827 = sor.u32 256, 24
  %1828 = vbcast.lane.b32.xlu0 %v1825, %s1827
  %v1829 = vpop.permute.xlu0 %1828
  %s1830 = scalar_lea.vmem %s1, 408
  %1831 = vst [vmem:[%s1830] sm:$0xff] %v1829
  %s1832 = scalar_lea.vmem %s0, 40
  %s1833 = scalar_lea.vmem %s1832, 4
  %v1834 = vld [vmem:[%s1833] ss:$0 sm:$0xff]
  %s1836 = sor.u32 256, 24
  %1837 = vbcast.lane.b32.xlu0 %v1834, %s1836
  %v1838 = vpop.permute.xlu0 %1837
  %s1839 = scalar_lea.vmem %s1, 1432
  %1840 = vst [vmem:[%s1839] sm:$0xff] %v1838
  %s1841 = scalar_lea.vmem %s0, 8
  %s1842 = scalar_lea.vmem %s1841, 5
  %v1843 = vld [vmem:[%s1842] ss:$0 sm:$0xff]
  %s1845 = sor.u32 256, 24
  %1846 = vbcast.lane.b32.xlu0 %v1843, %s1845
  %v1847 = vpop.permute.xlu0 %1846
  %s1848 = scalar_lea.vmem %s1, 440
  %1849 = vst [vmem:[%s1848] sm:$0xff] %v1847
  %s1850 = scalar_lea.vmem %s0, 40
  %s1851 = scalar_lea.vmem %s1850, 5
  %v1852 = vld [vmem:[%s1851] ss:$0 sm:$0xff]
  %s1854 = sor.u32 256, 24
  %1855 = vbcast.lane.b32.xlu0 %v1852, %s1854
  %v1856 = vpop.permute.xlu0 %1855
  %s1857 = scalar_lea.vmem %s1, 1464
  %1858 = vst [vmem:[%s1857] sm:$0xff] %v1856
  %s1859 = scalar_lea.vmem %s0, 8
  %s1860 = scalar_lea.vmem %s1859, 6
  %v1861 = vld [vmem:[%s1860] ss:$0 sm:$0xff]
  %s1863 = sor.u32 256, 24
  %1864 = vbcast.lane.b32.xlu0 %v1861, %s1863
  %v1865 = vpop.permute.xlu0 %1864
  %s1866 = scalar_lea.vmem %s1, 472
  %1867 = vst [vmem:[%s1866] sm:$0xff] %v1865
  %s1868 = scalar_lea.vmem %s0, 40
  %s1869 = scalar_lea.vmem %s1868, 6
  %v1870 = vld [vmem:[%s1869] ss:$0 sm:$0xff]
  %s1872 = sor.u32 256, 24
  %1873 = vbcast.lane.b32.xlu0 %v1870, %s1872
  %v1874 = vpop.permute.xlu0 %1873
  %s1875 = scalar_lea.vmem %s1, 1496
  %1876 = vst [vmem:[%s1875] sm:$0xff] %v1874
  %s1877 = scalar_lea.vmem %s0, 8
  %s1878 = scalar_lea.vmem %s1877, 7
  %v1879 = vld [vmem:[%s1878] ss:$0 sm:$0xff]
  %s1881 = sor.u32 256, 24
  %1882 = vbcast.lane.b32.xlu0 %v1879, %s1881
  %v1883 = vpop.permute.xlu0 %1882
  %s1884 = scalar_lea.vmem %s1, 504
  %1885 = vst [vmem:[%s1884] sm:$0xff] %v1883
  %s1886 = scalar_lea.vmem %s0, 40
  %s1887 = scalar_lea.vmem %s1886, 7
  %v1888 = vld [vmem:[%s1887] ss:$0 sm:$0xff]
  %s1890 = sor.u32 256, 24
  %1891 = vbcast.lane.b32.xlu0 %v1888, %s1890
  %v1892 = vpop.permute.xlu0 %1891
  %s1893 = scalar_lea.vmem %s1, 1528
  %1894 = vst [vmem:[%s1893] sm:$0xff] %v1892
  %s1895 = scalar_lea.vmem %s0, 16
  %v1896 = vld [vmem:[%s1895] ss:$0 sm:$0xff]
  %s1898 = sor.u32 256, 24
  %1899 = vbcast.lane.b32.xlu0 %v1896, %s1898
  %v1900 = vpop.permute.xlu0 %1899
  %s1901 = scalar_lea.vmem %s1, 536
  %1902 = vst [vmem:[%s1901] sm:$0xff] %v1900
  %s1903 = scalar_lea.vmem %s0, 48
  %v1904 = vld [vmem:[%s1903] ss:$0 sm:$0xff]
  %s1906 = sor.u32 256, 24
  %1907 = vbcast.lane.b32.xlu0 %v1904, %s1906
  %v1908 = vpop.permute.xlu0 %1907
  %s1909 = scalar_lea.vmem %s1, 1560
  %1910 = vst [vmem:[%s1909] sm:$0xff] %v1908
  %s1911 = scalar_lea.vmem %s0, 16
  %s1912 = scalar_lea.vmem %s1911, 1
  %v1913 = vld [vmem:[%s1912] ss:$0 sm:$0xff]
  %s1915 = sor.u32 256, 24
  %1916 = vbcast.lane.b32.xlu0 %v1913, %s1915
  %v1917 = vpop.permute.xlu0 %1916
  %s1918 = scalar_lea.vmem %s1, 568
  %1919 = vst [vmem:[%s1918] sm:$0xff] %v1917
  %s1920 = scalar_lea.vmem %s0, 48
  %s1921 = scalar_lea.vmem %s1920, 1
  %v1922 = vld [vmem:[%s1921] ss:$0 sm:$0xff]
  %s1924 = sor.u32 256, 24
  %1925 = vbcast.lane.b32.xlu0 %v1922, %s1924
  %v1926 = vpop.permute.xlu0 %1925
  %s1927 = scalar_lea.vmem %s1, 1592
  %1928 = vst [vmem:[%s1927] sm:$0xff] %v1926
  %s1929 = scalar_lea.vmem %s0, 16
  %s1930 = scalar_lea.vmem %s1929, 2
  %v1931 = vld [vmem:[%s1930] ss:$0 sm:$0xff]
  %s1933 = sor.u32 256, 24
  %1934 = vbcast.lane.b32.xlu0 %v1931, %s1933
  %v1935 = vpop.permute.xlu0 %1934
  %s1936 = scalar_lea.vmem %s1, 600
  %1937 = vst [vmem:[%s1936] sm:$0xff] %v1935
  %s1938 = scalar_lea.vmem %s0, 48
  %s1939 = scalar_lea.vmem %s1938, 2
  %v1940 = vld [vmem:[%s1939] ss:$0 sm:$0xff]
  %s1942 = sor.u32 256, 24
  %1943 = vbcast.lane.b32.xlu0 %v1940, %s1942
  %v1944 = vpop.permute.xlu0 %1943
  %s1945 = scalar_lea.vmem %s1, 1624
  %1946 = vst [vmem:[%s1945] sm:$0xff] %v1944
  %s1947 = scalar_lea.vmem %s0, 16
  %s1948 = scalar_lea.vmem %s1947, 3
  %v1949 = vld [vmem:[%s1948] ss:$0 sm:$0xff]
  %s1951 = sor.u32 256, 24
  %1952 = vbcast.lane.b32.xlu0 %v1949, %s1951
  %v1953 = vpop.permute.xlu0 %1952
  %s1954 = scalar_lea.vmem %s1, 632
  %1955 = vst [vmem:[%s1954] sm:$0xff] %v1953
  %s1956 = scalar_lea.vmem %s0, 48
  %s1957 = scalar_lea.vmem %s1956, 3
  %v1958 = vld [vmem:[%s1957] ss:$0 sm:$0xff]
  %s1960 = sor.u32 256, 24
  %1961 = vbcast.lane.b32.xlu0 %v1958, %s1960
  %v1962 = vpop.permute.xlu0 %1961
  %s1963 = scalar_lea.vmem %s1, 1656
  %1964 = vst [vmem:[%s1963] sm:$0xff] %v1962
  %s1965 = scalar_lea.vmem %s0, 16
  %s1966 = scalar_lea.vmem %s1965, 4
  %v1967 = vld [vmem:[%s1966] ss:$0 sm:$0xff]
  %s1969 = sor.u32 256, 24
  %1970 = vbcast.lane.b32.xlu0 %v1967, %s1969
  %v1971 = vpop.permute.xlu0 %1970
  %s1972 = scalar_lea.vmem %s1, 664
  %1973 = vst [vmem:[%s1972] sm:$0xff] %v1971
  %s1974 = scalar_lea.vmem %s0, 48
  %s1975 = scalar_lea.vmem %s1974, 4
  %v1976 = vld [vmem:[%s1975] ss:$0 sm:$0xff]
  %s1978 = sor.u32 256, 24
  %1979 = vbcast.lane.b32.xlu0 %v1976, %s1978
  %v1980 = vpop.permute.xlu0 %1979
  %s1981 = scalar_lea.vmem %s1, 1688
  %1982 = vst [vmem:[%s1981] sm:$0xff] %v1980
  %s1983 = scalar_lea.vmem %s0, 16
  %s1984 = scalar_lea.vmem %s1983, 5
  %v1985 = vld [vmem:[%s1984] ss:$0 sm:$0xff]
  %s1987 = sor.u32 256, 24
  %1988 = vbcast.lane.b32.xlu0 %v1985, %s1987
  %v1989 = vpop.permute.xlu0 %1988
  %s1990 = scalar_lea.vmem %s1, 696
  %1991 = vst [vmem:[%s1990] sm:$0xff] %v1989
  %s1992 = scalar_lea.vmem %s0, 48
  %s1993 = scalar_lea.vmem %s1992, 5
  %v1994 = vld [vmem:[%s1993] ss:$0 sm:$0xff]
  %s1996 = sor.u32 256, 24
  %1997 = vbcast.lane.b32.xlu0 %v1994, %s1996
  %v1998 = vpop.permute.xlu0 %1997
  %s1999 = scalar_lea.vmem %s1, 1720
  %2000 = vst [vmem:[%s1999] sm:$0xff] %v1998
  %s2001 = scalar_lea.vmem %s0, 16
  %s2002 = scalar_lea.vmem %s2001, 6
  %v2003 = vld [vmem:[%s2002] ss:$0 sm:$0xff]
  %s2005 = sor.u32 256, 24
  %2006 = vbcast.lane.b32.xlu0 %v2003, %s2005
  %v2007 = vpop.permute.xlu0 %2006
  %s2008 = scalar_lea.vmem %s1, 728
  %2009 = vst [vmem:[%s2008] sm:$0xff] %v2007
  %s2010 = scalar_lea.vmem %s0, 48
  %s2011 = scalar_lea.vmem %s2010, 6
  %v2012 = vld [vmem:[%s2011] ss:$0 sm:$0xff]
  %s2014 = sor.u32 256, 24
  %2015 = vbcast.lane.b32.xlu0 %v2012, %s2014
  %v2016 = vpop.permute.xlu0 %2015
  %s2017 = scalar_lea.vmem %s1, 1752
  %2018 = vst [vmem:[%s2017] sm:$0xff] %v2016
  %s2019 = scalar_lea.vmem %s0, 16
  %s2020 = scalar_lea.vmem %s2019, 7
  %v2021 = vld [vmem:[%s2020] ss:$0 sm:$0xff]
  %s2023 = sor.u32 256, 24
  %2024 = vbcast.lane.b32.xlu0 %v2021, %s2023
  %v2025 = vpop.permute.xlu0 %2024
  %s2026 = scalar_lea.vmem %s1, 760
  %2027 = vst [vmem:[%s2026] sm:$0xff] %v2025
  %s2028 = scalar_lea.vmem %s0, 48
  %s2029 = scalar_lea.vmem %s2028, 7
  %v2030 = vld [vmem:[%s2029] ss:$0 sm:$0xff]
  %s2032 = sor.u32 256, 24
  %2033 = vbcast.lane.b32.xlu0 %v2030, %s2032
  %v2034 = vpop.permute.xlu0 %2033
  %s2035 = scalar_lea.vmem %s1, 1784
  %2036 = vst [vmem:[%s2035] sm:$0xff] %v2034
  %s2037 = scalar_lea.vmem %s0, 24
  %v2038 = vld [vmem:[%s2037] ss:$0 sm:$0xff]
  %s2040 = sor.u32 256, 24
  %2041 = vbcast.lane.b32.xlu0 %v2038, %s2040
  %v2042 = vpop.permute.xlu0 %2041
  %s2043 = scalar_lea.vmem %s1, 792
  %2044 = vst [vmem:[%s2043] sm:$0xff] %v2042
  %s2045 = scalar_lea.vmem %s0, 56
  %v2046 = vld [vmem:[%s2045] ss:$0 sm:$0xff]
  %s2048 = sor.u32 256, 24
  %2049 = vbcast.lane.b32.xlu0 %v2046, %s2048
  %v2050 = vpop.permute.xlu0 %2049
  %s2051 = scalar_lea.vmem %s1, 1816
  %2052 = vst [vmem:[%s2051] sm:$0xff] %v2050
  %s2053 = scalar_lea.vmem %s0, 24
  %s2054 = scalar_lea.vmem %s2053, 1
  %v2055 = vld [vmem:[%s2054] ss:$0 sm:$0xff]
  %s2057 = sor.u32 256, 24
  %2058 = vbcast.lane.b32.xlu0 %v2055, %s2057
  %v2059 = vpop.permute.xlu0 %2058
  %s2060 = scalar_lea.vmem %s1, 824
  %2061 = vst [vmem:[%s2060] sm:$0xff] %v2059
  %s2062 = scalar_lea.vmem %s0, 56
  %s2063 = scalar_lea.vmem %s2062, 1
  %v2064 = vld [vmem:[%s2063] ss:$0 sm:$0xff]
  %s2066 = sor.u32 256, 24
  %2067 = vbcast.lane.b32.xlu0 %v2064, %s2066
  %v2068 = vpop.permute.xlu0 %2067
  %s2069 = scalar_lea.vmem %s1, 1848
  %2070 = vst [vmem:[%s2069] sm:$0xff] %v2068
  %s2071 = scalar_lea.vmem %s0, 24
  %s2072 = scalar_lea.vmem %s2071, 2
  %v2073 = vld [vmem:[%s2072] ss:$0 sm:$0xff]
  %s2075 = sor.u32 256, 24
  %2076 = vbcast.lane.b32.xlu0 %v2073, %s2075
  %v2077 = vpop.permute.xlu0 %2076
  %s2078 = scalar_lea.vmem %s1, 856
  %2079 = vst [vmem:[%s2078] sm:$0xff] %v2077
  %s2080 = scalar_lea.vmem %s0, 56
  %s2081 = scalar_lea.vmem %s2080, 2
  %v2082 = vld [vmem:[%s2081] ss:$0 sm:$0xff]
  %s2084 = sor.u32 256, 24
  %2085 = vbcast.lane.b32.xlu0 %v2082, %s2084
  %v2086 = vpop.permute.xlu0 %2085
  %s2087 = scalar_lea.vmem %s1, 1880
  %2088 = vst [vmem:[%s2087] sm:$0xff] %v2086
  %s2089 = scalar_lea.vmem %s0, 24
  %s2090 = scalar_lea.vmem %s2089, 3
  %v2091 = vld [vmem:[%s2090] ss:$0 sm:$0xff]
  %s2093 = sor.u32 256, 24
  %2094 = vbcast.lane.b32.xlu0 %v2091, %s2093
  %v2095 = vpop.permute.xlu0 %2094
  %s2096 = scalar_lea.vmem %s1, 888
  %2097 = vst [vmem:[%s2096] sm:$0xff] %v2095
  %s2098 = scalar_lea.vmem %s0, 56
  %s2099 = scalar_lea.vmem %s2098, 3
  %v2100 = vld [vmem:[%s2099] ss:$0 sm:$0xff]
  %s2102 = sor.u32 256, 24
  %2103 = vbcast.lane.b32.xlu0 %v2100, %s2102
  %v2104 = vpop.permute.xlu0 %2103
  %s2105 = scalar_lea.vmem %s1, 1912
  %2106 = vst [vmem:[%s2105] sm:$0xff] %v2104
  %s2107 = scalar_lea.vmem %s0, 24
  %s2108 = scalar_lea.vmem %s2107, 4
  %v2109 = vld [vmem:[%s2108] ss:$0 sm:$0xff]
  %s2111 = sor.u32 256, 24
  %2112 = vbcast.lane.b32.xlu0 %v2109, %s2111
  %v2113 = vpop.permute.xlu0 %2112
  %s2114 = scalar_lea.vmem %s1, 920
  %2115 = vst [vmem:[%s2114] sm:$0xff] %v2113
  %s2116 = scalar_lea.vmem %s0, 56
  %s2117 = scalar_lea.vmem %s2116, 4
  %v2118 = vld [vmem:[%s2117] ss:$0 sm:$0xff]
  %s2120 = sor.u32 256, 24
  %2121 = vbcast.lane.b32.xlu0 %v2118, %s2120
  %v2122 = vpop.permute.xlu0 %2121
  %s2123 = scalar_lea.vmem %s1, 1944
  %2124 = vst [vmem:[%s2123] sm:$0xff] %v2122
  %s2125 = scalar_lea.vmem %s0, 24
  %s2126 = scalar_lea.vmem %s2125, 5
  %v2127 = vld [vmem:[%s2126] ss:$0 sm:$0xff]
  %s2129 = sor.u32 256, 24
  %2130 = vbcast.lane.b32.xlu0 %v2127, %s2129
  %v2131 = vpop.permute.xlu0 %2130
  %s2132 = scalar_lea.vmem %s1, 952
  %2133 = vst [vmem:[%s2132] sm:$0xff] %v2131
  %s2134 = scalar_lea.vmem %s0, 56
  %s2135 = scalar_lea.vmem %s2134, 5
  %v2136 = vld [vmem:[%s2135] ss:$0 sm:$0xff]
  %s2138 = sor.u32 256, 24
  %2139 = vbcast.lane.b32.xlu0 %v2136, %s2138
  %v2140 = vpop.permute.xlu0 %2139
  %s2141 = scalar_lea.vmem %s1, 1976
  %2142 = vst [vmem:[%s2141] sm:$0xff] %v2140
  %s2143 = scalar_lea.vmem %s0, 24
  %s2144 = scalar_lea.vmem %s2143, 6
  %v2145 = vld [vmem:[%s2144] ss:$0 sm:$0xff]
  %s2147 = sor.u32 256, 24
  %2148 = vbcast.lane.b32.xlu0 %v2145, %s2147
  %v2149 = vpop.permute.xlu0 %2148
  %s2150 = scalar_lea.vmem %s1, 984
  %2151 = vst [vmem:[%s2150] sm:$0xff] %v2149
  %s2152 = scalar_lea.vmem %s0, 56
  %s2153 = scalar_lea.vmem %s2152, 6
  %v2154 = vld [vmem:[%s2153] ss:$0 sm:$0xff]
  %s2156 = sor.u32 256, 24
  %2157 = vbcast.lane.b32.xlu0 %v2154, %s2156
  %v2158 = vpop.permute.xlu0 %2157
  %s2159 = scalar_lea.vmem %s1, 2008
  %2160 = vst [vmem:[%s2159] sm:$0xff] %v2158
  %s2161 = scalar_lea.vmem %s0, 24
  %s2162 = scalar_lea.vmem %s2161, 7
  %v2163 = vld [vmem:[%s2162] ss:$0 sm:$0xff]
  %s2165 = sor.u32 256, 24
  %2166 = vbcast.lane.b32.xlu0 %v2163, %s2165
  %v2167 = vpop.permute.xlu0 %2166
  %s2168 = scalar_lea.vmem %s1, 1016
  %2169 = vst [vmem:[%s2168] sm:$0xff] %v2167
  %s2170 = scalar_lea.vmem %s0, 56
  %s2171 = scalar_lea.vmem %s2170, 7
  %v2172 = vld [vmem:[%s2171] ss:$0 sm:$0xff]
  %s2174 = sor.u32 256, 24
  %2175 = vbcast.lane.b32.xlu0 %v2172, %s2174
  %v2176 = vpop.permute.xlu0 %2175
  %s2177 = scalar_lea.vmem %s1, 2040
  %2178 = vst [vmem:[%s2177] sm:$0xff] %v2176

// kernel: _lambda_.6
$region0: #{_lambda_.6}
  #allocation0 [shape = 'u32[]', space=smem, size = 0x4, offset = 0x4, fixed_abs, tag = 'smem constant byte address 0x4 - core index']
  #allocation1 [shape = 'u32[144,128]{1,0:T(1,128)}', space=vmem, size = 0x12000, scoped, tag = 'internal scratch']
  %s0 = inlined_call_operand.vmem [shape: f32[32,128], index: 0, kind: input, shape index: {}]
  %s1 = inlined_call_operand.vmem [shape: f32[32,128], index: 1, kind: input, shape index: {}]
  %s2 = inlined_call_operand.vmem [shape: f32[32,128], index: 2, kind: input, shape index: {}]
  %s3 = inlined_call_operand.vmem [shape: f32[32,128], index: 3, kind: output, shape index: {}]
  %s4 = sld [smem:[#allocation0]]
  $region22: #{_lambda_.6} parent=0
    _
  %s6 = ssub.s32 1, %s4
  %s7 = scalar_select 0, %s6, %s4
  // Predicated region
  $region2: #{_lambda_.6} parent=0 // pred_check
    _
  $region3: #{_lambda_.6} parent=0 // pred_check_branch
    %9 = sbr.rel (0) target = $region5
  $region4: #{_lambda_.6} parent=0 // pred_region
    _
  $region5: #{_lambda_.6} parent=0 // pred_fallthru
    _
  // Predicated region
  $region6: #{_lambda_.6} parent=0 // pred_check
    _
  $region7: #{_lambda_.6} parent=0 // pred_check_branch
    %11 = sbr.rel (0) target = $region9
  $region8: #{_lambda_.6} parent=0 // pred_region
    _
  $region9: #{_lambda_.6} parent=0 // pred_fallthru
    _
  // Predicated region
  $region10: #{_lambda_.6} parent=0 // pred_check
    _
  $region11: #{_lambda_.6} parent=0 // pred_check_branch
    %13 = sbr.rel (0) target = $region13
  $region12: #{_lambda_.6} parent=0 // pred_region
    _
  $region13: #{_lambda_.6} parent=0 // pred_fallthru
    _
  %v14 = vld [vmem:[%s0] sm:$0xff]
  %v15 = vld [vmem:[%s0 + $0x8] sm:$0xff]
  %v16 = vld [vmem:[%s0 + $0x10] sm:$0xff]
  %v17 = vld [vmem:[%s0 + $0x18] sm:$0xff]
  %v18 = vld [vmem:[%s1] sm:$0xff]
  %v19 = vld [vmem:[%s1 + $0x8] sm:$0xff]
  %v20 = vld [vmem:[%s1 + $0x10] sm:$0xff]
  %v21 = vld [vmem:[%s1 + $0x18] sm:$0xff]
  %v22 = vsub.f32 %v14, %v18
  %v23 = vsub.f32 %v15, %v19
  %v24 = vsub.f32 %v16, %v20
  %v25 = vsub.f32 %v17, %v21
  %v26 = vmul.f32 %v22, 4.0
  %v27 = vmul.f32 %v23, 4.0
  %v28 = vmul.f32 %v24, 4.0
  %v29 = vmul.f32 %v25, 4.0
  %v30 = vmax.f32 %v26, -1.0
  %v31 = vmax.f32 %v27, -1.0
  %v32 = vmax.f32 %v28, -1.0
  %v33 = vmax.f32 %v29, -1.0
  %v34 = vmin.f32 %v30, 1.0
  %v35 = vmin.f32 %v31, 1.0
  %v36 = vmin.f32 %v32, 1.0
  %v37 = vmin.f32 %v33, 1.0
  %v38 = vadd.f32 %v34, 1.0
  %v39 = vadd.f32 %v35, 1.0
  %v40 = vadd.f32 %v36, 1.0
  %v41 = vadd.f32 %v37, 1.0
  %v42 = vld [vmem:[%s2] sm:$0xff]
  %v43 = vld [vmem:[%s2 + $0x8] sm:$0xff]
  %v44 = vld [vmem:[%s2 + $0x10] sm:$0xff]
  %v45 = vld [vmem:[%s2 + $0x18] sm:$0xff]
  %v46 = vmul.f32 %v38, %v42
  %v47 = vmul.f32 %v39, %v43
  %v48 = vmul.f32 %v40, %v44
  %v49 = vmul.f32 %v41, %v45
  %v50 = vsub.f32 %v46, 1.0
  %v51 = vsub.f32 %v47, 1.0
  %v52 = vsub.f32 %v48, 1.0
  %v53 = vsub.f32 %v49, 1.0
  %54 = vst [vmem:[%s3] sm:$0xff] %v50
  %55 = vst [vmem:[%s3 + $0x8] sm:$0xff] %v51
  %56 = vst [vmem:[%s3 + $0x10] sm:$0xff] %v52
  %57 = vst [vmem:[%s3 + $0x18] sm:$0xff] %v53
  // Predicated region
  $region14: #{_lambda_.6} parent=0 // pred_check
    _
  $region15: #{_lambda_.6} parent=0 // pred_check_branch
    %59 = sbr.rel (0) target = $region17
  $region16: #{_lambda_.6} parent=0 // pred_region
    _
  $region17: #{_lambda_.6} parent=0 // pred_fallthru
    _
  // Predicated region
  $region18: #{_lambda_.6} parent=0 // pred_check
    _
  $region19: #{_lambda_.6} parent=0 // pred_check_branch
    %61 = sbr.rel (0) target = $region21
  $region20: #{_lambda_.6} parent=0 // pred_region
    _
  $region21: #{_lambda_.6} parent=0 // pred_fallthru
    _

// kernel: _lambda_.7
$region0: #{_lambda_.7}
  #allocation0 [shape = 'u32[]', space=smem, size = 0x4, offset = 0x4, fixed_abs, tag = 'smem constant byte address 0x4 - core index']
  #allocation1 [shape = 'u32[144,128]{1,0:T(1,128)}', space=vmem, size = 0x12000, scoped, tag = 'internal scratch']
  #allocation2 [shape = 'f32[256,128]{1,0:T(8,128)}', space=vmem, size = 0x20000, scoped, tag = 'scratch operand']
  %s0 = inlined_call_operand.vmem [shape: bf16[512,128], index: 0, kind: input, shape index: {}]
  %s1 = inlined_call_operand.vmem [shape: bf16[128,128], index: 1, kind: input, shape index: {}]
  %s2 = inlined_call_operand.vmem [shape: f32[1,128], index: 2, kind: input, shape index: {}]
  %s3 = inlined_call_operand.vmem [shape: f32[512,128], index: 3, kind: output, shape index: {}]
  %s4 = sld [smem:[#allocation0]]
  $region53: #{_lambda_.7} parent=0
    _
  %s6 = ssub.s32 1, %s4
  %s7 = scalar_select 0, %s6, %s4
  loop: start=0, step=1, limit=4
  $region2: #{_lambda_.7} parent=0 // loop_pre_header
    _
  $region3: #{_lambda_.7} parent=0 // loop_header
    %s9 = sphi 0, %s13
    %p10 = scmp.ge.s32.totalorder %s9, 4
    %s16 = sphi 0, %s35
    %s17 = sphi 0, %s31
    %s18 = sphi 0, %s27
    %s19 = sphi 0, %s16
    %s20 = sphi 0, %s17
    %s21 = sphi 0, %s18
    %s22 = sphi 0, %s19
    %s23 = sphi 0, %s20
    %s24 = sphi 0, %s21
    %s40 = sphi 0, %s42
    %s43 = sphi 0, %s40
    %s44 = sphi 0, %s43
    %s60 = sphi 0, %s44
    %s68 = sphi 0, %s70
    %s71 = sphi 0, %s68
    %s72 = sphi 0, %s71
    %s88 = sphi 0, %s72
    %s94 = sphi 0, %s96
    %s97 = sphi 0, %s94
    %s98 = sphi 0, %s97
    %s114 = sphi 0, %s98
    %s122 = sphi 0, %s124
    %s125 = sphi 0, %s122
    %s126 = sphi 0, %s125
    %s142 = sphi 0, %s126
  $region4: #{_lambda_.7} parent=0 // loop_header_branch
    %12 = sbr.rel (%p10) target = $region8
  $region5: #{_lambda_.7} parent=0 // loop_body
    %s14 = ssub.s32 %s9, 1
    %s15 = ssub.s32 %s9, 2
    %s25 = sadd.s32 1, %s18
    %p26 = scmp.ge.s32.totalorder %s25, 1
    %s27 = scalar_select %p26, 0, %s25
    %s28 = sadd.s32 1, %s17
    %s29 = scalar_select %p26, %s28, %s17
    %p30 = scmp.ge.s32.totalorder %s29, 1
    %s31 = scalar_select %p30, 0, %s29
    %s32 = sadd.s32 1, %s16
    %s33 = scalar_select %p30, %s32, %s16
    %p34 = scmp.ge.s32.totalorder %s33, 2
    %s35 = scalar_select %p34, 0, %s33
    %s36 = ssub.s32 %s16, %s35
    %s37 = ssub.s32 %s18, %s27
    %s38 = sor.u32 %s36, %s37
    %p39 = scmp.eq.s32.totalorder %s38, 0
    %s41 = sadd.s32 %s40, 1
    %s42 = scalar_select %p39, %s40, %s41
    %p45 = pneg %p39
    %p46 = scmp.eq.s32.totalorder %s9, 1
    %p47 = por %p45, %p46
    %p48 = scmp.ne.s32.totalorder %s40, %s43
    %p49 = scmp.eq.s32.totalorder %s9, 0
    %p50 = por %p48, %p49
    %p51 = scmp.ne.s32.totalorder %s40, %s43
    %p52 = scmp.eq.s32.totalorder %s14, 1
    %p53 = por %p51, %p52
    %p54 = scmp.ne.s32.totalorder %s43, %s44
    %p55 = scmp.eq.s32.totalorder %s14, 0
    %p56 = por %p54, %p55
    %p57 = scmp.ne.s32.totalorder %s43, %s44
    %p58 = scmp.eq.s32.totalorder %s15, 1
    %p59 = por %p57, %p58
    %p61 = scmp.ne.s32.totalorder %s44, %s60
    %p62 = scmp.eq.s32.totalorder %s15, 0
    %p63 = por %p61, %p62
    %s64 = ssub.s32 %s18, %s27
    %s65 = ssub.s32 %s17, %s31
    %s66 = sor.u32 %s64, %s65
    %p67 = scmp.eq.s32.totalorder %s66, 0
    %s69 = sadd.s32 %s68, 1
    %s70 = scalar_select %p67, %s68, %s69
    %p73 = pneg %p67
    %p74 = scmp.eq.s32.totalorder %s9, 1
    %p75 = por %p73, %p74
    %p76 = scmp.ne.s32.totalorder %s68, %s71
    %p77 = scmp.eq.s32.totalorder %s9, 0
    %p78 = por %p76, %p77
    %p79 = scmp.ne.s32.totalorder %s68, %s71
    %p80 = scmp.eq.s32.totalorder %s14, 1
    %p81 = por %p79, %p80
    %p82 = scmp.ne.s32.totalorder %s71, %s72
    %p83 = scmp.eq.s32.totalorder %s14, 0
    %p84 = por %p82, %p83
    %p85 = scmp.ne.s32.totalorder %s71, %s72
    %p86 = scmp.eq.s32.totalorder %s15, 1
    %p87 = por %p85, %p86
    %p89 = scmp.ne.s32.totalorder %s72, %s88
    %p90 = scmp.eq.s32.totalorder %s15, 0
    %p91 = por %p89, %p90
    %s92 = ssub.s32 %s17, %s31
    %p93 = scmp.eq.s32.totalorder %s92, 0
    %s95 = sadd.s32 %s94, 1
    %s96 = scalar_select %p93, %s94, %s95
    %p99 = pneg %p93
    %p100 = scmp.eq.s32.totalorder %s9, 1
    %p101 = por %p99, %p100
    %p102 = scmp.ne.s32.totalorder %s94, %s97
    %p103 = scmp.eq.s32.totalorder %s9, 0
    %p104 = por %p102, %p103
    %p105 = scmp.ne.s32.totalorder %s94, %s97
    %p106 = scmp.eq.s32.totalorder %s14, 1
    %p107 = por %p105, %p106
    %p108 = scmp.ne.s32.totalorder %s97, %s98
    %p109 = scmp.eq.s32.totalorder %s14, 0
    %p110 = por %p108, %p109
    %p111 = scmp.ne.s32.totalorder %s97, %s98
    %p112 = scmp.eq.s32.totalorder %s15, 1
    %p113 = por %p111, %p112
    %p115 = scmp.ne.s32.totalorder %s98, %s114
    %p116 = scmp.eq.s32.totalorder %s15, 0
    %p117 = por %p115, %p116
    %s118 = ssub.s32 %s16, %s35
    %s119 = ssub.s32 %s17, %s31
    %s120 = sor.u32 %s118, %s119
    %p121 = scmp.eq.s32.totalorder %s120, 0
    %s123 = sadd.s32 %s122, 1
    %s124 = scalar_select %p121, %s122, %s123
    %p127 = pneg %p121
    %p128 = scmp.eq.s32.totalorder %s9, 1
    %p129 = por %p127, %p128
    %p130 = scmp.ne.s32.totalorder %s122, %s125
    %p131 = scmp.eq.s32.totalorder %s9, 0
    %p132 = por %p130, %p131
    %p133 = scmp.ne.s32.totalorder %s122, %s125
    %p134 = scmp.eq.s32.totalorder %s14, 1
    %p135 = por %p133, %p134
    %p136 = scmp.ne.s32.totalorder %s125, %s126
    %p137 = scmp.eq.s32.totalorder %s14, 0
    %p138 = por %p136, %p137
    %p139 = scmp.ne.s32.totalorder %s125, %s126
    %p140 = scmp.eq.s32.totalorder %s15, 1
    %p141 = por %p139, %p140
    %p143 = scmp.ne.s32.totalorder %s126, %s142
    %p144 = scmp.eq.s32.totalorder %s15, 0
    %p145 = por %p143, %p144
    %p146 = scmp.le.s32.totalorder 1, %s9
    %p147 = scmp.lt.s32.totalorder %s9, 3
    %p148 = pnand %p146, %p147
    %p149 = pneg %p148
    // Predicated region
    $region9: #{_lambda_.7} parent=5 // pred_check
      _
    $region10: #{_lambda_.7} parent=5 // pred_check_branch
      %151 = sbr.rel (%p148) target = $region12
    $region11: #{_lambda_.7} parent=5 // pred_region
      %s152 = ssub.s32 %s9, 1
      // Predicated region
      $region13: #{_lambda_.7} parent=11 // pred_check
        %p153 = pneg %p84
      $region14: #{_lambda_.7} parent=11 // pred_check_branch
        %155 = sbr.rel (%p153) target = $region16
      $region15: #{_lambda_.7} parent=11 // pred_region
        %s156 = smul.u32 16, %s21
        %p157 = scmp.lt.s32.totalorder %s156, 15
        %s158 = scalar_select %p157, %s156, 15
        %p159 = scmp.lt.s32.totalorder %s20, 0
        %s160 = scalar_select %p159, %s20, 0
        %s161 = sadd.s32 %s160, %s158
        %s162 = smul.addr %s161, 4
        %s163 = scalar_lea.vmem %s1, %s162
        %s164 = smul.u32 16, %s21
      $region16: #{_lambda_.7} parent=11 // pred_fallthru
        _
      // Predicated region
      $region17: #{_lambda_.7} parent=11 // pred_check
        %p165 = pneg %p110
      $region18: #{_lambda_.7} parent=11 // pred_check_branch
        %167 = sbr.rel (%p165) target = $region20
      $region19: #{_lambda_.7} parent=11 // pred_region
        %p168 = scmp.lt.s32.totalorder %s20, 0
        %s169 = scalar_select %p168, %s20, 0
        %s170 = scalar_lea.vmem %s2, %s169
      $region20: #{_lambda_.7} parent=11 // pred_fallthru
        _
    $region12: #{_lambda_.7} parent=5 // pred_fallthru
      _
    %p171 = scmp.lt.s32.totalorder %s9, 2
    // Predicated region
    $region21: #{_lambda_.7} parent=5 // pred_check
      %p172 = pneg %p171
    $region22: #{_lambda_.7} parent=5 // pred_check_branch
      %174 = sbr.rel (%p172) target = $region24
    $region23: #{_lambda_.7} parent=5 // pred_region
      // Predicated region
      $region25: #{_lambda_.7} parent=23 // pred_check
        %p175 = pneg %p50
      $region26: #{_lambda_.7} parent=23 // pred_check_branch
        %177 = sbr.rel (%p175) target = $region28
      $region27: #{_lambda_.7} parent=23 // pred_region
        %s178 = smul.u32 32, %s16
        %p179 = scmp.lt.s32.totalorder %s178, 63
        %s180 = scalar_select %p179, %s178, 63
        %p181 = scmp.lt.s32.totalorder %s18, 0
        %s182 = scalar_select %p181, %s18, 0
        %s183 = sadd.s32 %s182, %s180
        %s184 = smul.addr %s183, 4
        %s185 = scalar_lea.vmem %s0, %s184
        %s186 = smul.u32 32, %s16
      $region28: #{_lambda_.7} parent=23 // pred_fallthru
        _
    $region24: #{_lambda_.7} parent=5 // pred_fallthru
      _
    %p187 = scmp.le.s32.totalorder 1, %s9
    %p188 = scmp.lt.s32.totalorder %s9, 3
    %p189 = pnand %p187, %p188
    %p190 = pneg %p189
    // Predicated region
    $region29: #{_lambda_.7} parent=5 // pred_check
      _
    $region30: #{_lambda_.7} parent=5 // pred_check_branch
      %192 = sbr.rel (%p189) target = $region32
    $region31: #{_lambda_.7} parent=5 // pred_region
      %s193 = ssub.s32 %s9, 1
      %s194 = smul.u32 32, %s19
      %p195 = scmp.lt.s32.totalorder %s194, 63
      %s196 = scalar_select %p195, %s194, 63
      %p197 = scmp.lt.s32.totalorder %s21, 0
      %s198 = scalar_select %p197, %s21, 0
      %s199 = sadd.s32 %s198, %s196
      %s200 = smul.addr %s199, 4
      %s201 = scalar_lea.vmem %s0, %s200
      %p202 = pneg %p56
      %p203 = pneg %p53
      %s204 = smul.u32 16, %s21
      %p205 = scmp.lt.s32.totalorder %s204, 15
      %s206 = scalar_select %p205, %s204, 15
      %p207 = scmp.lt.s32.totalorder %s20, 0
      %s208 = scalar_select %p207, %s20, 0
      %s209 = sadd.s32 %s208, %s206
      %s210 = smul.addr %s209, 4
      %s211 = scalar_lea.vmem %s1, %s210
      %p212 = pneg %p84
      %p213 = pneg %p81
      %p214 = scmp.lt.s32.totalorder %s20, 0
      %s215 = scalar_select %p214, %s20, 0
      %s216 = scalar_lea.vmem %s2, %s215
      %p217 = pneg %p110
      %p218 = pneg %p107
      %p219 = pneg %p138
      %p220 = pneg %p135
      %s221 = smul.u32 32, %s19
      %p222 = scmp.lt.s32.totalorder %s221, 63
      %s223 = scalar_select %p222, %s221, 63
      %p224 = scmp.lt.s32.totalorder %s20, 0
      %s225 = scalar_select %p224, %s20, 0
      %s226 = sadd.s32 %s225, %s223
      %s227 = smul.addr %s226, 8
      %s228 = scalar_lea.vmem %s3, %s227
      %s229 = smul.u32 32, %s19
      %p230 = scmp.lt.s32.totalorder %s229, 63
      %s231 = scalar_select %p230, %s229, 63
      %p232 = scmp.lt.s32.totalorder %s21, 0
      %s233 = scalar_select %p232, %s21, 0
      %s234 = sadd.s32 %s233, %s231
      %s235 = smul.addr %s234, 4
      %s236 = scalar_lea.vmem %s0, %s235
      %s237 = smul.u32 32, %s19
      %s238 = smul.u32 16, %s21
      %p239 = scmp.lt.s32.totalorder %s238, 15
      %s240 = scalar_select %p239, %s238, 15
      %p241 = scmp.lt.s32.totalorder %s20, 0
      %s242 = scalar_select %p241, %s20, 0
      %s243 = sadd.s32 %s242, %s240
      %s244 = smul.addr %s243, 4
      %s245 = scalar_lea.vmem %s1, %s244
      %s246 = smul.u32 16, %s21
      %p247 = scmp.lt.s32.totalorder %s20, 0
      %s248 = scalar_select %p247, %s20, 0
      %s249 = scalar_lea.vmem %s2, %s248
      %s250 = smul.u32 32, %s19
      %p251 = scmp.lt.s32.totalorder %s250, 63
      %s252 = scalar_select %p251, %s250, 63
      %p253 = scmp.lt.s32.totalorder %s20, 0
      %s254 = scalar_select %p253, %s20, 0
      %s255 = sadd.s32 %s254, %s252
      %s256 = smul.addr %s255, 8
      %s257 = scalar_lea.vmem %s3, %s256
      %s258 = smul.u32 32, %s19
      %p260 = scmp.eq.s32.totalorder %s21, 0
      // Predicated region
      $region33: #{_lambda_.7} parent=31 // pred_check
        %p261 = pneg %p260
      $region34: #{_lambda_.7} parent=31 // pred_check_branch
        %263 = sbr.rel (%p261) target = $region36
      $region35: #{_lambda_.7} parent=31 // pred_region
        %264 = vst [vmem:[#allocation2] sm:$0xff] 0.0
        %265 = vst [vmem:[#allocation2 + $0x8] sm:$0xff] 0.0
        %266 = vst [vmem:[#allocation2 + $0x10] sm:$0xff] 0.0
        %267 = vst [vmem:[#allocation2 + $0x18] sm:$0xff] 0.0
        %268 = vst [vmem:[#allocation2 + $0x20] sm:$0xff] 0.0
        %269 = vst [vmem:[#allocation2 + $0x28] sm:$0xff] 0.0
        %270 = vst [vmem:[#allocation2 + $0x30] sm:$0xff] 0.0
        %271 = vst [vmem:[#allocation2 + $0x38] sm:$0xff] 0.0
        %272 = vst [vmem:[#allocation2 + $0x40] sm:$0xff] 0.0
        %273 = vst [vmem:[#allocation2 + $0x48] sm:$0xff] 0.0
        %274 = vst [vmem:[#allocation2 + $0x50] sm:$0xff] 0.0
        %275 = vst [vmem:[#allocation2 + $0x58] sm:$0xff] 0.0
        %276 = vst [vmem:[#allocation2 + $0x60] sm:$0xff] 0.0
        %277 = vst [vmem:[#allocation2 + $0x68] sm:$0xff] 0.0
        %278 = vst [vmem:[#allocation2 + $0x70] sm:$0xff] 0.0
        %279 = vst [vmem:[#allocation2 + $0x78] sm:$0xff] 0.0
        %280 = vst [vmem:[#allocation2 + $0x80] sm:$0xff] 0.0
        %281 = vst [vmem:[#allocation2 + $0x88] sm:$0xff] 0.0
        %282 = vst [vmem:[#allocation2 + $0x90] sm:$0xff] 0.0
        %283 = vst [vmem:[#allocation2 + $0x98] sm:$0xff] 0.0
        %284 = vst [vmem:[#allocation2 + $0xa0] sm:$0xff] 0.0
        %285 = vst [vmem:[#allocation2 + $0xa8] sm:$0xff] 0.0
        %286 = vst [vmem:[#allocation2 + $0xb0] sm:$0xff] 0.0
        %287 = vst [vmem:[#allocation2 + $0xb8] sm:$0xff] 0.0
        %288 = vst [vmem:[#allocation2 + $0xc0] sm:$0xff] 0.0
        %289 = vst [vmem:[#allocation2 + $0xc8] sm:$0xff] 0.0
        %290 = vst [vmem:[#allocation2 + $0xd0] sm:$0xff] 0.0
        %291 = vst [vmem:[#allocation2 + $0xd8] sm:$0xff] 0.0
        %292 = vst [vmem:[#allocation2 + $0xe0] sm:$0xff] 0.0
        %293 = vst [vmem:[#allocation2 + $0xe8] sm:$0xff] 0.0
        %294 = vst [vmem:[#allocation2 + $0xf0] sm:$0xff] 0.0
        %295 = vst [vmem:[#allocation2 + $0xf8] sm:$0xff] 0.0
      $region36: #{_lambda_.7} parent=31 // pred_fallthru
        _
      %v296 = vld [vmem:[%s236] sm:$0xf]
      %v297 = vld [vmem:[%s236 + $0x4] sm:$0xf]
      %v298 = vld [vmem:[%s236 + $0x8] sm:$0xf]
      %v299 = vld [vmem:[%s236 + $0xc] sm:$0xf]
      %v300 = vld [vmem:[%s236 + $0x10] sm:$0xf]
      %v301 = vld [vmem:[%s236 + $0x14] sm:$0xf]
      %v302 = vld [vmem:[%s236 + $0x18] sm:$0xf]
      %v303 = vld [vmem:[%s236 + $0x1c] sm:$0xf]
      %v304 = vld [vmem:[%s236 + $0x20] sm:$0xf]
      %v305 = vld [vmem:[%s236 + $0x24] sm:$0xf]
      %v306 = vld [vmem:[%s236 + $0x28] sm:$0xf]
      %v307 = vld [vmem:[%s236 + $0x2c] sm:$0xf]
      %v308 = vld [vmem:[%s236 + $0x30] sm:$0xf]
      %v309 = vld [vmem:[%s236 + $0x34] sm:$0xf]
      %v310 = vld [vmem:[%s236 + $0x38] sm:$0xf]
      %v311 = vld [vmem:[%s236 + $0x3c] sm:$0xf]
      %v312 = vld [vmem:[%s236 + $0x40] sm:$0xf]
      %v313 = vld [vmem:[%s236 + $0x44] sm:$0xf]
      %v314 = vld [vmem:[%s236 + $0x48] sm:$0xf]
      %v315 = vld [vmem:[%s236 + $0x4c] sm:$0xf]
      %v316 = vld [vmem:[%s236 + $0x50] sm:$0xf]
      %v317 = vld [vmem:[%s236 + $0x54] sm:$0xf]
      %v318 = vld [vmem:[%s236 + $0x58] sm:$0xf]
      %v319 = vld [vmem:[%s236 + $0x5c] sm:$0xf]
      %v320 = vld [vmem:[%s236 + $0x60] sm:$0xf]
      %v321 = vld [vmem:[%s236 + $0x64] sm:$0xf]
      %v322 = vld [vmem:[%s236 + $0x68] sm:$0xf]
      %v323 = vld [vmem:[%s236 + $0x6c] sm:$0xf]
      %v324 = vld [vmem:[%s236 + $0x70] sm:$0xf]
      %v325 = vld [vmem:[%s236 + $0x74] sm:$0xf]
      %v326 = vld [vmem:[%s236 + $0x78] sm:$0xf]
      %v327 = vld [vmem:[%s236 + $0x7c] sm:$0xf]
      %v328 = vld [vmem:[#allocation2] sm:$0xff]
      %v329 = vld [vmem:[#allocation2 + $0x8] sm:$0xff]
      %v330 = vld [vmem:[#allocation2 + $0x10] sm:$0xff]
      %v331 = vld [vmem:[#allocation2 + $0x18] sm:$0xff]
      %v332 = vld [vmem:[#allocation2 + $0x20] sm:$0xff]
      %v333 = vld [vmem:[#allocation2 + $0x28] sm:$0xff]
      %v334 = vld [vmem:[#allocation2 + $0x30] sm:$0xff]
      %v335 = vld [vmem:[#allocation2 + $0x38] sm:$0xff]
      %v336 = vld [vmem:[#allocation2 + $0x40] sm:$0xff]
      %v337 = vld [vmem:[#allocation2 + $0x48] sm:$0xff]
      %v338 = vld [vmem:[#allocation2 + $0x50] sm:$0xff]
      %v339 = vld [vmem:[#allocation2 + $0x58] sm:$0xff]
      %v340 = vld [vmem:[#allocation2 + $0x60] sm:$0xff]
      %v341 = vld [vmem:[#allocation2 + $0x68] sm:$0xff]
      %v342 = vld [vmem:[#allocation2 + $0x70] sm:$0xff]
      %v343 = vld [vmem:[#allocation2 + $0x78] sm:$0xff]
      %v344 = vld [vmem:[#allocation2 + $0x80] sm:$0xff]
      %v345 = vld [vmem:[#allocation2 + $0x88] sm:$0xff]
      %v346 = vld [vmem:[#allocation2 + $0x90] sm:$0xff]
      %v347 = vld [vmem:[#allocation2 + $0x98] sm:$0xff]
      %v348 = vld [vmem:[#allocation2 + $0xa0] sm:$0xff]
      %v349 = vld [vmem:[#allocation2 + $0xa8] sm:$0xff]
      %v350 = vld [vmem:[#allocation2 + $0xb0] sm:$0xff]
      %v351 = vld [vmem:[#allocation2 + $0xb8] sm:$0xff]
      %v352 = vld [vmem:[#allocation2 + $0xc0] sm:$0xff]
      %v353 = vld [vmem:[#allocation2 + $0xc8] sm:$0xff]
      %v354 = vld [vmem:[#allocation2 + $0xd0] sm:$0xff]
      %v355 = vld [vmem:[#allocation2 + $0xd8] sm:$0xff]
      %v356 = vld [vmem:[#allocation2 + $0xe0] sm:$0xff]
      %v357 = vld [vmem:[#allocation2 + $0xe8] sm:$0xff]
      %v358 = vld [vmem:[#allocation2 + $0xf0] sm:$0xff]
      %v359 = vld [vmem:[#allocation2 + $0xf8] sm:$0xff]
      %v360 = vld [vmem:[%s245] sm:$0xf]
      %v361 = vld [vmem:[%s245 + $0x4] sm:$0xf]
      %v362 = vld [vmem:[%s245 + $0x8] sm:$0xf]
      %v363 = vld [vmem:[%s245 + $0xc] sm:$0xf]
      %v364 = vld [vmem:[%s245 + $0x10] sm:$0xf]
      %v365 = vld [vmem:[%s245 + $0x14] sm:$0xf]
      %v366 = vld [vmem:[%s245 + $0x18] sm:$0xf]
      %v367 = vld [vmem:[%s245 + $0x1c] sm:$0xf]
      %v368 = vld [vmem:[%s245 + $0x20] sm:$0xf]
      %v369 = vld [vmem:[%s245 + $0x24] sm:$0xf]
      %v370 = vld [vmem:[%s245 + $0x28] sm:$0xf]
      %v371 = vld [vmem:[%s245 + $0x2c] sm:$0xf]
      %v372 = vld [vmem:[%s245 + $0x30] sm:$0xf]
      %v373 = vld [vmem:[%s245 + $0x34] sm:$0xf]
      %v374 = vld [vmem:[%s245 + $0x38] sm:$0xf]
      %v375 = vld [vmem:[%s245 + $0x3c] sm:$0xf]
      %v408 = vunpack.c.l.b16 %v296
      %v409 = vunpack.c.l.b16 %v297
      %v410 = vunpack.c.l.b16 %v298
      %v411 = vunpack.c.l.b16 %v299
      %v412 = vunpack.c.l.b16 %v300
      %v413 = vunpack.c.l.b16 %v301
      %v414 = vunpack.c.l.b16 %v302
      %v415 = vunpack.c.l.b16 %v303
      %v416 = vunpack.c.l.b16 %v304
      %v417 = vunpack.c.l.b16 %v305
      %v418 = vunpack.c.l.b16 %v306
      %v419 = vunpack.c.l.b16 %v307
      %v420 = vunpack.c.l.b16 %v308
      %v421 = vunpack.c.l.b16 %v309
      %v422 = vunpack.c.l.b16 %v310
      %v423 = vunpack.c.l.b16 %v311
      %v424 = vunpack.c.l.b16 %v312
      %v425 = vunpack.c.l.b16 %v313
      %v426 = vunpack.c.l.b16 %v314
      %v427 = vunpack.c.l.b16 %v315
      %v428 = vunpack.c.l.b16 %v316
      %v429 = vunpack.c.l.b16 %v317
      %v430 = vunpack.c.l.b16 %v318
      %v431 = vunpack.c.l.b16 %v319
      %v432 = vunpack.c.l.b16 %v320
      %v433 = vunpack.c.l.b16 %v321
      %v434 = vunpack.c.l.b16 %v322
      %v435 = vunpack.c.l.b16 %v323
      %v436 = vunpack.c.l.b16 %v324
      %v437 = vunpack.c.l.b16 %v325
      %v438 = vunpack.c.l.b16 %v326
      %v439 = vunpack.c.l.b16 %v327
      %v440 = vpack.c.b16 %v409, %v408
      %v441 = vpack.c.b16 %v411, %v410
      %v442 = vpack.c.b16 %v413, %v412
      %v443 = vpack.c.b16 %v415, %v414
      %v444 = vpack.c.b16 %v417, %v416
      %v445 = vpack.c.b16 %v419, %v418
      %v446 = vpack.c.b16 %v421, %v420
      %v447 = vpack.c.b16 %v423, %v422
      %v448 = vpack.c.b16 %v425, %v424
      %v449 = vpack.c.b16 %v427, %v426
      %v450 = vpack.c.b16 %v429, %v428
      %v451 = vpack.c.b16 %v431, %v430
      %v452 = vpack.c.b16 %v433, %v432
      %v453 = vpack.c.b16 %v435, %v434
      %v454 = vpack.c.b16 %v437, %v436
      %v455 = vpack.c.b16 %v439, %v438
      %v488 = vunpack.c.l.b16 %v360
      %v489 = vunpack.c.l.b16 %v361
      %v490 = vunpack.c.l.b16 %v362
      %v491 = vunpack.c.l.b16 %v363
      %v492 = vunpack.c.l.b16 %v364
      %v493 = vunpack.c.l.b16 %v365
      %v494 = vunpack.c.l.b16 %v366
      %v495 = vunpack.c.l.b16 %v367
      %v496 = vunpack.c.l.b16 %v368
      %v497 = vunpack.c.l.b16 %v369
      %v498 = vunpack.c.l.b16 %v370
      %v499 = vunpack.c.l.b16 %v371
      %v500 = vunpack.c.l.b16 %v372
      %v501 = vunpack.c.l.b16 %v373
      %v502 = vunpack.c.l.b16 %v374
      %v503 = vunpack.c.l.b16 %v375
      %v504 = vpack.c.b16 %v489, %v488
      %v505 = vpack.c.b16 %v491, %v490
      %v506 = vpack.c.b16 %v493, %v492
      %v507 = vpack.c.b16 %v495, %v494
      %v508 = vpack.c.b16 %v497, %v496
      %v509 = vpack.c.b16 %v499, %v498
      %v510 = vpack.c.b16 %v501, %v500
      %v511 = vpack.c.b16 %v503, %v502
      %520 = vmatprep.subr.bf16.mxu0 0
      %521 = vmatpush1.bf16.msra.mxu0 %v504
      %522 = vmatprep.subr.bf16.mxu0 0
      %523 = vmatpush1.bf16.msra.mxu0 %v505
      %524 = vmatprep.subr.bf16.mxu0 0
      %525 = vmatpush1.bf16.msra.mxu0 %v506
      %526 = vmatprep.subr.bf16.mxu0 0
      %527 = vmatpush1.bf16.msra.mxu0 %v507
      %528 = vmatprep.subr.bf16.mxu0 0
      %529 = vmatpush1.bf16.msra.mxu0 %v508
      %530 = vmatprep.subr.bf16.mxu0 0
      %531 = vmatpush1.bf16.msra.mxu0 %v509
      %532 = vmatprep.subr.bf16.mxu0 0
      %533 = vmatpush1.bf16.msra.mxu0 %v510
      %534 = vmatprep.subr.bf16.mxu0 0
      %535 = vmatpush1.bf16.msra.mxu0 %v511
      %536 = vmatprep.subr.bf16.mxu0 0
      %537 = vmatpush1.bf16.msra.mxu0 0
      %538 = vmatprep.subr.bf16.mxu0 0
      %539 = vmatpush1.bf16.msra.mxu0 0
      %540 = vmatprep.subr.bf16.mxu0 0
      %541 = vmatpush1.bf16.msra.mxu0 0
      %542 = vmatprep.subr.bf16.mxu0 0
      %543 = vmatpush1.bf16.msra.mxu0 0
      %544 = vmatprep.subr.bf16.mxu0 0
      %545 = vmatpush1.bf16.msra.mxu0 0
      %546 = vmatprep.subr.bf16.mxu0 0
      %547 = vmatpush1.bf16.msra.mxu0 0
      %548 = vmatprep.subr.bf16.mxu0 0
      %549 = vmatpush1.bf16.msra.mxu0 0
      %550 = vmatprep.subr.bf16.mxu0 0
      %551 = vmatpush1.bf16.msra.mxu0 0
      %552 = vmatprep.mubr.bf16.mxu0 0
      %553 = vmatmul.mubr.bf16.gmra.mrb[0].mxu0 %v440
      %v554 = vpop.f32.mrb[0].mxu0
      %v555 = vadd.f32 0.0, %v554
      %v556 = vpop.f32.mrb[0].mxu0
      %v557 = vpop.f32.mrb[0].mxu0
      %v558 = vadd.f32 0.0, %v557
      %v559 = vpop.f32.mrb[0].mxu0
      %560 = vmatprep.mubr.bf16.mxu0 0
      %561 = vmatmul.mubr.bf16.gmra.mrb[0].mxu0 %v441
      %v562 = vpop.f32.mrb[0].mxu0
      %v563 = vadd.f32 0.0, %v562
      %v564 = vpop.f32.mrb[0].mxu0
      %v565 = vpop.f32.mrb[0].mxu0
      %v566 = vadd.f32 0.0, %v565
      %v567 = vpop.f32.mrb[0].mxu0
      %568 = vmatprep.mubr.bf16.mxu0 0
      %569 = vmatmul.mubr.bf16.gmra.mrb[0].mxu0 %v442
      %v570 = vpop.f32.mrb[0].mxu0
      %v571 = vadd.f32 0.0, %v570
      %v572 = vpop.f32.mrb[0].mxu0
      %v573 = vpop.f32.mrb[0].mxu0
      %v574 = vadd.f32 0.0, %v573
      %v575 = vpop.f32.mrb[0].mxu0
      %576 = vmatprep.mubr.bf16.mxu0 0
      %577 = vmatmul.mubr.bf16.gmra.mrb[0].mxu0 %v443
      %v578 = vpop.f32.mrb[0].mxu0
      %v579 = vadd.f32 0.0, %v578
      %v580 = vpop.f32.mrb[0].mxu0
      %v581 = vpop.f32.mrb[0].mxu0
      %v582 = vadd.f32 0.0, %v581
      %v583 = vpop.f32.mrb[0].mxu0
      %584 = vmatprep.mubr.bf16.mxu0 0
      %585 = vmatmul.mubr.bf16.gmra.mrb[0].mxu0 %v444
      %v586 = vpop.f32.mrb[0].mxu0
      %v587 = vadd.f32 0.0, %v586
      %v588 = vpop.f32.mrb[0].mxu0
      %v589 = vpop.f32.mrb[0].mxu0
      %v590 = vadd.f32 0.0, %v589
      %v591 = vpop.f32.mrb[0].mxu0
      %592 = vmatprep.mubr.bf16.mxu0 0
      %593 = vmatmul.mubr.bf16.gmra.mrb[0].mxu0 %v445
      %v594 = vpop.f32.mrb[0].mxu0
      %v595 = vadd.f32 0.0, %v594
      %v596 = vpop.f32.mrb[0].mxu0
      %v597 = vpop.f32.mrb[0].mxu0
      %v598 = vadd.f32 0.0, %v597
      %v599 = vpop.f32.mrb[0].mxu0
      %600 = vmatprep.mubr.bf16.mxu0 0
      %601 = vmatmul.mubr.bf16.gmra.mrb[0].mxu0 %v446
      %v602 = vpop.f32.mrb[0].mxu0
      %v603 = vadd.f32 0.0, %v602
      %v604 = vpop.f32.mrb[0].mxu0
      %v605 = vpop.f32.mrb[0].mxu0
      %v606 = vadd.f32 0.0, %v605
      %v607 = vpop.f32.mrb[0].mxu0
      %608 = vmatprep.mubr.bf16.mxu0 0
      %609 = vmatmul.mubr.bf16.gmra.mrb[0].mxu0 %v447
      %v610 = vpop.f32.mrb[0].mxu0
      %v611 = vadd.f32 0.0, %v610
      %v612 = vpop.f32.mrb[0].mxu0
      %v613 = vpop.f32.mrb[0].mxu0
      %v614 = vadd.f32 0.0, %v613
      %v615 = vpop.f32.mrb[0].mxu0
      %616 = vmatprep.mubr.bf16.mxu0 0
      %617 = vmatmul.mubr.bf16.gmra.mrb[0].mxu0 %v448
      %v618 = vpop.f32.mrb[0].mxu0
      %v619 = vadd.f32 0.0, %v618
      %v620 = vpop.f32.mrb[0].mxu0
      %v621 = vpop.f32.mrb[0].mxu0
      %v622 = vadd.f32 0.0, %v621
      %v623 = vpop.f32.mrb[0].mxu0
      %624 = vmatprep.mubr.bf16.mxu0 0
      %625 = vmatmul.mubr.bf16.gmra.mrb[0].mxu0 %v449
      %v626 = vpop.f32.mrb[0].mxu0
      %v627 = vadd.f32 0.0, %v626
      %v628 = vpop.f32.mrb[0].mxu0
      %v629 = vpop.f32.mrb[0].mxu0
      %v630 = vadd.f32 0.0, %v629
      %v631 = vpop.f32.mrb[0].mxu0
      %632 = vmatprep.mubr.bf16.mxu0 0
      %633 = vmatmul.mubr.bf16.gmra.mrb[0].mxu0 %v450
      %v634 = vpop.f32.mrb[0].mxu0
      %v635 = vadd.f32 0.0, %v634
      %v636 = vpop.f32.mrb[0].mxu0
      %v637 = vpop.f32.mrb[0].mxu0
      %v638 = vadd.f32 0.0, %v637
      %v639 = vpop.f32.mrb[0].mxu0
      %640 = vmatprep.mubr.bf16.mxu0 0
      %641 = vmatmul.mubr.bf16.gmra.mrb[0].mxu0 %v451
      %v642 = vpop.f32.mrb[0].mxu0
      %v643 = vadd.f32 0.0, %v642
      %v644 = vpop.f32.mrb[0].mxu0
      %v645 = vpop.f32.mrb[0].mxu0
      %v646 = vadd.f32 0.0, %v645
      %v647 = vpop.f32.mrb[0].mxu0
      %648 = vmatprep.mubr.bf16.mxu0 0
      %649 = vmatmul.mubr.bf16.gmra.mrb[0].mxu0 %v452
      %v650 = vpop.f32.mrb[0].mxu0
      %v651 = vadd.f32 0.0, %v650
      %v652 = vpop.f32.mrb[0].mxu0
      %v653 = vpop.f32.mrb[0].mxu0
      %v654 = vadd.f32 0.0, %v653
      %v655 = vpop.f32.mrb[0].mxu0
      %656 = vmatprep.mubr.bf16.mxu0 0
      %657 = vmatmul.mubr.bf16.gmra.mrb[0].mxu0 %v453
      %v658 = vpop.f32.mrb[0].mxu0
      %v659 = vadd.f32 0.0, %v658
      %v660 = vpop.f32.mrb[0].mxu0
      %v661 = vpop.f32.mrb[0].mxu0
      %v662 = vadd.f32 0.0, %v661
      %v663 = vpop.f32.mrb[0].mxu0
      %664 = vmatprep.mubr.bf16.mxu0 0
      %665 = vmatmul.mubr.bf16.gmra.mrb[0].mxu0 %v454
      %v666 = vpop.f32.mrb[0].mxu0
      %v667 = vadd.f32 0.0, %v666
      %v668 = vpop.f32.mrb[0].mxu0
      %v669 = vpop.f32.mrb[0].mxu0
      %v670 = vadd.f32 0.0, %v669
      %v671 = vpop.f32.mrb[0].mxu0
      %672 = vmatprep.mubr.bf16.mxu0 0
      %673 = vmatmul.mubr.bf16.gmra.mrb[0].mxu0 %v455
      %v674 = vpop.f32.mrb[0].mxu0
      %v675 = vadd.f32 0.0, %v674
      %v676 = vpop.f32.mrb[0].mxu0
      %v677 = vpop.f32.mrb[0].mxu0
      %v678 = vadd.f32 0.0, %v677
      %v679 = vpop.f32.mrb[0].mxu0
      %680 = vdwg.mxu0
      %v681 = vadd.f32 %v328, %v555
      %v682 = vadd.f32 %v329, %v558
      %v683 = vadd.f32 %v330, %v563
      %v684 = vadd.f32 %v331, %v566
      %v685 = vadd.f32 %v332, %v571
      %v686 = vadd.f32 %v333, %v574
      %v687 = vadd.f32 %v334, %v579
      %v688 = vadd.f32 %v335, %v582
      %v689 = vadd.f32 %v336, %v587
      %v690 = vadd.f32 %v337, %v590
      %v691 = vadd.f32 %v338, %v595
      %v692 = vadd.f32 %v339, %v598
      %v693 = vadd.f32 %v340, %v603
      %v694 = vadd.f32 %v341, %v606
      %v695 = vadd.f32 %v342, %v611
      %v696 = vadd.f32 %v343, %v614
      %v697 = vadd.f32 %v344, %v619
      %v698 = vadd.f32 %v345, %v622
      %v699 = vadd.f32 %v346, %v627
      %v700 = vadd.f32 %v347, %v630
      %v701 = vadd.f32 %v348, %v635
      %v702 = vadd.f32 %v349, %v638
      %v703 = vadd.f32 %v350, %v643
      %v704 = vadd.f32 %v351, %v646
      %v705 = vadd.f32 %v352, %v651
      %v706 = vadd.f32 %v353, %v654
      %v707 = vadd.f32 %v354, %v659
      %v708 = vadd.f32 %v355, %v662
      %v709 = vadd.f32 %v356, %v667
      %v710 = vadd.f32 %v357, %v670
      %v711 = vadd.f32 %v358, %v675
      %v712 = vadd.f32 %v359, %v678
      %713 = vst [vmem:[#allocation2] sm:$0xff] %v681
      %714 = vst [vmem:[#allocation2 + $0x8] sm:$0xff] %v682
      %715 = vst [vmem:[#allocation2 + $0x10] sm:$0xff] %v683
      %716 = vst [vmem:[#allocation2 + $0x18] sm:$0xff] %v684
      %717 = vst [vmem:[#allocation2 + $0x20] sm:$0xff] %v685
      %718 = vst [vmem:[#allocation2 + $0x28] sm:$0xff] %v686
      %719 = vst [vmem:[#allocation2 + $0x30] sm:$0xff] %v687
      %720 = vst [vmem:[#allocation2 + $0x38] sm:$0xff] %v688
      %721 = vst [vmem:[#allocation2 + $0x40] sm:$0xff] %v689
      %722 = vst [vmem:[#allocation2 + $0x48] sm:$0xff] %v690
      %723 = vst [vmem:[#allocation2 + $0x50] sm:$0xff] %v691
      %724 = vst [vmem:[#allocation2 + $0x58] sm:$0xff] %v692
      %725 = vst [vmem:[#allocation2 + $0x60] sm:$0xff] %v693
      %726 = vst [vmem:[#allocation2 + $0x68] sm:$0xff] %v694
      %727 = vst [vmem:[#allocation2 + $0x70] sm:$0xff] %v695
      %728 = vst [vmem:[#allocation2 + $0x78] sm:$0xff] %v696
      %729 = vst [vmem:[#allocation2 + $0x80] sm:$0xff] %v697
      %730 = vst [vmem:[#allocation2 + $0x88] sm:$0xff] %v698
      %731 = vst [vmem:[#allocation2 + $0x90] sm:$0xff] %v699
      %732 = vst [vmem:[#allocation2 + $0x98] sm:$0xff] %v700
      %733 = vst [vmem:[#allocation2 + $0xa0] sm:$0xff] %v701
      %734 = vst [vmem:[#allocation2 + $0xa8] sm:$0xff] %v702
      %735 = vst [vmem:[#allocation2 + $0xb0] sm:$0xff] %v703
      %736 = vst [vmem:[#allocation2 + $0xb8] sm:$0xff] %v704
      %737 = vst [vmem:[#allocation2 + $0xc0] sm:$0xff] %v705
      %738 = vst [vmem:[#allocation2 + $0xc8] sm:$0xff] %v706
      %739 = vst [vmem:[#allocation2 + $0xd0] sm:$0xff] %v707
      %740 = vst [vmem:[#allocation2 + $0xd8] sm:$0xff] %v708
      %741 = vst [vmem:[#allocation2 + $0xe0] sm:$0xff] %v709
      %742 = vst [vmem:[#allocation2 + $0xe8] sm:$0xff] %v710
      %743 = vst [vmem:[#allocation2 + $0xf0] sm:$0xff] %v711
      %744 = vst [vmem:[#allocation2 + $0xf8] sm:$0xff] %v712
      // Predicated region
      $region37: #{_lambda_.7} parent=31 // pred_check
        %p745 = pneg %p260
      $region38: #{_lambda_.7} parent=31 // pred_check_branch
        %747 = sbr.rel (%p745) target = $region40
      $region39: #{_lambda_.7} parent=31 // pred_region
        %v748 = vld [vmem:[#allocation2] sm:$0xff]
        %v749 = vld [vmem:[#allocation2 + $0x8] sm:$0xff]
        %v750 = vld [vmem:[#allocation2 + $0x10] sm:$0xff]
        %v751 = vld [vmem:[#allocation2 + $0x18] sm:$0xff]
        %v752 = vld [vmem:[#allocation2 + $0x20] sm:$0xff]
        %v753 = vld [vmem:[#allocation2 + $0x28] sm:$0xff]
        %v754 = vld [vmem:[#allocation2 + $0x30] sm:$0xff]
        %v755 = vld [vmem:[#allocation2 + $0x38] sm:$0xff]
        %v756 = vld [vmem:[#allocation2 + $0x40] sm:$0xff]
        %v757 = vld [vmem:[#allocation2 + $0x48] sm:$0xff]
        %v758 = vld [vmem:[#allocation2 + $0x50] sm:$0xff]
        %v759 = vld [vmem:[#allocation2 + $0x58] sm:$0xff]
        %v760 = vld [vmem:[#allocation2 + $0x60] sm:$0xff]
        %v761 = vld [vmem:[#allocation2 + $0x68] sm:$0xff]
        %v762 = vld [vmem:[#allocation2 + $0x70] sm:$0xff]
        %v763 = vld [vmem:[#allocation2 + $0x78] sm:$0xff]
        %v764 = vld [vmem:[#allocation2 + $0x80] sm:$0xff]
        %v765 = vld [vmem:[#allocation2 + $0x88] sm:$0xff]
        %v766 = vld [vmem:[#allocation2 + $0x90] sm:$0xff]
        %v767 = vld [vmem:[#allocation2 + $0x98] sm:$0xff]
        %v768 = vld [vmem:[#allocation2 + $0xa0] sm:$0xff]
        %v769 = vld [vmem:[#allocation2 + $0xa8] sm:$0xff]
        %v770 = vld [vmem:[#allocation2 + $0xb0] sm:$0xff]
        %v771 = vld [vmem:[#allocation2 + $0xb8] sm:$0xff]
        %v772 = vld [vmem:[#allocation2 + $0xc0] sm:$0xff]
        %v773 = vld [vmem:[#allocation2 + $0xc8] sm:$0xff]
        %v774 = vld [vmem:[#allocation2 + $0xd0] sm:$0xff]
        %v775 = vld [vmem:[#allocation2 + $0xd8] sm:$0xff]
        %v776 = vld [vmem:[#allocation2 + $0xe0] sm:$0xff]
        %v777 = vld [vmem:[#allocation2 + $0xe8] sm:$0xff]
        %v778 = vld [vmem:[#allocation2 + $0xf0] sm:$0xff]
        %v779 = vld [vmem:[#allocation2 + $0xf8] sm:$0xff]
        %v780 = vld [vmem:[%s249] sm:$0x1]
        %v782 = vlaneseq
        %v783 = vshrl.u32 %v782, 7
        %v784 = vsub.s32 0, %v783
        %v785 = vrot.slane %v780, %v784
        %v787 = vadd.f32 %v748, %v785
        %v788 = vadd.f32 %v749, %v785
        %v789 = vadd.f32 %v750, %v785
        %v790 = vadd.f32 %v751, %v785
        %v791 = vadd.f32 %v752, %v785
        %v792 = vadd.f32 %v753, %v785
        %v793 = vadd.f32 %v754, %v785
        %v794 = vadd.f32 %v755, %v785
        %v795 = vadd.f32 %v756, %v785
        %v796 = vadd.f32 %v757, %v785
        %v797 = vadd.f32 %v758, %v785
        %v798 = vadd.f32 %v759, %v785
        %v799 = vadd.f32 %v760, %v785
        %v800 = vadd.f32 %v761, %v785
        %v801 = vadd.f32 %v762, %v785
        %v802 = vadd.f32 %v763, %v785
        %v803 = vadd.f32 %v764, %v785
        %v804 = vadd.f32 %v765, %v785
        %v805 = vadd.f32 %v766, %v785
        %v806 = vadd.f32 %v767, %v785
        %v807 = vadd.f32 %v768, %v785
        %v808 = vadd.f32 %v769, %v785
        %v809 = vadd.f32 %v770, %v785
        %v810 = vadd.f32 %v771, %v785
        %v811 = vadd.f32 %v772, %v785
        %v812 = vadd.f32 %v773, %v785
        %v813 = vadd.f32 %v774, %v785
        %v814 = vadd.f32 %v775, %v785
        %v815 = vadd.f32 %v776, %v785
        %v816 = vadd.f32 %v777, %v785
        %v817 = vadd.f32 %v778, %v785
        %v818 = vadd.f32 %v779, %v785
        %819 = vst [vmem:[%s257] sm:$0xff] %v787
        %820 = vst [vmem:[%s257 + $0x8] sm:$0xff] %v788
        %821 = vst [vmem:[%s257 + $0x10] sm:$0xff] %v789
        %822 = vst [vmem:[%s257 + $0x18] sm:$0xff] %v790
        %823 = vst [vmem:[%s257 + $0x20] sm:$0xff] %v791
        %824 = vst [vmem:[%s257 + $0x28] sm:$0xff] %v792
        %825 = vst [vmem:[%s257 + $0x30] sm:$0xff] %v793
        %826 = vst [vmem:[%s257 + $0x38] sm:$0xff] %v794
        %827 = vst [vmem:[%s257 + $0x40] sm:$0xff] %v795
        %828 = vst [vmem:[%s257 + $0x48] sm:$0xff] %v796
        %829 = vst [vmem:[%s257 + $0x50] sm:$0xff] %v797
        %830 = vst [vmem:[%s257 + $0x58] sm:$0xff] %v798
        %831 = vst [vmem:[%s257 + $0x60] sm:$0xff] %v799
        %832 = vst [vmem:[%s257 + $0x68] sm:$0xff] %v800
        %833 = vst [vmem:[%s257 + $0x70] sm:$0xff] %v801
        %834 = vst [vmem:[%s257 + $0x78] sm:$0xff] %v802
        %835 = vst [vmem:[%s257 + $0x80] sm:$0xff] %v803
        %836 = vst [vmem:[%s257 + $0x88] sm:$0xff] %v804
        %837 = vst [vmem:[%s257 + $0x90] sm:$0xff] %v805
        %838 = vst [vmem:[%s257 + $0x98] sm:$0xff] %v806
        %839 = vst [vmem:[%s257 + $0xa0] sm:$0xff] %v807
        %840 = vst [vmem:[%s257 + $0xa8] sm:$0xff] %v808
        %841 = vst [vmem:[%s257 + $0xb0] sm:$0xff] %v809
        %842 = vst [vmem:[%s257 + $0xb8] sm:$0xff] %v810
        %843 = vst [vmem:[%s257 + $0xc0] sm:$0xff] %v811
        %844 = vst [vmem:[%s257 + $0xc8] sm:$0xff] %v812
        %845 = vst [vmem:[%s257 + $0xd0] sm:$0xff] %v813
        %846 = vst [vmem:[%s257 + $0xd8] sm:$0xff] %v814
        %847 = vst [vmem:[%s257 + $0xe0] sm:$0xff] %v815
        %848 = vst [vmem:[%s257 + $0xe8] sm:$0xff] %v816
        %849 = vst [vmem:[%s257 + $0xf0] sm:$0xff] %v817
        %850 = vst [vmem:[%s257 + $0xf8] sm:$0xff] %v818
      $region40: #{_lambda_.7} parent=31 // pred_fallthru
        _
      %s851 = smul.u32 32, %s19
      %p852 = scmp.lt.s32.totalorder %s851, 63
      %s853 = scalar_select %p852, %s851, 63
      %p854 = scmp.lt.s32.totalorder %s20, 0
      %s855 = scalar_select %p854, %s20, 0
      %s856 = sadd.s32 %s855, %s853
      %s857 = smul.addr %s856, 8
      %s858 = scalar_lea.vmem %s3, %s857
      // Predicated region
      $region41: #{_lambda_.7} parent=31 // pred_check
        %p859 = pneg %p135
      $region42: #{_lambda_.7} parent=31 // pred_check_branch
        %861 = sbr.rel (%p859) target = $region44
      $region43: #{_lambda_.7} parent=31 // pred_region
        %s862 = smul.u32 32, %s19
      $region44: #{_lambda_.7} parent=31 // pred_fallthru
        _
    $region32: #{_lambda_.7} parent=5 // pred_fallthru
      _
    %p863 = scmp.le.s32.totalorder 2, %s9
    // Predicated region
    $region45: #{_lambda_.7} parent=5 // pred_check
      %p864 = pneg %p863
    $region46: #{_lambda_.7} parent=5 // pred_check_branch
      %866 = sbr.rel (%p864) target = $region48
    $region47: #{_lambda_.7} parent=5 // pred_region
      %s867 = ssub.s32 %s9, 2
      // Predicated region
      $region49: #{_lambda_.7} parent=47 // pred_check
        %p868 = pneg %p141
      $region50: #{_lambda_.7} parent=47 // pred_check_branch
        %870 = sbr.rel (%p868) target = $region52
      $region51: #{_lambda_.7} parent=47 // pred_region
        %s871 = smul.u32 32, %s22
        %p872 = scmp.lt.s32.totalorder %s871, 63
        %s873 = scalar_select %p872, %s871, 63
        %p874 = scmp.lt.s32.totalorder %s23, 0
        %s875 = scalar_select %p874, %s23, 0
        %s876 = sadd.s32 %s875, %s873
        %s877 = smul.addr %s876, 8
        %s878 = scalar_lea.vmem %s3, %s877
      $region52: #{_lambda_.7} parent=47 // pred_fallthru
        _
    $region48: #{_lambda_.7} parent=5 // pred_fallthru
      _
  $region6: #{_lambda_.7} parent=0 // loop_footer
    %s13 = sadd.s32 1, %s9
  $region7: #{_lambda_.7} parent=0 // loop_footer_branch
    %8 = sbr.rel target = $region3
  $region8: #{_lambda_.7} parent=0 // loop_exit
    _

// kernel: _lambda_.8
$region0: #{_lambda_.8}
  #allocation0 [shape = 'u32[]', space=smem, size = 0x4, offset = 0x4, fixed_abs, tag = 'smem constant byte address 0x4 - core index']
  #allocation1 [shape = 'u32[144,128]{1,0:T(1,128)}', space=vmem, size = 0x12000, scoped, tag = 'internal scratch']
  #allocation2 [shape = 'f32[128,128]{1,0:T(8,128)}', space=vmem, size = 0x10000, scoped, tag = 'scratch operand']
  %s0 = inlined_call_operand.vmem [shape: bf16[128,128], index: 0, kind: input, shape index: {}]
  %s1 = inlined_call_operand.vmem [shape: bf16[128,128], index: 1, kind: input, shape index: {}]
  %s2 = inlined_call_operand.vmem [shape: f32[1,128], index: 2, kind: input, shape index: {}]
  %s3 = inlined_call_operand.vmem [shape: f32[128,128], index: 3, kind: output, shape index: {}]
  %s4 = sld [smem:[#allocation0]]
  $region30: #{_lambda_.8} parent=0
    _
  %s6 = ssub.s32 1, %s4
  %s7 = scalar_select 0, %s6, %s4
  // Predicated region
  $region2: #{_lambda_.8} parent=0 // pred_check
    _
  $region3: #{_lambda_.8} parent=0 // pred_check_branch
    %9 = sbr.rel (0) target = $region5
  $region4: #{_lambda_.8} parent=0 // pred_region
    _
  $region5: #{_lambda_.8} parent=0 // pred_fallthru
    _
  // Predicated region
  $region6: #{_lambda_.8} parent=0 // pred_check
    _
  $region7: #{_lambda_.8} parent=0 // pred_check_branch
    %11 = sbr.rel (0) target = $region9
  $region8: #{_lambda_.8} parent=0 // pred_region
    _
  $region9: #{_lambda_.8} parent=0 // pred_fallthru
    _
  // Predicated region
  $region10: #{_lambda_.8} parent=0 // pred_check
    _
  $region11: #{_lambda_.8} parent=0 // pred_check_branch
    %13 = sbr.rel (0) target = $region13
  $region12: #{_lambda_.8} parent=0 // pred_region
    _
  $region13: #{_lambda_.8} parent=0 // pred_fallthru
    _
  %p16 = scmp.eq.s32.totalorder 0, 0
  // Predicated region
  $region14: #{_lambda_.8} parent=0 // pred_check
    %p17 = pneg %p16
  $region15: #{_lambda_.8} parent=0 // pred_check_branch
    %19 = sbr.rel (%p17) target = $region17
  $region16: #{_lambda_.8} parent=0 // pred_region
    %20 = vst [vmem:[#allocation2] sm:$0xff] 0.0
    %21 = vst [vmem:[#allocation2 + $0x8] sm:$0xff] 0.0
    %22 = vst [vmem:[#allocation2 + $0x10] sm:$0xff] 0.0
    %23 = vst [vmem:[#allocation2 + $0x18] sm:$0xff] 0.0
    %24 = vst [vmem:[#allocation2 + $0x20] sm:$0xff] 0.0
    %25 = vst [vmem:[#allocation2 + $0x28] sm:$0xff] 0.0
    %26 = vst [vmem:[#allocation2 + $0x30] sm:$0xff] 0.0
    %27 = vst [vmem:[#allocation2 + $0x38] sm:$0xff] 0.0
    %28 = vst [vmem:[#allocation2 + $0x40] sm:$0xff] 0.0
    %29 = vst [vmem:[#allocation2 + $0x48] sm:$0xff] 0.0
    %30 = vst [vmem:[#allocation2 + $0x50] sm:$0xff] 0.0
    %31 = vst [vmem:[#allocation2 + $0x58] sm:$0xff] 0.0
    %32 = vst [vmem:[#allocation2 + $0x60] sm:$0xff] 0.0
    %33 = vst [vmem:[#allocation2 + $0x68] sm:$0xff] 0.0
    %34 = vst [vmem:[#allocation2 + $0x70] sm:$0xff] 0.0
    %35 = vst [vmem:[#allocation2 + $0x78] sm:$0xff] 0.0
  $region17: #{_lambda_.8} parent=0 // pred_fallthru
    _
  %v36 = vld [vmem:[%s0] sm:$0xf]
  %v37 = vld [vmem:[%s0 + $0x4] sm:$0xf]
  %v38 = vld [vmem:[%s0 + $0x8] sm:$0xf]
  %v39 = vld [vmem:[%s0 + $0xc] sm:$0xf]
  %v40 = vld [vmem:[%s0 + $0x10] sm:$0xf]
  %v41 = vld [vmem:[%s0 + $0x14] sm:$0xf]
  %v42 = vld [vmem:[%s0 + $0x18] sm:$0xf]
  %v43 = vld [vmem:[%s0 + $0x1c] sm:$0xf]
  %v44 = vld [vmem:[%s0 + $0x20] sm:$0xf]
  %v45 = vld [vmem:[%s0 + $0x24] sm:$0xf]
  %v46 = vld [vmem:[%s0 + $0x28] sm:$0xf]
  %v47 = vld [vmem:[%s0 + $0x2c] sm:$0xf]
  %v48 = vld [vmem:[%s0 + $0x30] sm:$0xf]
  %v49 = vld [vmem:[%s0 + $0x34] sm:$0xf]
  %v50 = vld [vmem:[%s0 + $0x38] sm:$0xf]
  %v51 = vld [vmem:[%s0 + $0x3c] sm:$0xf]
  %vm52 = vcmp.ge.bf16.partialorder %v36, 0
  %vm53 = vcmp.ge.bf16.partialorder %v37, 0
  %vm54 = vcmp.ge.bf16.partialorder %v38, 0
  %vm55 = vcmp.ge.bf16.partialorder %v39, 0
  %vm56 = vcmp.ge.bf16.partialorder %v40, 0
  %vm57 = vcmp.ge.bf16.partialorder %v41, 0
  %vm58 = vcmp.ge.bf16.partialorder %v42, 0
  %vm59 = vcmp.ge.bf16.partialorder %v43, 0
  %vm60 = vcmp.ge.bf16.partialorder %v44, 0
  %vm61 = vcmp.ge.bf16.partialorder %v45, 0
  %vm62 = vcmp.ge.bf16.partialorder %v46, 0
  %vm63 = vcmp.ge.bf16.partialorder %v47, 0
  %vm64 = vcmp.ge.bf16.partialorder %v48, 0
  %vm65 = vcmp.ge.bf16.partialorder %v49, 0
  %vm66 = vcmp.ge.bf16.partialorder %v50, 0
  %vm67 = vcmp.ge.bf16.partialorder %v51, 0
  %v68 = vmul.bf16 %v36, 1045249613
  %v69 = vmul.bf16 %v37, 1045249613
  %v70 = vmul.bf16 %v38, 1045249613
  %v71 = vmul.bf16 %v39, 1045249613
  %v72 = vmul.bf16 %v40, 1045249613
  %v73 = vmul.bf16 %v41, 1045249613
  %v74 = vmul.bf16 %v42, 1045249613
  %v75 = vmul.bf16 %v43, 1045249613
  %v76 = vmul.bf16 %v44, 1045249613
  %v77 = vmul.bf16 %v45, 1045249613
  %v78 = vmul.bf16 %v46, 1045249613
  %v79 = vmul.bf16 %v47, 1045249613
  %v80 = vmul.bf16 %v48, 1045249613
  %v81 = vmul.bf16 %v49, 1045249613
  %v82 = vmul.bf16 %v50, 1045249613
  %v83 = vmul.bf16 %v51, 1045249613
  %v84 = vsel %vm52, %v36, %v68
  %v85 = vsel %vm53, %v37, %v69
  %v86 = vsel %vm54, %v38, %v70
  %v87 = vsel %vm55, %v39, %v71
  %v88 = vsel %vm56, %v40, %v72
  %v89 = vsel %vm57, %v41, %v73
  %v90 = vsel %vm58, %v42, %v74
  %v91 = vsel %vm59, %v43, %v75
  %v92 = vsel %vm60, %v44, %v76
  %v93 = vsel %vm61, %v45, %v77
  %v94 = vsel %vm62, %v46, %v78
  %v95 = vsel %vm63, %v47, %v79
  %v96 = vsel %vm64, %v48, %v80
  %v97 = vsel %vm65, %v49, %v81
  %v98 = vsel %vm66, %v50, %v82
  %v99 = vsel %vm67, %v51, %v83
  %v100 = vld [vmem:[#allocation2] sm:$0xff]
  %v101 = vld [vmem:[#allocation2 + $0x8] sm:$0xff]
  %v102 = vld [vmem:[#allocation2 + $0x10] sm:$0xff]
  %v103 = vld [vmem:[#allocation2 + $0x18] sm:$0xff]
  %v104 = vld [vmem:[#allocation2 + $0x20] sm:$0xff]
  %v105 = vld [vmem:[#allocation2 + $0x28] sm:$0xff]
  %v106 = vld [vmem:[#allocation2 + $0x30] sm:$0xff]
  %v107 = vld [vmem:[#allocation2 + $0x38] sm:$0xff]
  %v108 = vld [vmem:[#allocation2 + $0x40] sm:$0xff]
  %v109 = vld [vmem:[#allocation2 + $0x48] sm:$0xff]
  %v110 = vld [vmem:[#allocation2 + $0x50] sm:$0xff]
  %v111 = vld [vmem:[#allocation2 + $0x58] sm:$0xff]
  %v112 = vld [vmem:[#allocation2 + $0x60] sm:$0xff]
  %v113 = vld [vmem:[#allocation2 + $0x68] sm:$0xff]
  %v114 = vld [vmem:[#allocation2 + $0x70] sm:$0xff]
  %v115 = vld [vmem:[#allocation2 + $0x78] sm:$0xff]
  %v116 = vld [vmem:[%s1] sm:$0xf]
  %v117 = vld [vmem:[%s1 + $0x4] sm:$0xf]
  %v118 = vld [vmem:[%s1 + $0x8] sm:$0xf]
  %v119 = vld [vmem:[%s1 + $0xc] sm:$0xf]
  %v120 = vld [vmem:[%s1 + $0x10] sm:$0xf]
  %v121 = vld [vmem:[%s1 + $0x14] sm:$0xf]
  %v122 = vld [vmem:[%s1 + $0x18] sm:$0xf]
  %v123 = vld [vmem:[%s1 + $0x1c] sm:$0xf]
  %v124 = vld [vmem:[%s1 + $0x20] sm:$0xf]
  %v125 = vld [vmem:[%s1 + $0x24] sm:$0xf]
  %v126 = vld [vmem:[%s1 + $0x28] sm:$0xf]
  %v127 = vld [vmem:[%s1 + $0x2c] sm:$0xf]
  %v128 = vld [vmem:[%s1 + $0x30] sm:$0xf]
  %v129 = vld [vmem:[%s1 + $0x34] sm:$0xf]
  %v130 = vld [vmem:[%s1 + $0x38] sm:$0xf]
  %v131 = vld [vmem:[%s1 + $0x3c] sm:$0xf]
  %v148 = vunpack.c.l.b16 %v84
  %v149 = vunpack.c.l.b16 %v85
  %v150 = vunpack.c.l.b16 %v86
  %v151 = vunpack.c.l.b16 %v87
  %v152 = vunpack.c.l.b16 %v88
  %v153 = vunpack.c.l.b16 %v89
  %v154 = vunpack.c.l.b16 %v90
  %v155 = vunpack.c.l.b16 %v91
  %v156 = vunpack.c.l.b16 %v92
  %v157 = vunpack.c.l.b16 %v93
  %v158 = vunpack.c.l.b16 %v94
  %v159 = vunpack.c.l.b16 %v95
  %v160 = vunpack.c.l.b16 %v96
  %v161 = vunpack.c.l.b16 %v97
  %v162 = vunpack.c.l.b16 %v98
  %v163 = vunpack.c.l.b16 %v99
  %v164 = vpack.c.b16 %v149, %v148
  %v165 = vpack.c.b16 %v151, %v150
  %v166 = vpack.c.b16 %v153, %v152
  %v167 = vpack.c.b16 %v155, %v154
  %v168 = vpack.c.b16 %v157, %v156
  %v169 = vpack.c.b16 %v159, %v158
  %v170 = vpack.c.b16 %v161, %v160
  %v171 = vpack.c.b16 %v163, %v162
  %v196 = vunpack.c.l.b16 %v116
  %v197 = vunpack.c.l.b16 %v117
  %v198 = vunpack.c.l.b16 %v118
  %v199 = vunpack.c.l.b16 %v119
  %v200 = vunpack.c.l.b16 %v120
  %v201 = vunpack.c.l.b16 %v121
  %v202 = vunpack.c.l.b16 %v122
  %v203 = vunpack.c.l.b16 %v123
  %v204 = vunpack.c.l.b16 %v124
  %v205 = vunpack.c.l.b16 %v125
  %v206 = vunpack.c.l.b16 %v126
  %v207 = vunpack.c.l.b16 %v127
  %v208 = vunpack.c.l.b16 %v128
  %v209 = vunpack.c.l.b16 %v129
  %v210 = vunpack.c.l.b16 %v130
  %v211 = vunpack.c.l.b16 %v131
  %v212 = vpack.c.b16 %v197, %v196
  %v213 = vpack.c.b16 %v199, %v198
  %v214 = vpack.c.b16 %v201, %v200
  %v215 = vpack.c.b16 %v203, %v202
  %v216 = vpack.c.b16 %v205, %v204
  %v217 = vpack.c.b16 %v207, %v206
  %v218 = vpack.c.b16 %v209, %v208
  %v219 = vpack.c.b16 %v211, %v210
  %228 = vmatprep.subr.bf16.mxu0 0
  %229 = vmatpush1.bf16.msra.mxu0 %v212
  %230 = vmatprep.subr.bf16.mxu0 0
  %231 = vmatpush1.bf16.msra.mxu0 %v213
  %232 = vmatprep.subr.bf16.mxu0 0
  %233 = vmatpush1.bf16.msra.mxu0 %v214
  %234 = vmatprep.subr.bf16.mxu0 0
  %235 = vmatpush1.bf16.msra.mxu0 %v215
  %236 = vmatprep.subr.bf16.mxu0 0
  %237 = vmatpush1.bf16.msra.mxu0 %v216
  %238 = vmatprep.subr.bf16.mxu0 0
  %239 = vmatpush1.bf16.msra.mxu0 %v217
  %240 = vmatprep.subr.bf16.mxu0 0
  %241 = vmatpush1.bf16.msra.mxu0 %v218
  %242 = vmatprep.subr.bf16.mxu0 0
  %243 = vmatpush1.bf16.msra.mxu0 %v219
  %244 = vmatprep.subr.bf16.mxu0 0
  %245 = vmatpush1.bf16.msra.mxu0 0
  %246 = vmatprep.subr.bf16.mxu0 0
  %247 = vmatpush1.bf16.msra.mxu0 0
  %248 = vmatprep.subr.bf16.mxu0 0
  %249 = vmatpush1.bf16.msra.mxu0 0
  %250 = vmatprep.subr.bf16.mxu0 0
  %251 = vmatpush1.bf16.msra.mxu0 0
  %252 = vmatprep.subr.bf16.mxu0 0
  %253 = vmatpush1.bf16.msra.mxu0 0
  %254 = vmatprep.subr.bf16.mxu0 0
  %255 = vmatpush1.bf16.msra.mxu0 0
  %256 = vmatprep.subr.bf16.mxu0 0
  %257 = vmatpush1.bf16.msra.mxu0 0
  %258 = vmatprep.subr.bf16.mxu0 0
  %259 = vmatpush1.bf16.msra.mxu0 0
  %260 = vmatprep.mubr.bf16.mxu0 0
  %261 = vmatmul.mubr.bf16.gmra.mrb[0].mxu0 %v164
  %v262 = vpop.f32.mrb[0].mxu0
  %v263 = vadd.f32 0.0, %v262
  %v264 = vpop.f32.mrb[0].mxu0
  %v265 = vpop.f32.mrb[0].mxu0
  %v266 = vadd.f32 0.0, %v265
  %v267 = vpop.f32.mrb[0].mxu0
  %268 = vmatprep.mubr.bf16.mxu0 0
  %269 = vmatmul.mubr.bf16.gmra.mrb[0].mxu0 %v165
  %v270 = vpop.f32.mrb[0].mxu0
  %v271 = vadd.f32 0.0, %v270
  %v272 = vpop.f32.mrb[0].mxu0
  %v273 = vpop.f32.mrb[0].mxu0
  %v274 = vadd.f32 0.0, %v273
  %v275 = vpop.f32.mrb[0].mxu0
  %276 = vmatprep.mubr.bf16.mxu0 0
  %277 = vmatmul.mubr.bf16.gmra.mrb[0].mxu0 %v166
  %v278 = vpop.f32.mrb[0].mxu0
  %v279 = vadd.f32 0.0, %v278
  %v280 = vpop.f32.mrb[0].mxu0
  %v281 = vpop.f32.mrb[0].mxu0
  %v282 = vadd.f32 0.0, %v281
  %v283 = vpop.f32.mrb[0].mxu0
  %284 = vmatprep.mubr.bf16.mxu0 0
  %285 = vmatmul.mubr.bf16.gmra.mrb[0].mxu0 %v167
  %v286 = vpop.f32.mrb[0].mxu0
  %v287 = vadd.f32 0.0, %v286
  %v288 = vpop.f32.mrb[0].mxu0
  %v289 = vpop.f32.mrb[0].mxu0
  %v290 = vadd.f32 0.0, %v289
  %v291 = vpop.f32.mrb[0].mxu0
  %292 = vmatprep.mubr.bf16.mxu0 0
  %293 = vmatmul.mubr.bf16.gmra.mrb[0].mxu0 %v168
  %v294 = vpop.f32.mrb[0].mxu0
  %v295 = vadd.f32 0.0, %v294
  %v296 = vpop.f32.mrb[0].mxu0
  %v297 = vpop.f32.mrb[0].mxu0
  %v298 = vadd.f32 0.0, %v297
  %v299 = vpop.f32.mrb[0].mxu0
  %300 = vmatprep.mubr.bf16.mxu0 0
  %301 = vmatmul.mubr.bf16.gmra.mrb[0].mxu0 %v169
  %v302 = vpop.f32.mrb[0].mxu0
  %v303 = vadd.f32 0.0, %v302
  %v304 = vpop.f32.mrb[0].mxu0
  %v305 = vpop.f32.mrb[0].mxu0
  %v306 = vadd.f32 0.0, %v305
  %v307 = vpop.f32.mrb[0].mxu0
  %308 = vmatprep.mubr.bf16.mxu0 0
  %309 = vmatmul.mubr.bf16.gmra.mrb[0].mxu0 %v170
  %v310 = vpop.f32.mrb[0].mxu0
  %v311 = vadd.f32 0.0, %v310
  %v312 = vpop.f32.mrb[0].mxu0
  %v313 = vpop.f32.mrb[0].mxu0
  %v314 = vadd.f32 0.0, %v313
  %v315 = vpop.f32.mrb[0].mxu0
  %316 = vmatprep.mubr.bf16.mxu0 0
  %317 = vmatmul.mubr.bf16.gmra.mrb[0].mxu0 %v171
  %v318 = vpop.f32.mrb[0].mxu0
  %v319 = vadd.f32 0.0, %v318
  %v320 = vpop.f32.mrb[0].mxu0
  %v321 = vpop.f32.mrb[0].mxu0
  %v322 = vadd.f32 0.0, %v321
  %v323 = vpop.f32.mrb[0].mxu0
  %324 = vdwg.mxu0
  %v325 = vadd.f32 %v100, %v263
  %v326 = vadd.f32 %v101, %v266
  %v327 = vadd.f32 %v102, %v271
  %v328 = vadd.f32 %v103, %v274
  %v329 = vadd.f32 %v104, %v279
  %v330 = vadd.f32 %v105, %v282
  %v331 = vadd.f32 %v106, %v287
  %v332 = vadd.f32 %v107, %v290
  %v333 = vadd.f32 %v108, %v295
  %v334 = vadd.f32 %v109, %v298
  %v335 = vadd.f32 %v110, %v303
  %v336 = vadd.f32 %v111, %v306
  %v337 = vadd.f32 %v112, %v311
  %v338 = vadd.f32 %v113, %v314
  %v339 = vadd.f32 %v114, %v319
  %v340 = vadd.f32 %v115, %v322
  %341 = vst [vmem:[#allocation2] sm:$0xff] %v325
  %342 = vst [vmem:[#allocation2 + $0x8] sm:$0xff] %v326
  %343 = vst [vmem:[#allocation2 + $0x10] sm:$0xff] %v327
  %344 = vst [vmem:[#allocation2 + $0x18] sm:$0xff] %v328
  %345 = vst [vmem:[#allocation2 + $0x20] sm:$0xff] %v329
  %346 = vst [vmem:[#allocation2 + $0x28] sm:$0xff] %v330
  %347 = vst [vmem:[#allocation2 + $0x30] sm:$0xff] %v331
  %348 = vst [vmem:[#allocation2 + $0x38] sm:$0xff] %v332
  %349 = vst [vmem:[#allocation2 + $0x40] sm:$0xff] %v333
  %350 = vst [vmem:[#allocation2 + $0x48] sm:$0xff] %v334
  %351 = vst [vmem:[#allocation2 + $0x50] sm:$0xff] %v335
  %352 = vst [vmem:[#allocation2 + $0x58] sm:$0xff] %v336
  %353 = vst [vmem:[#allocation2 + $0x60] sm:$0xff] %v337
  %354 = vst [vmem:[#allocation2 + $0x68] sm:$0xff] %v338
  %355 = vst [vmem:[#allocation2 + $0x70] sm:$0xff] %v339
  %356 = vst [vmem:[#allocation2 + $0x78] sm:$0xff] %v340
  // Predicated region
  $region18: #{_lambda_.8} parent=0 // pred_check
    %p357 = pneg %p16
  $region19: #{_lambda_.8} parent=0 // pred_check_branch
    %359 = sbr.rel (%p357) target = $region21
  $region20: #{_lambda_.8} parent=0 // pred_region
    %v360 = vld [vmem:[#allocation2] sm:$0xff]
    %v361 = vld [vmem:[#allocation2 + $0x8] sm:$0xff]
    %v362 = vld [vmem:[#allocation2 + $0x10] sm:$0xff]
    %v363 = vld [vmem:[#allocation2 + $0x18] sm:$0xff]
    %v364 = vld [vmem:[#allocation2 + $0x20] sm:$0xff]
    %v365 = vld [vmem:[#allocation2 + $0x28] sm:$0xff]
    %v366 = vld [vmem:[#allocation2 + $0x30] sm:$0xff]
    %v367 = vld [vmem:[#allocation2 + $0x38] sm:$0xff]
    %v368 = vld [vmem:[#allocation2 + $0x40] sm:$0xff]
    %v369 = vld [vmem:[#allocation2 + $0x48] sm:$0xff]
    %v370 = vld [vmem:[#allocation2 + $0x50] sm:$0xff]
    %v371 = vld [vmem:[#allocation2 + $0x58] sm:$0xff]
    %v372 = vld [vmem:[#allocation2 + $0x60] sm:$0xff]
    %v373 = vld [vmem:[#allocation2 + $0x68] sm:$0xff]
    %v374 = vld [vmem:[#allocation2 + $0x70] sm:$0xff]
    %v375 = vld [vmem:[#allocation2 + $0x78] sm:$0xff]
    %v376 = vld [vmem:[%s2] sm:$0x1]
    %v378 = vlaneseq
    %v379 = vshrl.u32 %v378, 7
    %v380 = vsub.s32 0, %v379
    %v381 = vrot.slane %v376, %v380
    %v383 = vadd.f32 %v360, %v381
    %v384 = vadd.f32 %v361, %v381
    %v385 = vadd.f32 %v362, %v381
    %v386 = vadd.f32 %v363, %v381
    %v387 = vadd.f32 %v364, %v381
    %v388 = vadd.f32 %v365, %v381
    %v389 = vadd.f32 %v366, %v381
    %v390 = vadd.f32 %v367, %v381
    %v391 = vadd.f32 %v368, %v381
    %v392 = vadd.f32 %v369, %v381
    %v393 = vadd.f32 %v370, %v381
    %v394 = vadd.f32 %v371, %v381
    %v395 = vadd.f32 %v372, %v381
    %v396 = vadd.f32 %v373, %v381
    %v397 = vadd.f32 %v374, %v381
    %v398 = vadd.f32 %v375, %v381
    %399 = vst [vmem:[%s3] sm:$0xff] %v383
    %400 = vst [vmem:[%s3 + $0x8] sm:$0xff] %v384
    %401 = vst [vmem:[%s3 + $0x10] sm:$0xff] %v385
    %402 = vst [vmem:[%s3 + $0x18] sm:$0xff] %v386
    %403 = vst [vmem:[%s3 + $0x20] sm:$0xff] %v387
    %404 = vst [vmem:[%s3 + $0x28] sm:$0xff] %v388
    %405 = vst [vmem:[%s3 + $0x30] sm:$0xff] %v389
    %406 = vst [vmem:[%s3 + $0x38] sm:$0xff] %v390
    %407 = vst [vmem:[%s3 + $0x40] sm:$0xff] %v391
    %408 = vst [vmem:[%s3 + $0x48] sm:$0xff] %v392
    %409 = vst [vmem:[%s3 + $0x50] sm:$0xff] %v393
    %410 = vst [vmem:[%s3 + $0x58] sm:$0xff] %v394
    %411 = vst [vmem:[%s3 + $0x60] sm:$0xff] %v395
    %412 = vst [vmem:[%s3 + $0x68] sm:$0xff] %v396
    %413 = vst [vmem:[%s3 + $0x70] sm:$0xff] %v397
    %414 = vst [vmem:[%s3 + $0x78] sm:$0xff] %v398
  $region21: #{_lambda_.8} parent=0 // pred_fallthru
    _
  // Predicated region
  $region22: #{_lambda_.8} parent=0 // pred_check
    _
  $region23: #{_lambda_.8} parent=0 // pred_check_branch
    %416 = sbr.rel (0) target = $region25
  $region24: #{_lambda_.8} parent=0 // pred_region
    _
  $region25: #{_lambda_.8} parent=0 // pred_fallthru
    _
  // Predicated region
  $region26: #{_lambda_.8} parent=0 // pred_check
    _
  $region27: #{_lambda_.8} parent=0 // pred_check_branch
    %418 = sbr.rel (0) target = $region29
  $region28: #{_lambda_.8} parent=0 // pred_region
    _
  $region29: #{_lambda_.8} parent=0 // pred_fallthru
    _

// kernel: _lambda_.9
$region0: #{_lambda_.9}
  #allocation0 [shape = 'u32[]', space=smem, size = 0x4, offset = 0x4, fixed_abs, tag = 'smem constant byte address 0x4 - core index']
  #allocation1 [shape = 'u32[144,128]{1,0:T(1,128)}', space=vmem, size = 0x12000, scoped, tag = 'internal scratch']
  #allocation2 [shape = 'f32[128,128]{1,0:T(8,128)}', space=vmem, size = 0x10000, scoped, tag = 'scratch operand']
  %s0 = inlined_call_operand.vmem [shape: bf16[256,128], index: 0, kind: input, shape index: {}]
  %s1 = inlined_call_operand.vmem [shape: bf16[128,128], index: 1, kind: input, shape index: {}]
  %s2 = inlined_call_operand.vmem [shape: f32[1,128], index: 2, kind: input, shape index: {}]
  %s3 = inlined_call_operand.vmem [shape: f32[256,128], index: 3, kind: output, shape index: {}]
  %s4 = sld [smem:[#allocation0]]
  $region53: #{_lambda_.9} parent=0
    _
  %s6 = ssub.s32 1, %s4
  %s7 = scalar_select 0, %s6, %s4
  loop: start=0, step=1, limit=4
  $region2: #{_lambda_.9} parent=0 // loop_pre_header
    _
  $region3: #{_lambda_.9} parent=0 // loop_header
    %s9 = sphi 0, %s13
    %p10 = scmp.ge.s32.totalorder %s9, 4
    %s16 = sphi 0, %s35
    %s17 = sphi 0, %s31
    %s18 = sphi 0, %s27
    %s19 = sphi 0, %s16
    %s20 = sphi 0, %s17
    %s21 = sphi 0, %s18
    %s22 = sphi 0, %s19
    %s23 = sphi 0, %s20
    %s24 = sphi 0, %s21
    %s40 = sphi 0, %s42
    %s43 = sphi 0, %s40
    %s44 = sphi 0, %s43
    %s60 = sphi 0, %s44
    %s68 = sphi 0, %s70
    %s71 = sphi 0, %s68
    %s72 = sphi 0, %s71
    %s88 = sphi 0, %s72
    %s94 = sphi 0, %s96
    %s97 = sphi 0, %s94
    %s98 = sphi 0, %s97
    %s114 = sphi 0, %s98
    %s122 = sphi 0, %s124
    %s125 = sphi 0, %s122
    %s126 = sphi 0, %s125
    %s142 = sphi 0, %s126
  $region4: #{_lambda_.9} parent=0 // loop_header_branch
    %12 = sbr.rel (%p10) target = $region8
  $region5: #{_lambda_.9} parent=0 // loop_body
    %s14 = ssub.s32 %s9, 1
    %s15 = ssub.s32 %s9, 2
    %s25 = sadd.s32 1, %s18
    %p26 = scmp.ge.s32.totalorder %s25, 1
    %s27 = scalar_select %p26, 0, %s25
    %s28 = sadd.s32 1, %s17
    %s29 = scalar_select %p26, %s28, %s17
    %p30 = scmp.ge.s32.totalorder %s29, 1
    %s31 = scalar_select %p30, 0, %s29
    %s32 = sadd.s32 1, %s16
    %s33 = scalar_select %p30, %s32, %s16
    %p34 = scmp.ge.s32.totalorder %s33, 2
    %s35 = scalar_select %p34, 0, %s33
    %s36 = ssub.s32 %s16, %s35
    %s37 = ssub.s32 %s18, %s27
    %s38 = sor.u32 %s36, %s37
    %p39 = scmp.eq.s32.totalorder %s38, 0
    %s41 = sadd.s32 %s40, 1
    %s42 = scalar_select %p39, %s40, %s41
    %p45 = pneg %p39
    %p46 = scmp.eq.s32.totalorder %s9, 1
    %p47 = por %p45, %p46
    %p48 = scmp.ne.s32.totalorder %s40, %s43
    %p49 = scmp.eq.s32.totalorder %s9, 0
    %p50 = por %p48, %p49
    %p51 = scmp.ne.s32.totalorder %s40, %s43
    %p52 = scmp.eq.s32.totalorder %s14, 1
    %p53 = por %p51, %p52
    %p54 = scmp.ne.s32.totalorder %s43, %s44
    %p55 = scmp.eq.s32.totalorder %s14, 0
    %p56 = por %p54, %p55
    %p57 = scmp.ne.s32.totalorder %s43, %s44
    %p58 = scmp.eq.s32.totalorder %s15, 1
    %p59 = por %p57, %p58
    %p61 = scmp.ne.s32.totalorder %s44, %s60
    %p62 = scmp.eq.s32.totalorder %s15, 0
    %p63 = por %p61, %p62
    %s64 = ssub.s32 %s18, %s27
    %s65 = ssub.s32 %s17, %s31
    %s66 = sor.u32 %s64, %s65
    %p67 = scmp.eq.s32.totalorder %s66, 0
    %s69 = sadd.s32 %s68, 1
    %s70 = scalar_select %p67, %s68, %s69
    %p73 = pneg %p67
    %p74 = scmp.eq.s32.totalorder %s9, 1
    %p75 = por %p73, %p74
    %p76 = scmp.ne.s32.totalorder %s68, %s71
    %p77 = scmp.eq.s32.totalorder %s9, 0
    %p78 = por %p76, %p77
    %p79 = scmp.ne.s32.totalorder %s68, %s71
    %p80 = scmp.eq.s32.totalorder %s14, 1
    %p81 = por %p79, %p80
    %p82 = scmp.ne.s32.totalorder %s71, %s72
    %p83 = scmp.eq.s32.totalorder %s14, 0
    %p84 = por %p82, %p83
    %p85 = scmp.ne.s32.totalorder %s71, %s72
    %p86 = scmp.eq.s32.totalorder %s15, 1
    %p87 = por %p85, %p86
    %p89 = scmp.ne.s32.totalorder %s72, %s88
    %p90 = scmp.eq.s32.totalorder %s15, 0
    %p91 = por %p89, %p90
    %s92 = ssub.s32 %s17, %s31
    %p93 = scmp.eq.s32.totalorder %s92, 0
    %s95 = sadd.s32 %s94, 1
    %s96 = scalar_select %p93, %s94, %s95
    %p99 = pneg %p93
    %p100 = scmp.eq.s32.totalorder %s9, 1
    %p101 = por %p99, %p100
    %p102 = scmp.ne.s32.totalorder %s94, %s97
    %p103 = scmp.eq.s32.totalorder %s9, 0
    %p104 = por %p102, %p103
    %p105 = scmp.ne.s32.totalorder %s94, %s97
    %p106 = scmp.eq.s32.totalorder %s14, 1
    %p107 = por %p105, %p106
    %p108 = scmp.ne.s32.totalorder %s97, %s98
    %p109 = scmp.eq.s32.totalorder %s14, 0
    %p110 = por %p108, %p109
    %p111 = scmp.ne.s32.totalorder %s97, %s98
    %p112 = scmp.eq.s32.totalorder %s15, 1
    %p113 = por %p111, %p112
    %p115 = scmp.ne.s32.totalorder %s98, %s114
    %p116 = scmp.eq.s32.totalorder %s15, 0
    %p117 = por %p115, %p116
    %s118 = ssub.s32 %s16, %s35
    %s119 = ssub.s32 %s17, %s31
    %s120 = sor.u32 %s118, %s119
    %p121 = scmp.eq.s32.totalorder %s120, 0
    %s123 = sadd.s32 %s122, 1
    %s124 = scalar_select %p121, %s122, %s123
    %p127 = pneg %p121
    %p128 = scmp.eq.s32.totalorder %s9, 1
    %p129 = por %p127, %p128
    %p130 = scmp.ne.s32.totalorder %s122, %s125
    %p131 = scmp.eq.s32.totalorder %s9, 0
    %p132 = por %p130, %p131
    %p133 = scmp.ne.s32.totalorder %s122, %s125
    %p134 = scmp.eq.s32.totalorder %s14, 1
    %p135 = por %p133, %p134
    %p136 = scmp.ne.s32.totalorder %s125, %s126
    %p137 = scmp.eq.s32.totalorder %s14, 0
    %p138 = por %p136, %p137
    %p139 = scmp.ne.s32.totalorder %s125, %s126
    %p140 = scmp.eq.s32.totalorder %s15, 1
    %p141 = por %p139, %p140
    %p143 = scmp.ne.s32.totalorder %s126, %s142
    %p144 = scmp.eq.s32.totalorder %s15, 0
    %p145 = por %p143, %p144
    %p146 = scmp.le.s32.totalorder 1, %s9
    %p147 = scmp.lt.s32.totalorder %s9, 3
    %p148 = pnand %p146, %p147
    %p149 = pneg %p148
    // Predicated region
    $region9: #{_lambda_.9} parent=5 // pred_check
      _
    $region10: #{_lambda_.9} parent=5 // pred_check_branch
      %151 = sbr.rel (%p148) target = $region12
    $region11: #{_lambda_.9} parent=5 // pred_region
      %s152 = ssub.s32 %s9, 1
      // Predicated region
      $region13: #{_lambda_.9} parent=11 // pred_check
        %p153 = pneg %p84
      $region14: #{_lambda_.9} parent=11 // pred_check_branch
        %155 = sbr.rel (%p153) target = $region16
      $region15: #{_lambda_.9} parent=11 // pred_region
        %s156 = smul.u32 16, %s21
        %p157 = scmp.lt.s32.totalorder %s156, 15
        %s158 = scalar_select %p157, %s156, 15
        %p159 = scmp.lt.s32.totalorder %s20, 0
        %s160 = scalar_select %p159, %s20, 0
        %s161 = sadd.s32 %s160, %s158
        %s162 = smul.addr %s161, 4
        %s163 = scalar_lea.vmem %s1, %s162
        %s164 = smul.u32 16, %s21
      $region16: #{_lambda_.9} parent=11 // pred_fallthru
        _
      // Predicated region
      $region17: #{_lambda_.9} parent=11 // pred_check
        %p165 = pneg %p110
      $region18: #{_lambda_.9} parent=11 // pred_check_branch
        %167 = sbr.rel (%p165) target = $region20
      $region19: #{_lambda_.9} parent=11 // pred_region
        %p168 = scmp.lt.s32.totalorder %s20, 0
        %s169 = scalar_select %p168, %s20, 0
        %s170 = scalar_lea.vmem %s2, %s169
      $region20: #{_lambda_.9} parent=11 // pred_fallthru
        _
    $region12: #{_lambda_.9} parent=5 // pred_fallthru
      _
    %p171 = scmp.lt.s32.totalorder %s9, 2
    // Predicated region
    $region21: #{_lambda_.9} parent=5 // pred_check
      %p172 = pneg %p171
    $region22: #{_lambda_.9} parent=5 // pred_check_branch
      %174 = sbr.rel (%p172) target = $region24
    $region23: #{_lambda_.9} parent=5 // pred_region
      // Predicated region
      $region25: #{_lambda_.9} parent=23 // pred_check
        %p175 = pneg %p50
      $region26: #{_lambda_.9} parent=23 // pred_check_branch
        %177 = sbr.rel (%p175) target = $region28
      $region27: #{_lambda_.9} parent=23 // pred_region
        %s178 = smul.u32 16, %s16
        %p179 = scmp.lt.s32.totalorder %s178, 31
        %s180 = scalar_select %p179, %s178, 31
        %p181 = scmp.lt.s32.totalorder %s18, 0
        %s182 = scalar_select %p181, %s18, 0
        %s183 = sadd.s32 %s182, %s180
        %s184 = smul.addr %s183, 4
        %s185 = scalar_lea.vmem %s0, %s184
        %s186 = smul.u32 16, %s16
      $region28: #{_lambda_.9} parent=23 // pred_fallthru
        _
    $region24: #{_lambda_.9} parent=5 // pred_fallthru
      _
    %p187 = scmp.le.s32.totalorder 1, %s9
    %p188 = scmp.lt.s32.totalorder %s9, 3
    %p189 = pnand %p187, %p188
    %p190 = pneg %p189
    // Predicated region
    $region29: #{_lambda_.9} parent=5 // pred_check
      _
    $region30: #{_lambda_.9} parent=5 // pred_check_branch
      %192 = sbr.rel (%p189) target = $region32
    $region31: #{_lambda_.9} parent=5 // pred_region
      %s193 = ssub.s32 %s9, 1
      %s194 = smul.u32 16, %s19
      %p195 = scmp.lt.s32.totalorder %s194, 31
      %s196 = scalar_select %p195, %s194, 31
      %p197 = scmp.lt.s32.totalorder %s21, 0
      %s198 = scalar_select %p197, %s21, 0
      %s199 = sadd.s32 %s198, %s196
      %s200 = smul.addr %s199, 4
      %s201 = scalar_lea.vmem %s0, %s200
      %p202 = pneg %p56
      %p203 = pneg %p53
      %s204 = smul.u32 16, %s21
      %p205 = scmp.lt.s32.totalorder %s204, 15
      %s206 = scalar_select %p205, %s204, 15
      %p207 = scmp.lt.s32.totalorder %s20, 0
      %s208 = scalar_select %p207, %s20, 0
      %s209 = sadd.s32 %s208, %s206
      %s210 = smul.addr %s209, 4
      %s211 = scalar_lea.vmem %s1, %s210
      %p212 = pneg %p84
      %p213 = pneg %p81
      %p214 = scmp.lt.s32.totalorder %s20, 0
      %s215 = scalar_select %p214, %s20, 0
      %s216 = scalar_lea.vmem %s2, %s215
      %p217 = pneg %p110
      %p218 = pneg %p107
      %p219 = pneg %p138
      %p220 = pneg %p135
      %s221 = smul.u32 16, %s19
      %p222 = scmp.lt.s32.totalorder %s221, 31
      %s223 = scalar_select %p222, %s221, 31
      %p224 = scmp.lt.s32.totalorder %s20, 0
      %s225 = scalar_select %p224, %s20, 0
      %s226 = sadd.s32 %s225, %s223
      %s227 = smul.addr %s226, 8
      %s228 = scalar_lea.vmem %s3, %s227
      %s229 = smul.u32 16, %s19
      %p230 = scmp.lt.s32.totalorder %s229, 31
      %s231 = scalar_select %p230, %s229, 31
      %p232 = scmp.lt.s32.totalorder %s21, 0
      %s233 = scalar_select %p232, %s21, 0
      %s234 = sadd.s32 %s233, %s231
      %s235 = smul.addr %s234, 4
      %s236 = scalar_lea.vmem %s0, %s235
      %s237 = smul.u32 16, %s19
      %s238 = smul.u32 16, %s21
      %p239 = scmp.lt.s32.totalorder %s238, 15
      %s240 = scalar_select %p239, %s238, 15
      %p241 = scmp.lt.s32.totalorder %s20, 0
      %s242 = scalar_select %p241, %s20, 0
      %s243 = sadd.s32 %s242, %s240
      %s244 = smul.addr %s243, 4
      %s245 = scalar_lea.vmem %s1, %s244
      %s246 = smul.u32 16, %s21
      %p247 = scmp.lt.s32.totalorder %s20, 0
      %s248 = scalar_select %p247, %s20, 0
      %s249 = scalar_lea.vmem %s2, %s248
      %s250 = smul.u32 16, %s19
      %p251 = scmp.lt.s32.totalorder %s250, 31
      %s252 = scalar_select %p251, %s250, 31
      %p253 = scmp.lt.s32.totalorder %s20, 0
      %s254 = scalar_select %p253, %s20, 0
      %s255 = sadd.s32 %s254, %s252
      %s256 = smul.addr %s255, 8
      %s257 = scalar_lea.vmem %s3, %s256
      %s258 = smul.u32 16, %s19
      %p260 = scmp.eq.s32.totalorder %s21, 0
      // Predicated region
      $region33: #{_lambda_.9} parent=31 // pred_check
        %p261 = pneg %p260
      $region34: #{_lambda_.9} parent=31 // pred_check_branch
        %263 = sbr.rel (%p261) target = $region36
      $region35: #{_lambda_.9} parent=31 // pred_region
        %264 = vst [vmem:[#allocation2] sm:$0xff] 0.0
        %265 = vst [vmem:[#allocation2 + $0x8] sm:$0xff] 0.0
        %266 = vst [vmem:[#allocation2 + $0x10] sm:$0xff] 0.0
        %267 = vst [vmem:[#allocation2 + $0x18] sm:$0xff] 0.0
        %268 = vst [vmem:[#allocation2 + $0x20] sm:$0xff] 0.0
        %269 = vst [vmem:[#allocation2 + $0x28] sm:$0xff] 0.0
        %270 = vst [vmem:[#allocation2 + $0x30] sm:$0xff] 0.0
        %271 = vst [vmem:[#allocation2 + $0x38] sm:$0xff] 0.0
        %272 = vst [vmem:[#allocation2 + $0x40] sm:$0xff] 0.0
        %273 = vst [vmem:[#allocation2 + $0x48] sm:$0xff] 0.0
        %274 = vst [vmem:[#allocation2 + $0x50] sm:$0xff] 0.0
        %275 = vst [vmem:[#allocation2 + $0x58] sm:$0xff] 0.0
        %276 = vst [vmem:[#allocation2 + $0x60] sm:$0xff] 0.0
        %277 = vst [vmem:[#allocation2 + $0x68] sm:$0xff] 0.0
        %278 = vst [vmem:[#allocation2 + $0x70] sm:$0xff] 0.0
        %279 = vst [vmem:[#allocation2 + $0x78] sm:$0xff] 0.0
      $region36: #{_lambda_.9} parent=31 // pred_fallthru
        _
      %v280 = vld [vmem:[%s236] sm:$0xf]
      %v281 = vld [vmem:[%s236 + $0x4] sm:$0xf]
      %v282 = vld [vmem:[%s236 + $0x8] sm:$0xf]
      %v283 = vld [vmem:[%s236 + $0xc] sm:$0xf]
      %v284 = vld [vmem:[%s236 + $0x10] sm:$0xf]
      %v285 = vld [vmem:[%s236 + $0x14] sm:$0xf]
      %v286 = vld [vmem:[%s236 + $0x18] sm:$0xf]
      %v287 = vld [vmem:[%s236 + $0x1c] sm:$0xf]
      %v288 = vld [vmem:[%s236 + $0x20] sm:$0xf]
      %v289 = vld [vmem:[%s236 + $0x24] sm:$0xf]
      %v290 = vld [vmem:[%s236 + $0x28] sm:$0xf]
      %v291 = vld [vmem:[%s236 + $0x2c] sm:$0xf]
      %v292 = vld [vmem:[%s236 + $0x30] sm:$0xf]
      %v293 = vld [vmem:[%s236 + $0x34] sm:$0xf]
      %v294 = vld [vmem:[%s236 + $0x38] sm:$0xf]
      %v295 = vld [vmem:[%s236 + $0x3c] sm:$0xf]
      %v296 = vmax.bf16 %v280, 0
      %v297 = vmax.bf16 %v281, 0
      %v298 = vmax.bf16 %v282, 0
      %v299 = vmax.bf16 %v283, 0
      %v300 = vmax.bf16 %v284, 0
      %v301 = vmax.bf16 %v285, 0
      %v302 = vmax.bf16 %v286, 0
      %v303 = vmax.bf16 %v287, 0
      %v304 = vmax.bf16 %v288, 0
      %v305 = vmax.bf16 %v289, 0
      %v306 = vmax.bf16 %v290, 0
      %v307 = vmax.bf16 %v291, 0
      %v308 = vmax.bf16 %v292, 0
      %v309 = vmax.bf16 %v293, 0
      %v310 = vmax.bf16 %v294, 0
      %v311 = vmax.bf16 %v295, 0
      %v312 = vld [vmem:[#allocation2] sm:$0xff]
      %v313 = vld [vmem:[#allocation2 + $0x8] sm:$0xff]
      %v314 = vld [vmem:[#allocation2 + $0x10] sm:$0xff]
      %v315 = vld [vmem:[#allocation2 + $0x18] sm:$0xff]
      %v316 = vld [vmem:[#allocation2 + $0x20] sm:$0xff]
      %v317 = vld [vmem:[#allocation2 + $0x28] sm:$0xff]
      %v318 = vld [vmem:[#allocation2 + $0x30] sm:$0xff]
      %v319 = vld [vmem:[#allocation2 + $0x38] sm:$0xff]
      %v320 = vld [vmem:[#allocation2 + $0x40] sm:$0xff]
      %v321 = vld [vmem:[#allocation2 + $0x48] sm:$0xff]
      %v322 = vld [vmem:[#allocation2 + $0x50] sm:$0xff]
      %v323 = vld [vmem:[#allocation2 + $0x58] sm:$0xff]
      %v324 = vld [vmem:[#allocation2 + $0x60] sm:$0xff]
      %v325 = vld [vmem:[#allocation2 + $0x68] sm:$0xff]
      %v326 = vld [vmem:[#allocation2 + $0x70] sm:$0xff]
      %v327 = vld [vmem:[#allocation2 + $0x78] sm:$0xff]
      %v328 = vld [vmem:[%s245] sm:$0xf]
      %v329 = vld [vmem:[%s245 + $0x4] sm:$0xf]
      %v330 = vld [vmem:[%s245 + $0x8] sm:$0xf]
      %v331 = vld [vmem:[%s245 + $0xc] sm:$0xf]
      %v332 = vld [vmem:[%s245 + $0x10] sm:$0xf]
      %v333 = vld [vmem:[%s245 + $0x14] sm:$0xf]
      %v334 = vld [vmem:[%s245 + $0x18] sm:$0xf]
      %v335 = vld [vmem:[%s245 + $0x1c] sm:$0xf]
      %v336 = vld [vmem:[%s245 + $0x20] sm:$0xf]
      %v337 = vld [vmem:[%s245 + $0x24] sm:$0xf]
      %v338 = vld [vmem:[%s245 + $0x28] sm:$0xf]
      %v339 = vld [vmem:[%s245 + $0x2c] sm:$0xf]
      %v340 = vld [vmem:[%s245 + $0x30] sm:$0xf]
      %v341 = vld [vmem:[%s245 + $0x34] sm:$0xf]
      %v342 = vld [vmem:[%s245 + $0x38] sm:$0xf]
      %v343 = vld [vmem:[%s245 + $0x3c] sm:$0xf]
      %v360 = vunpack.c.l.b16 %v296
      %v361 = vunpack.c.l.b16 %v297
      %v362 = vunpack.c.l.b16 %v298
      %v363 = vunpack.c.l.b16 %v299
      %v364 = vunpack.c.l.b16 %v300
      %v365 = vunpack.c.l.b16 %v301
      %v366 = vunpack.c.l.b16 %v302
      %v367 = vunpack.c.l.b16 %v303
      %v368 = vunpack.c.l.b16 %v304
      %v369 = vunpack.c.l.b16 %v305
      %v370 = vunpack.c.l.b16 %v306
      %v371 = vunpack.c.l.b16 %v307
      %v372 = vunpack.c.l.b16 %v308
      %v373 = vunpack.c.l.b16 %v309
      %v374 = vunpack.c.l.b16 %v310
      %v375 = vunpack.c.l.b16 %v311
      %v376 = vpack.c.b16 %v361, %v360
      %v377 = vpack.c.b16 %v363, %v362
      %v378 = vpack.c.b16 %v365, %v364
      %v379 = vpack.c.b16 %v367, %v366
      %v380 = vpack.c.b16 %v369, %v368
      %v381 = vpack.c.b16 %v371, %v370
      %v382 = vpack.c.b16 %v373, %v372
      %v383 = vpack.c.b16 %v375, %v374
      %v408 = vunpack.c.l.b16 %v328
      %v409 = vunpack.c.l.b16 %v329
      %v410 = vunpack.c.l.b16 %v330
      %v411 = vunpack.c.l.b16 %v331
      %v412 = vunpack.c.l.b16 %v332
      %v413 = vunpack.c.l.b16 %v333
      %v414 = vunpack.c.l.b16 %v334
      %v415 = vunpack.c.l.b16 %v335
      %v416 = vunpack.c.l.b16 %v336
      %v417 = vunpack.c.l.b16 %v337
      %v418 = vunpack.c.l.b16 %v338
      %v419 = vunpack.c.l.b16 %v339
      %v420 = vunpack.c.l.b16 %v340
      %v421 = vunpack.c.l.b16 %v341
      %v422 = vunpack.c.l.b16 %v342
      %v423 = vunpack.c.l.b16 %v343
      %v424 = vpack.c.b16 %v409, %v408
      %v425 = vpack.c.b16 %v411, %v410
      %v426 = vpack.c.b16 %v413, %v412
      %v427 = vpack.c.b16 %v415, %v414
      %v428 = vpack.c.b16 %v417, %v416
      %v429 = vpack.c.b16 %v419, %v418
      %v430 = vpack.c.b16 %v421, %v420
      %v431 = vpack.c.b16 %v423, %v422
      %440 = vmatprep.subr.bf16.mxu0 0
      %441 = vmatpush1.bf16.msra.mxu0 %v424
      %442 = vmatprep.subr.bf16.mxu0 0
      %443 = vmatpush1.bf16.msra.mxu0 %v425
      %444 = vmatprep.subr.bf16.mxu0 0
      %445 = vmatpush1.bf16.msra.mxu0 %v426
      %446 = vmatprep.subr.bf16.mxu0 0
      %447 = vmatpush1.bf16.msra.mxu0 %v427
      %448 = vmatprep.subr.bf16.mxu0 0
      %449 = vmatpush1.bf16.msra.mxu0 %v428
      %450 = vmatprep.subr.bf16.mxu0 0
      %451 = vmatpush1.bf16.msra.mxu0 %v429
      %452 = vmatprep.subr.bf16.mxu0 0
      %453 = vmatpush1.bf16.msra.mxu0 %v430
      %454 = vmatprep.subr.bf16.mxu0 0
      %455 = vmatpush1.bf16.msra.mxu0 %v431
      %456 = vmatprep.subr.bf16.mxu0 0
      %457 = vmatpush1.bf16.msra.mxu0 0
      %458 = vmatprep.subr.bf16.mxu0 0
      %459 = vmatpush1.bf16.msra.mxu0 0
      %460 = vmatprep.subr.bf16.mxu0 0
      %461 = vmatpush1.bf16.msra.mxu0 0
      %462 = vmatprep.subr.bf16.mxu0 0
      %463 = vmatpush1.bf16.msra.mxu0 0
      %464 = vmatprep.subr.bf16.mxu0 0
      %465 = vmatpush1.bf16.msra.mxu0 0
      %466 = vmatprep.subr.bf16.mxu0 0
      %467 = vmatpush1.bf16.msra.mxu0 0
      %468 = vmatprep.subr.bf16.mxu0 0
      %469 = vmatpush1.bf16.msra.mxu0 0
      %470 = vmatprep.subr.bf16.mxu0 0
      %471 = vmatpush1.bf16.msra.mxu0 0
      %472 = vmatprep.mubr.bf16.mxu0 0
      %473 = vmatmul.mubr.bf16.gmra.mrb[0].mxu0 %v376
      %v474 = vpop.f32.mrb[0].mxu0
      %v475 = vadd.f32 0.0, %v474
      %v476 = vpop.f32.mrb[0].mxu0
      %v477 = vpop.f32.mrb[0].mxu0
      %v478 = vadd.f32 0.0, %v477
      %v479 = vpop.f32.mrb[0].mxu0
      %480 = vmatprep.mubr.bf16.mxu0 0
      %481 = vmatmul.mubr.bf16.gmra.mrb[0].mxu0 %v377
      %v482 = vpop.f32.mrb[0].mxu0
      %v483 = vadd.f32 0.0, %v482
      %v484 = vpop.f32.mrb[0].mxu0
      %v485 = vpop.f32.mrb[0].mxu0
      %v486 = vadd.f32 0.0, %v485
      %v487 = vpop.f32.mrb[0].mxu0
      %488 = vmatprep.mubr.bf16.mxu0 0
      %489 = vmatmul.mubr.bf16.gmra.mrb[0].mxu0 %v378
      %v490 = vpop.f32.mrb[0].mxu0
      %v491 = vadd.f32 0.0, %v490
      %v492 = vpop.f32.mrb[0].mxu0
      %v493 = vpop.f32.mrb[0].mxu0
      %v494 = vadd.f32 0.0, %v493
      %v495 = vpop.f32.mrb[0].mxu0
      %496 = vmatprep.mubr.bf16.mxu0 0
      %497 = vmatmul.mubr.bf16.gmra.mrb[0].mxu0 %v379
      %v498 = vpop.f32.mrb[0].mxu0
      %v499 = vadd.f32 0.0, %v498
      %v500 = vpop.f32.mrb[0].mxu0
      %v501 = vpop.f32.mrb[0].mxu0
      %v502 = vadd.f32 0.0, %v501
      %v503 = vpop.f32.mrb[0].mxu0
      %504 = vmatprep.mubr.bf16.mxu0 0
      %505 = vmatmul.mubr.bf16.gmra.mrb[0].mxu0 %v380
      %v506 = vpop.f32.mrb[0].mxu0
      %v507 = vadd.f32 0.0, %v506
      %v508 = vpop.f32.mrb[0].mxu0
      %v509 = vpop.f32.mrb[0].mxu0
      %v510 = vadd.f32 0.0, %v509
      %v511 = vpop.f32.mrb[0].mxu0
      %512 = vmatprep.mubr.bf16.mxu0 0
      %513 = vmatmul.mubr.bf16.gmra.mrb[0].mxu0 %v381
      %v514 = vpop.f32.mrb[0].mxu0
      %v515 = vadd.f32 0.0, %v514
      %v516 = vpop.f32.mrb[0].mxu0
      %v517 = vpop.f32.mrb[0].mxu0
      %v518 = vadd.f32 0.0, %v517
      %v519 = vpop.f32.mrb[0].mxu0
      %520 = vmatprep.mubr.bf16.mxu0 0
      %521 = vmatmul.mubr.bf16.gmra.mrb[0].mxu0 %v382
      %v522 = vpop.f32.mrb[0].mxu0
      %v523 = vadd.f32 0.0, %v522
      %v524 = vpop.f32.mrb[0].mxu0
      %v525 = vpop.f32.mrb[0].mxu0
      %v526 = vadd.f32 0.0, %v525
      %v527 = vpop.f32.mrb[0].mxu0
      %528 = vmatprep.mubr.bf16.mxu0 0
      %529 = vmatmul.mubr.bf16.gmra.mrb[0].mxu0 %v383
      %v530 = vpop.f32.mrb[0].mxu0
      %v531 = vadd.f32 0.0, %v530
      %v532 = vpop.f32.mrb[0].mxu0
      %v533 = vpop.f32.mrb[0].mxu0
      %v534 = vadd.f32 0.0, %v533
      %v535 = vpop.f32.mrb[0].mxu0
      %536 = vdwg.mxu0
      %v537 = vadd.f32 %v312, %v475
      %v538 = vadd.f32 %v313, %v478
      %v539 = vadd.f32 %v314, %v483
      %v540 = vadd.f32 %v315, %v486
      %v541 = vadd.f32 %v316, %v491
      %v542 = vadd.f32 %v317, %v494
      %v543 = vadd.f32 %v318, %v499
      %v544 = vadd.f32 %v319, %v502
      %v545 = vadd.f32 %v320, %v507
      %v546 = vadd.f32 %v321, %v510
      %v547 = vadd.f32 %v322, %v515
      %v548 = vadd.f32 %v323, %v518
      %v549 = vadd.f32 %v324, %v523
      %v550 = vadd.f32 %v325, %v526
      %v551 = vadd.f32 %v326, %v531
      %v552 = vadd.f32 %v327, %v534
      %553 = vst [vmem:[#allocation2] sm:$0xff] %v537
      %554 = vst [vmem:[#allocation2 + $0x8] sm:$0xff] %v538
      %555 = vst [vmem:[#allocation2 + $0x10] sm:$0xff] %v539
      %556 = vst [vmem:[#allocation2 + $0x18] sm:$0xff] %v540
      %557 = vst [vmem:[#allocation2 + $0x20] sm:$0xff] %v541
      %558 = vst [vmem:[#allocation2 + $0x28] sm:$0xff] %v542
      %559 = vst [vmem:[#allocation2 + $0x30] sm:$0xff] %v543
      %560 = vst [vmem:[#allocation2 + $0x38] sm:$0xff] %v544
      %561 = vst [vmem:[#allocation2 + $0x40] sm:$0xff] %v545
      %562 = vst [vmem:[#allocation2 + $0x48] sm:$0xff] %v546
      %563 = vst [vmem:[#allocation2 + $0x50] sm:$0xff] %v547
      %564 = vst [vmem:[#allocation2 + $0x58] sm:$0xff] %v548
      %565 = vst [vmem:[#allocation2 + $0x60] sm:$0xff] %v549
      %566 = vst [vmem:[#allocation2 + $0x68] sm:$0xff] %v550
      %567 = vst [vmem:[#allocation2 + $0x70] sm:$0xff] %v551
      %568 = vst [vmem:[#allocation2 + $0x78] sm:$0xff] %v552
      // Predicated region
      $region37: #{_lambda_.9} parent=31 // pred_check
        %p569 = pneg %p260
      $region38: #{_lambda_.9} parent=31 // pred_check_branch
        %571 = sbr.rel (%p569) target = $region40
      $region39: #{_lambda_.9} parent=31 // pred_region
        %v572 = vld [vmem:[#allocation2] sm:$0xff]
        %v573 = vld [vmem:[#allocation2 + $0x8] sm:$0xff]
        %v574 = vld [vmem:[#allocation2 + $0x10] sm:$0xff]
        %v575 = vld [vmem:[#allocation2 + $0x18] sm:$0xff]
        %v576 = vld [vmem:[#allocation2 + $0x20] sm:$0xff]
        %v577 = vld [vmem:[#allocation2 + $0x28] sm:$0xff]
        %v578 = vld [vmem:[#allocation2 + $0x30] sm:$0xff]
        %v579 = vld [vmem:[#allocation2 + $0x38] sm:$0xff]
        %v580 = vld [vmem:[#allocation2 + $0x40] sm:$0xff]
        %v581 = vld [vmem:[#allocation2 + $0x48] sm:$0xff]
        %v582 = vld [vmem:[#allocation2 + $0x50] sm:$0xff]
        %v583 = vld [vmem:[#allocation2 + $0x58] sm:$0xff]
        %v584 = vld [vmem:[#allocation2 + $0x60] sm:$0xff]
        %v585 = vld [vmem:[#allocation2 + $0x68] sm:$0xff]
        %v586 = vld [vmem:[#allocation2 + $0x70] sm:$0xff]
        %v587 = vld [vmem:[#allocation2 + $0x78] sm:$0xff]
        %v588 = vld [vmem:[%s249] sm:$0x1]
        %v590 = vlaneseq
        %v591 = vshrl.u32 %v590, 7
        %v592 = vsub.s32 0, %v591
        %v593 = vrot.slane %v588, %v592
        %v595 = vadd.f32 %v572, %v593
        %v596 = vadd.f32 %v573, %v593
        %v597 = vadd.f32 %v574, %v593
        %v598 = vadd.f32 %v575, %v593
        %v599 = vadd.f32 %v576, %v593
        %v600 = vadd.f32 %v577, %v593
        %v601 = vadd.f32 %v578, %v593
        %v602 = vadd.f32 %v579, %v593
        %v603 = vadd.f32 %v580, %v593
        %v604 = vadd.f32 %v581, %v593
        %v605 = vadd.f32 %v582, %v593
        %v606 = vadd.f32 %v583, %v593
        %v607 = vadd.f32 %v584, %v593
        %v608 = vadd.f32 %v585, %v593
        %v609 = vadd.f32 %v586, %v593
        %v610 = vadd.f32 %v587, %v593
        %611 = vst [vmem:[%s257] sm:$0xff] %v595
        %612 = vst [vmem:[%s257 + $0x8] sm:$0xff] %v596
        %613 = vst [vmem:[%s257 + $0x10] sm:$0xff] %v597
        %614 = vst [vmem:[%s257 + $0x18] sm:$0xff] %v598
        %615 = vst [vmem:[%s257 + $0x20] sm:$0xff] %v599
        %616 = vst [vmem:[%s257 + $0x28] sm:$0xff] %v600
        %617 = vst [vmem:[%s257 + $0x30] sm:$0xff] %v601
        %618 = vst [vmem:[%s257 + $0x38] sm:$0xff] %v602
        %619 = vst [vmem:[%s257 + $0x40] sm:$0xff] %v603
        %620 = vst [vmem:[%s257 + $0x48] sm:$0xff] %v604
        %621 = vst [vmem:[%s257 + $0x50] sm:$0xff] %v605
        %622 = vst [vmem:[%s257 + $0x58] sm:$0xff] %v606
        %623 = vst [vmem:[%s257 + $0x60] sm:$0xff] %v607
        %624 = vst [vmem:[%s257 + $0x68] sm:$0xff] %v608
        %625 = vst [vmem:[%s257 + $0x70] sm:$0xff] %v609
        %626 = vst [vmem:[%s257 + $0x78] sm:$0xff] %v610
      $region40: #{_lambda_.9} parent=31 // pred_fallthru
        _
      %s627 = smul.u32 16, %s19
      %p628 = scmp.lt.s32.totalorder %s627, 31
      %s629 = scalar_select %p628, %s627, 31
      %p630 = scmp.lt.s32.totalorder %s20, 0
      %s631 = scalar_select %p630, %s20, 0
      %s632 = sadd.s32 %s631, %s629
      %s633 = smul.addr %s632, 8
      %s634 = scalar_lea.vmem %s3, %s633
      // Predicated region
      $region41: #{_lambda_.9} parent=31 // pred_check
        %p635 = pneg %p135
      $region42: #{_lambda_.9} parent=31 // pred_check_branch
        %637 = sbr.rel (%p635) target = $region44
      $region43: #{_lambda_.9} parent=31 // pred_region
        %s638 = smul.u32 16, %s19
      $region44: #{_lambda_.9} parent=31 // pred_fallthru
        _
    $region32: #{_lambda_.9} parent=5 // pred_fallthru
      _
    %p639 = scmp.le.s32.totalorder 2, %s9
    // Predicated region
    $region45: #{_lambda_.9} parent=5 // pred_check
      %p640 = pneg %p639
    $region46: #{_lambda_.9} parent=5 // pred_check_branch
      %642 = sbr.rel (%p640) target = $region48
    $region47: #{_lambda_.9} parent=5 // pred_region
      %s643 = ssub.s32 %s9, 2
      // Predicated region
      $region49: #{_lambda_.9} parent=47 // pred_check
        %p644 = pneg %p141
      $region50: #{_lambda_.9} parent=47 // pred_check_branch
        %646 = sbr.rel (%p644) target = $region52
      $region51: #{_lambda_.9} parent=47 // pred_region
        %s647 = smul.u32 16, %s22
        %p648 = scmp.lt.s32.totalorder %s647, 31
        %s649 = scalar_select %p648, %s647, 31
        %p650 = scmp.lt.s32.totalorder %s23, 0
        %s651 = scalar_select %p650, %s23, 0
        %s652 = sadd.s32 %s651, %s649
        %s653 = smul.addr %s652, 8
        %s654 = scalar_lea.vmem %s3, %s653
      $region52: #{_lambda_.9} parent=47 // pred_fallthru
        _
    $region48: #{_lambda_.9} parent=5 // pred_fallthru
      _
  $region6: #{_lambda_.9} parent=0 // loop_footer
    %s13 = sadd.s32 1, %s9
  $region7: #{_lambda_.9} parent=0 // loop_footer_branch
    %8 = sbr.rel target = $region3
  $region8: #{_lambda_.9} parent=0 // loop_exit
    _

// kernel: _lambda_.10
$region0: #{_lambda_.10}
  #allocation0 [shape = 'u32[]', space=smem, size = 0x4, offset = 0x4, fixed_abs, tag = 'smem constant byte address 0x4 - core index']
  #allocation1 [shape = 'u32[144,128]{1,0:T(1,128)}', space=vmem, size = 0x12000, scoped, tag = 'internal scratch']
  #allocation2 [shape = 'f32[256,128]{1,0:T(8,128)}', space=vmem, size = 0x20000, scoped, tag = 'scratch operand']
  %s0 = inlined_call_operand.vmem [shape: bf16[768,128], index: 0, kind: input, shape index: {}]
  %s1 = inlined_call_operand.vmem [shape: bf16[128,128], index: 1, kind: input, shape index: {}]
  %s2 = inlined_call_operand.vmem [shape: f32[1,128], index: 2, kind: input, shape index: {}]
  %s3 = inlined_call_operand.vmem [shape: f32[768,128], index: 3, kind: output, shape index: {}]
  %s4 = sld [smem:[#allocation0]]
  $region53: #{_lambda_.10} parent=0
    _
  %s6 = ssub.s32 1, %s4
  %s7 = scalar_select 0, %s6, %s4
  loop: start=0, step=1, limit=5
  $region2: #{_lambda_.10} parent=0 // loop_pre_header
    _
  $region3: #{_lambda_.10} parent=0 // loop_header
    %s9 = sphi 0, %s13
    %p10 = scmp.ge.s32.totalorder %s9, 5
    %s16 = sphi 0, %s35
    %s17 = sphi 0, %s31
    %s18 = sphi 0, %s27
    %s19 = sphi 0, %s16
    %s20 = sphi 0, %s17
    %s21 = sphi 0, %s18
    %s22 = sphi 0, %s19
    %s23 = sphi 0, %s20
    %s24 = sphi 0, %s21
    %s40 = sphi 0, %s42
    %s43 = sphi 0, %s40
    %s44 = sphi 0, %s43
    %s60 = sphi 0, %s44
    %s68 = sphi 0, %s70
    %s71 = sphi 0, %s68
    %s72 = sphi 0, %s71
    %s88 = sphi 0, %s72
    %s94 = sphi 0, %s96
    %s97 = sphi 0, %s94
    %s98 = sphi 0, %s97
    %s114 = sphi 0, %s98
    %s122 = sphi 0, %s124
    %s125 = sphi 0, %s122
    %s126 = sphi 0, %s125
    %s142 = sphi 0, %s126
  $region4: #{_lambda_.10} parent=0 // loop_header_branch
    %12 = sbr.rel (%p10) target = $region8
  $region5: #{_lambda_.10} parent=0 // loop_body
    %s14 = ssub.s32 %s9, 1
    %s15 = ssub.s32 %s9, 2
    %s25 = sadd.s32 1, %s18
    %p26 = scmp.ge.s32.totalorder %s25, 1
    %s27 = scalar_select %p26, 0, %s25
    %s28 = sadd.s32 1, %s17
    %s29 = scalar_select %p26, %s28, %s17
    %p30 = scmp.ge.s32.totalorder %s29, 1
    %s31 = scalar_select %p30, 0, %s29
    %s32 = sadd.s32 1, %s16
    %s33 = scalar_select %p30, %s32, %s16
    %p34 = scmp.ge.s32.totalorder %s33, 3
    %s35 = scalar_select %p34, 0, %s33
    %s36 = ssub.s32 %s16, %s35
    %s37 = ssub.s32 %s18, %s27
    %s38 = sor.u32 %s36, %s37
    %p39 = scmp.eq.s32.totalorder %s38, 0
    %s41 = sadd.s32 %s40, 1
    %s42 = scalar_select %p39, %s40, %s41
    %p45 = pneg %p39
    %p46 = scmp.eq.s32.totalorder %s9, 2
    %p47 = por %p45, %p46
    %p48 = scmp.ne.s32.totalorder %s40, %s43
    %p49 = scmp.eq.s32.totalorder %s9, 0
    %p50 = por %p48, %p49
    %p51 = scmp.ne.s32.totalorder %s40, %s43
    %p52 = scmp.eq.s32.totalorder %s14, 2
    %p53 = por %p51, %p52
    %p54 = scmp.ne.s32.totalorder %s43, %s44
    %p55 = scmp.eq.s32.totalorder %s14, 0
    %p56 = por %p54, %p55
    %p57 = scmp.ne.s32.totalorder %s43, %s44
    %p58 = scmp.eq.s32.totalorder %s15, 2
    %p59 = por %p57, %p58
    %p61 = scmp.ne.s32.totalorder %s44, %s60
    %p62 = scmp.eq.s32.totalorder %s15, 0
    %p63 = por %p61, %p62
    %s64 = ssub.s32 %s18, %s27
    %s65 = ssub.s32 %s17, %s31
    %s66 = sor.u32 %s64, %s65
    %p67 = scmp.eq.s32.totalorder %s66, 0
    %s69 = sadd.s32 %s68, 1
    %s70 = scalar_select %p67, %s68, %s69
    %p73 = pneg %p67
    %p74 = scmp.eq.s32.totalorder %s9, 2
    %p75 = por %p73, %p74
    %p76 = scmp.ne.s32.totalorder %s68, %s71
    %p77 = scmp.eq.s32.totalorder %s9, 0
    %p78 = por %p76, %p77
    %p79 = scmp.ne.s32.totalorder %s68, %s71
    %p80 = scmp.eq.s32.totalorder %s14, 2
    %p81 = por %p79, %p80
    %p82 = scmp.ne.s32.totalorder %s71, %s72
    %p83 = scmp.eq.s32.totalorder %s14, 0
    %p84 = por %p82, %p83
    %p85 = scmp.ne.s32.totalorder %s71, %s72
    %p86 = scmp.eq.s32.totalorder %s15, 2
    %p87 = por %p85, %p86
    %p89 = scmp.ne.s32.totalorder %s72, %s88
    %p90 = scmp.eq.s32.totalorder %s15, 0
    %p91 = por %p89, %p90
    %s92 = ssub.s32 %s17, %s31
    %p93 = scmp.eq.s32.totalorder %s92, 0
    %s95 = sadd.s32 %s94, 1
    %s96 = scalar_select %p93, %s94, %s95
    %p99 = pneg %p93
    %p100 = scmp.eq.s32.totalorder %s9, 2
    %p101 = por %p99, %p100
    %p102 = scmp.ne.s32.totalorder %s94, %s97
    %p103 = scmp.eq.s32.totalorder %s9, 0
    %p104 = por %p102, %p103
    %p105 = scmp.ne.s32.totalorder %s94, %s97
    %p106 = scmp.eq.s32.totalorder %s14, 2
    %p107 = por %p105, %p106
    %p108 = scmp.ne.s32.totalorder %s97, %s98
    %p109 = scmp.eq.s32.totalorder %s14, 0
    %p110 = por %p108, %p109
    %p111 = scmp.ne.s32.totalorder %s97, %s98
    %p112 = scmp.eq.s32.totalorder %s15, 2
    %p113 = por %p111, %p112
    %p115 = scmp.ne.s32.totalorder %s98, %s114
    %p116 = scmp.eq.s32.totalorder %s15, 0
    %p117 = por %p115, %p116
    %s118 = ssub.s32 %s16, %s35
    %s119 = ssub.s32 %s17, %s31
    %s120 = sor.u32 %s118, %s119
    %p121 = scmp.eq.s32.totalorder %s120, 0
    %s123 = sadd.s32 %s122, 1
    %s124 = scalar_select %p121, %s122, %s123
    %p127 = pneg %p121
    %p128 = scmp.eq.s32.totalorder %s9, 2
    %p129 = por %p127, %p128
    %p130 = scmp.ne.s32.totalorder %s122, %s125
    %p131 = scmp.eq.s32.totalorder %s9, 0
    %p132 = por %p130, %p131
    %p133 = scmp.ne.s32.totalorder %s122, %s125
    %p134 = scmp.eq.s32.totalorder %s14, 2
    %p135 = por %p133, %p134
    %p136 = scmp.ne.s32.totalorder %s125, %s126
    %p137 = scmp.eq.s32.totalorder %s14, 0
    %p138 = por %p136, %p137
    %p139 = scmp.ne.s32.totalorder %s125, %s126
    %p140 = scmp.eq.s32.totalorder %s15, 2
    %p141 = por %p139, %p140
    %p143 = scmp.ne.s32.totalorder %s126, %s142
    %p144 = scmp.eq.s32.totalorder %s15, 0
    %p145 = por %p143, %p144
    %p146 = scmp.le.s32.totalorder 1, %s9
    %p147 = scmp.lt.s32.totalorder %s9, 4
    %p148 = pnand %p146, %p147
    %p149 = pneg %p148
    // Predicated region
    $region9: #{_lambda_.10} parent=5 // pred_check
      _
    $region10: #{_lambda_.10} parent=5 // pred_check_branch
      %151 = sbr.rel (%p148) target = $region12
    $region11: #{_lambda_.10} parent=5 // pred_region
      %s152 = ssub.s32 %s9, 1
      // Predicated region
      $region13: #{_lambda_.10} parent=11 // pred_check
        %p153 = pneg %p84
      $region14: #{_lambda_.10} parent=11 // pred_check_branch
        %155 = sbr.rel (%p153) target = $region16
      $region15: #{_lambda_.10} parent=11 // pred_region
        %s156 = smul.u32 16, %s21
        %p157 = scmp.lt.s32.totalorder %s156, 15
        %s158 = scalar_select %p157, %s156, 15
        %p159 = scmp.lt.s32.totalorder %s20, 0
        %s160 = scalar_select %p159, %s20, 0
        %s161 = sadd.s32 %s160, %s158
        %s162 = smul.addr %s161, 4
        %s163 = scalar_lea.vmem %s1, %s162
        %s164 = smul.u32 16, %s21
      $region16: #{_lambda_.10} parent=11 // pred_fallthru
        _
      // Predicated region
      $region17: #{_lambda_.10} parent=11 // pred_check
        %p165 = pneg %p110
      $region18: #{_lambda_.10} parent=11 // pred_check_branch
        %167 = sbr.rel (%p165) target = $region20
      $region19: #{_lambda_.10} parent=11 // pred_region
        %p168 = scmp.lt.s32.totalorder %s20, 0
        %s169 = scalar_select %p168, %s20, 0
        %s170 = scalar_lea.vmem %s2, %s169
      $region20: #{_lambda_.10} parent=11 // pred_fallthru
        _
    $region12: #{_lambda_.10} parent=5 // pred_fallthru
      _
    %p171 = scmp.lt.s32.totalorder %s9, 3
    // Predicated region
    $region21: #{_lambda_.10} parent=5 // pred_check
      %p172 = pneg %p171
    $region22: #{_lambda_.10} parent=5 // pred_check_branch
      %174 = sbr.rel (%p172) target = $region24
    $region23: #{_lambda_.10} parent=5 // pred_region
      // Predicated region
      $region25: #{_lambda_.10} parent=23 // pred_check
        %p175 = pneg %p50
      $region26: #{_lambda_.10} parent=23 // pred_check_branch
        %177 = sbr.rel (%p175) target = $region28
      $region27: #{_lambda_.10} parent=23 // pred_region
        %s178 = smul.u32 32, %s16
        %p179 = scmp.lt.s32.totalorder %s178, 95
        %s180 = scalar_select %p179, %s178, 95
        %p181 = scmp.lt.s32.totalorder %s18, 0
        %s182 = scalar_select %p181, %s18, 0
        %s183 = sadd.s32 %s182, %s180
        %s184 = smul.addr %s183, 4
        %s185 = scalar_lea.vmem %s0, %s184
        %s186 = smul.u32 32, %s16
      $region28: #{_lambda_.10} parent=23 // pred_fallthru
        _
    $region24: #{_lambda_.10} parent=5 // pred_fallthru
      _
    %p187 = scmp.le.s32.totalorder 1, %s9
    %p188 = scmp.lt.s32.totalorder %s9, 4
    %p189 = pnand %p187, %p188
    %p190 = pneg %p189
    // Predicated region
    $region29: #{_lambda_.10} parent=5 // pred_check
      _
    $region30: #{_lambda_.10} parent=5 // pred_check_branch
      %192 = sbr.rel (%p189) target = $region32
    $region31: #{_lambda_.10} parent=5 // pred_region
      %s193 = ssub.s32 %s9, 1
      %s194 = smul.u32 32, %s19
      %p195 = scmp.lt.s32.totalorder %s194, 95
      %s196 = scalar_select %p195, %s194, 95
      %p197 = scmp.lt.s32.totalorder %s21, 0
      %s198 = scalar_select %p197, %s21, 0
      %s199 = sadd.s32 %s198, %s196
      %s200 = smul.addr %s199, 4
      %s201 = scalar_lea.vmem %s0, %s200
      %p202 = pneg %p56
      %p203 = pneg %p53
      %s204 = smul.u32 16, %s21
      %p205 = scmp.lt.s32.totalorder %s204, 15
      %s206 = scalar_select %p205, %s204, 15
      %p207 = scmp.lt.s32.totalorder %s20, 0
      %s208 = scalar_select %p207, %s20, 0
      %s209 = sadd.s32 %s208, %s206
      %s210 = smul.addr %s209, 4
      %s211 = scalar_lea.vmem %s1, %s210
      %p212 = pneg %p84
      %p213 = pneg %p81
      %p214 = scmp.lt.s32.totalorder %s20, 0
      %s215 = scalar_select %p214, %s20, 0
      %s216 = scalar_lea.vmem %s2, %s215
      %p217 = pneg %p110
      %p218 = pneg %p107
      %p219 = pneg %p138
      %p220 = pneg %p135
      %s221 = smul.u32 32, %s19
      %p222 = scmp.lt.s32.totalorder %s221, 95
      %s223 = scalar_select %p222, %s221, 95
      %p224 = scmp.lt.s32.totalorder %s20, 0
      %s225 = scalar_select %p224, %s20, 0
      %s226 = sadd.s32 %s225, %s223
      %s227 = smul.addr %s226, 8
      %s228 = scalar_lea.vmem %s3, %s227
      %s229 = smul.u32 32, %s19
      %p230 = scmp.lt.s32.totalorder %s229, 95
      %s231 = scalar_select %p230, %s229, 95
      %p232 = scmp.lt.s32.totalorder %s21, 0
      %s233 = scalar_select %p232, %s21, 0
      %s234 = sadd.s32 %s233, %s231
      %s235 = smul.addr %s234, 4
      %s236 = scalar_lea.vmem %s0, %s235
      %s237 = smul.u32 32, %s19
      %s238 = smul.u32 16, %s21
      %p239 = scmp.lt.s32.totalorder %s238, 15
      %s240 = scalar_select %p239, %s238, 15
      %p241 = scmp.lt.s32.totalorder %s20, 0
      %s242 = scalar_select %p241, %s20, 0
      %s243 = sadd.s32 %s242, %s240
      %s244 = smul.addr %s243, 4
      %s245 = scalar_lea.vmem %s1, %s244
      %s246 = smul.u32 16, %s21
      %p247 = scmp.lt.s32.totalorder %s20, 0
      %s248 = scalar_select %p247, %s20, 0
      %s249 = scalar_lea.vmem %s2, %s248
      %s250 = smul.u32 32, %s19
      %p251 = scmp.lt.s32.totalorder %s250, 95
      %s252 = scalar_select %p251, %s250, 95
      %p253 = scmp.lt.s32.totalorder %s20, 0
      %s254 = scalar_select %p253, %s20, 0
      %s255 = sadd.s32 %s254, %s252
      %s256 = smul.addr %s255, 8
      %s257 = scalar_lea.vmem %s3, %s256
      %s258 = smul.u32 32, %s19
      %p260 = scmp.eq.s32.totalorder %s21, 0
      // Predicated region
      $region33: #{_lambda_.10} parent=31 // pred_check
        %p261 = pneg %p260
      $region34: #{_lambda_.10} parent=31 // pred_check_branch
        %263 = sbr.rel (%p261) target = $region36
      $region35: #{_lambda_.10} parent=31 // pred_region
        %264 = vst [vmem:[#allocation2] sm:$0xff] 0.0
        %265 = vst [vmem:[#allocation2 + $0x8] sm:$0xff] 0.0
        %266 = vst [vmem:[#allocation2 + $0x10] sm:$0xff] 0.0
        %267 = vst [vmem:[#allocation2 + $0x18] sm:$0xff] 0.0
        %268 = vst [vmem:[#allocation2 + $0x20] sm:$0xff] 0.0
        %269 = vst [vmem:[#allocation2 + $0x28] sm:$0xff] 0.0
        %270 = vst [vmem:[#allocation2 + $0x30] sm:$0xff] 0.0
        %271 = vst [vmem:[#allocation2 + $0x38] sm:$0xff] 0.0
        %272 = vst [vmem:[#allocation2 + $0x40] sm:$0xff] 0.0
        %273 = vst [vmem:[#allocation2 + $0x48] sm:$0xff] 0.0
        %274 = vst [vmem:[#allocation2 + $0x50] sm:$0xff] 0.0
        %275 = vst [vmem:[#allocation2 + $0x58] sm:$0xff] 0.0
        %276 = vst [vmem:[#allocation2 + $0x60] sm:$0xff] 0.0
        %277 = vst [vmem:[#allocation2 + $0x68] sm:$0xff] 0.0
        %278 = vst [vmem:[#allocation2 + $0x70] sm:$0xff] 0.0
        %279 = vst [vmem:[#allocation2 + $0x78] sm:$0xff] 0.0
        %280 = vst [vmem:[#allocation2 + $0x80] sm:$0xff] 0.0
        %281 = vst [vmem:[#allocation2 + $0x88] sm:$0xff] 0.0
        %282 = vst [vmem:[#allocation2 + $0x90] sm:$0xff] 0.0
        %283 = vst [vmem:[#allocation2 + $0x98] sm:$0xff] 0.0
        %284 = vst [vmem:[#allocation2 + $0xa0] sm:$0xff] 0.0
        %285 = vst [vmem:[#allocation2 + $0xa8] sm:$0xff] 0.0
        %286 = vst [vmem:[#allocation2 + $0xb0] sm:$0xff] 0.0
        %287 = vst [vmem:[#allocation2 + $0xb8] sm:$0xff] 0.0
        %288 = vst [vmem:[#allocation2 + $0xc0] sm:$0xff] 0.0
        %289 = vst [vmem:[#allocation2 + $0xc8] sm:$0xff] 0.0
        %290 = vst [vmem:[#allocation2 + $0xd0] sm:$0xff] 0.0
        %291 = vst [vmem:[#allocation2 + $0xd8] sm:$0xff] 0.0
        %292 = vst [vmem:[#allocation2 + $0xe0] sm:$0xff] 0.0
        %293 = vst [vmem:[#allocation2 + $0xe8] sm:$0xff] 0.0
        %294 = vst [vmem:[#allocation2 + $0xf0] sm:$0xff] 0.0
        %295 = vst [vmem:[#allocation2 + $0xf8] sm:$0xff] 0.0
      $region36: #{_lambda_.10} parent=31 // pred_fallthru
        _
      %v296 = vld [vmem:[%s236] sm:$0xf]
      %v297 = vld [vmem:[%s236 + $0x4] sm:$0xf]
      %v298 = vld [vmem:[%s236 + $0x8] sm:$0xf]
      %v299 = vld [vmem:[%s236 + $0xc] sm:$0xf]
      %v300 = vld [vmem:[%s236 + $0x10] sm:$0xf]
      %v301 = vld [vmem:[%s236 + $0x14] sm:$0xf]
      %v302 = vld [vmem:[%s236 + $0x18] sm:$0xf]
      %v303 = vld [vmem:[%s236 + $0x1c] sm:$0xf]
      %v304 = vld [vmem:[%s236 + $0x20] sm:$0xf]
      %v305 = vld [vmem:[%s236 + $0x24] sm:$0xf]
      %v306 = vld [vmem:[%s236 + $0x28] sm:$0xf]
      %v307 = vld [vmem:[%s236 + $0x2c] sm:$0xf]
      %v308 = vld [vmem:[%s236 + $0x30] sm:$0xf]
      %v309 = vld [vmem:[%s236 + $0x34] sm:$0xf]
      %v310 = vld [vmem:[%s236 + $0x38] sm:$0xf]
      %v311 = vld [vmem:[%s236 + $0x3c] sm:$0xf]
      %v312 = vld [vmem:[%s236 + $0x40] sm:$0xf]
      %v313 = vld [vmem:[%s236 + $0x44] sm:$0xf]
      %v314 = vld [vmem:[%s236 + $0x48] sm:$0xf]
      %v315 = vld [vmem:[%s236 + $0x4c] sm:$0xf]
      %v316 = vld [vmem:[%s236 + $0x50] sm:$0xf]
      %v317 = vld [vmem:[%s236 + $0x54] sm:$0xf]
      %v318 = vld [vmem:[%s236 + $0x58] sm:$0xf]
      %v319 = vld [vmem:[%s236 + $0x5c] sm:$0xf]
      %v320 = vld [vmem:[%s236 + $0x60] sm:$0xf]
      %v321 = vld [vmem:[%s236 + $0x64] sm:$0xf]
      %v322 = vld [vmem:[%s236 + $0x68] sm:$0xf]
      %v323 = vld [vmem:[%s236 + $0x6c] sm:$0xf]
      %v324 = vld [vmem:[%s236 + $0x70] sm:$0xf]
      %v325 = vld [vmem:[%s236 + $0x74] sm:$0xf]
      %v326 = vld [vmem:[%s236 + $0x78] sm:$0xf]
      %v327 = vld [vmem:[%s236 + $0x7c] sm:$0xf]
      %v328 = vmax.bf16 %v296, 0
      %v329 = vmax.bf16 %v297, 0
      %v330 = vmax.bf16 %v298, 0
      %v331 = vmax.bf16 %v299, 0
      %v332 = vmax.bf16 %v300, 0
      %v333 = vmax.bf16 %v301, 0
      %v334 = vmax.bf16 %v302, 0
      %v335 = vmax.bf16 %v303, 0
      %v336 = vmax.bf16 %v304, 0
      %v337 = vmax.bf16 %v305, 0
      %v338 = vmax.bf16 %v306, 0
      %v339 = vmax.bf16 %v307, 0
      %v340 = vmax.bf16 %v308, 0
      %v341 = vmax.bf16 %v309, 0
      %v342 = vmax.bf16 %v310, 0
      %v343 = vmax.bf16 %v311, 0
      %v344 = vmax.bf16 %v312, 0
      %v345 = vmax.bf16 %v313, 0
      %v346 = vmax.bf16 %v314, 0
      %v347 = vmax.bf16 %v315, 0
      %v348 = vmax.bf16 %v316, 0
      %v349 = vmax.bf16 %v317, 0
      %v350 = vmax.bf16 %v318, 0
      %v351 = vmax.bf16 %v319, 0
      %v352 = vmax.bf16 %v320, 0
      %v353 = vmax.bf16 %v321, 0
      %v354 = vmax.bf16 %v322, 0
      %v355 = vmax.bf16 %v323, 0
      %v356 = vmax.bf16 %v324, 0
      %v357 = vmax.bf16 %v325, 0
      %v358 = vmax.bf16 %v326, 0
      %v359 = vmax.bf16 %v327, 0
      %v360 = vld [vmem:[#allocation2] sm:$0xff]
      %v361 = vld [vmem:[#allocation2 + $0x8] sm:$0xff]
      %v362 = vld [vmem:[#allocation2 + $0x10] sm:$0xff]
      %v363 = vld [vmem:[#allocation2 + $0x18] sm:$0xff]
      %v364 = vld [vmem:[#allocation2 + $0x20] sm:$0xff]
      %v365 = vld [vmem:[#allocation2 + $0x28] sm:$0xff]
      %v366 = vld [vmem:[#allocation2 + $0x30] sm:$0xff]
      %v367 = vld [vmem:[#allocation2 + $0x38] sm:$0xff]
      %v368 = vld [vmem:[#allocation2 + $0x40] sm:$0xff]
      %v369 = vld [vmem:[#allocation2 + $0x48] sm:$0xff]
      %v370 = vld [vmem:[#allocation2 + $0x50] sm:$0xff]
      %v371 = vld [vmem:[#allocation2 + $0x58] sm:$0xff]
      %v372 = vld [vmem:[#allocation2 + $0x60] sm:$0xff]
      %v373 = vld [vmem:[#allocation2 + $0x68] sm:$0xff]
      %v374 = vld [vmem:[#allocation2 + $0x70] sm:$0xff]
      %v375 = vld [vmem:[#allocation2 + $0x78] sm:$0xff]
      %v376 = vld [vmem:[#allocation2 + $0x80] sm:$0xff]
      %v377 = vld [vmem:[#allocation2 + $0x88] sm:$0xff]
      %v378 = vld [vmem:[#allocation2 + $0x90] sm:$0xff]
      %v379 = vld [vmem:[#allocation2 + $0x98] sm:$0xff]
      %v380 = vld [vmem:[#allocation2 + $0xa0] sm:$0xff]
      %v381 = vld [vmem:[#allocation2 + $0xa8] sm:$0xff]
      %v382 = vld [vmem:[#allocation2 + $0xb0] sm:$0xff]
      %v383 = vld [vmem:[#allocation2 + $0xb8] sm:$0xff]
      %v384 = vld [vmem:[#allocation2 + $0xc0] sm:$0xff]
      %v385 = vld [vmem:[#allocation2 + $0xc8] sm:$0xff]
      %v386 = vld [vmem:[#allocation2 + $0xd0] sm:$0xff]
      %v387 = vld [vmem:[#allocation2 + $0xd8] sm:$0xff]
      %v388 = vld [vmem:[#allocation2 + $0xe0] sm:$0xff]
      %v389 = vld [vmem:[#allocation2 + $0xe8] sm:$0xff]
      %v390 = vld [vmem:[#allocation2 + $0xf0] sm:$0xff]
      %v391 = vld [vmem:[#allocation2 + $0xf8] sm:$0xff]
      %v392 = vld [vmem:[%s245] sm:$0xf]
      %v393 = vld [vmem:[%s245 + $0x4] sm:$0xf]
      %v394 = vld [vmem:[%s245 + $0x8] sm:$0xf]
      %v395 = vld [vmem:[%s245 + $0xc] sm:$0xf]
      %v396 = vld [vmem:[%s245 + $0x10] sm:$0xf]
      %v397 = vld [vmem:[%s245 + $0x14] sm:$0xf]
      %v398 = vld [vmem:[%s245 + $0x18] sm:$0xf]
      %v399 = vld [vmem:[%s245 + $0x1c] sm:$0xf]
      %v400 = vld [vmem:[%s245 + $0x20] sm:$0xf]
      %v401 = vld [vmem:[%s245 + $0x24] sm:$0xf]
      %v402 = vld [vmem:[%s245 + $0x28] sm:$0xf]
      %v403 = vld [vmem:[%s245 + $0x2c] sm:$0xf]
      %v404 = vld [vmem:[%s245 + $0x30] sm:$0xf]
      %v405 = vld [vmem:[%s245 + $0x34] sm:$0xf]
      %v406 = vld [vmem:[%s245 + $0x38] sm:$0xf]
      %v407 = vld [vmem:[%s245 + $0x3c] sm:$0xf]
      %v440 = vunpack.c.l.b16 %v328
      %v441 = vunpack.c.l.b16 %v329
      %v442 = vunpack.c.l.b16 %v330
      %v443 = vunpack.c.l.b16 %v331
      %v444 = vunpack.c.l.b16 %v332
      %v445 = vunpack.c.l.b16 %v333
      %v446 = vunpack.c.l.b16 %v334
      %v447 = vunpack.c.l.b16 %v335
      %v448 = vunpack.c.l.b16 %v336
      %v449 = vunpack.c.l.b16 %v337
      %v450 = vunpack.c.l.b16 %v338
      %v451 = vunpack.c.l.b16 %v339
      %v452 = vunpack.c.l.b16 %v340
      %v453 = vunpack.c.l.b16 %v341
      %v454 = vunpack.c.l.b16 %v342
      %v455 = vunpack.c.l.b16 %v343
      %v456 = vunpack.c.l.b16 %v344
      %v457 = vunpack.c.l.b16 %v345
      %v458 = vunpack.c.l.b16 %v346
      %v459 = vunpack.c.l.b16 %v347
      %v460 = vunpack.c.l.b16 %v348
      %v461 = vunpack.c.l.b16 %v349
      %v462 = vunpack.c.l.b16 %v350
      %v463 = vunpack.c.l.b16 %v351
      %v464 = vunpack.c.l.b16 %v352
      %v465 = vunpack.c.l.b16 %v353
      %v466 = vunpack.c.l.b16 %v354
      %v467 = vunpack.c.l.b16 %v355
      %v468 = vunpack.c.l.b16 %v356
      %v469 = vunpack.c.l.b16 %v357
      %v470 = vunpack.c.l.b16 %v358
      %v471 = vunpack.c.l.b16 %v359
      %v472 = vpack.c.b16 %v441, %v440
      %v473 = vpack.c.b16 %v443, %v442
      %v474 = vpack.c.b16 %v445, %v444
      %v475 = vpack.c.b16 %v447, %v446
      %v476 = vpack.c.b16 %v449, %v448
      %v477 = vpack.c.b16 %v451, %v450
      %v478 = vpack.c.b16 %v453, %v452
      %v479 = vpack.c.b16 %v455, %v454
      %v480 = vpack.c.b16 %v457, %v456
      %v481 = vpack.c.b16 %v459, %v458
      %v482 = vpack.c.b16 %v461, %v460
      %v483 = vpack.c.b16 %v463, %v462
      %v484 = vpack.c.b16 %v465, %v464
      %v485 = vpack.c.b16 %v467, %v466
      %v486 = vpack.c.b16 %v469, %v468
      %v487 = vpack.c.b16 %v471, %v470
      %v520 = vunpack.c.l.b16 %v392
      %v521 = vunpack.c.l.b16 %v393
      %v522 = vunpack.c.l.b16 %v394
      %v523 = vunpack.c.l.b16 %v395
      %v524 = vunpack.c.l.b16 %v396
      %v525 = vunpack.c.l.b16 %v397
      %v526 = vunpack.c.l.b16 %v398
      %v527 = vunpack.c.l.b16 %v399
      %v528 = vunpack.c.l.b16 %v400
      %v529 = vunpack.c.l.b16 %v401
      %v530 = vunpack.c.l.b16 %v402
      %v531 = vunpack.c.l.b16 %v403
      %v532 = vunpack.c.l.b16 %v404
      %v533 = vunpack.c.l.b16 %v405
      %v534 = vunpack.c.l.b16 %v406
      %v535 = vunpack.c.l.b16 %v407
      %v536 = vpack.c.b16 %v521, %v520
      %v537 = vpack.c.b16 %v523, %v522
      %v538 = vpack.c.b16 %v525, %v524
      %v539 = vpack.c.b16 %v527, %v526
      %v540 = vpack.c.b16 %v529, %v528
      %v541 = vpack.c.b16 %v531, %v530
      %v542 = vpack.c.b16 %v533, %v532
      %v543 = vpack.c.b16 %v535, %v534
      %552 = vmatprep.subr.bf16.mxu0 0
      %553 = vmatpush1.bf16.msra.mxu0 %v536
      %554 = vmatprep.subr.bf16.mxu0 0
      %555 = vmatpush1.bf16.msra.mxu0 %v537
      %556 = vmatprep.subr.bf16.mxu0 0
      %557 = vmatpush1.bf16.msra.mxu0 %v538
      %558 = vmatprep.subr.bf16.mxu0 0
      %559 = vmatpush1.bf16.msra.mxu0 %v539
      %560 = vmatprep.subr.bf16.mxu0 0
      %561 = vmatpush1.bf16.msra.mxu0 %v540
      %562 = vmatprep.subr.bf16.mxu0 0
      %563 = vmatpush1.bf16.msra.mxu0 %v541
      %564 = vmatprep.subr.bf16.mxu0 0
      %565 = vmatpush1.bf16.msra.mxu0 %v542
      %566 = vmatprep.subr.bf16.mxu0 0
      %567 = vmatpush1.bf16.msra.mxu0 %v543
      %568 = vmatprep.subr.bf16.mxu0 0
      %569 = vmatpush1.bf16.msra.mxu0 0
      %570 = vmatprep.subr.bf16.mxu0 0
      %571 = vmatpush1.bf16.msra.mxu0 0
      %572 = vmatprep.subr.bf16.mxu0 0
      %573 = vmatpush1.bf16.msra.mxu0 0
      %574 = vmatprep.subr.bf16.mxu0 0
      %575 = vmatpush1.bf16.msra.mxu0 0
      %576 = vmatprep.subr.bf16.mxu0 0
      %577 = vmatpush1.bf16.msra.mxu0 0
      %578 = vmatprep.subr.bf16.mxu0 0
      %579 = vmatpush1.bf16.msra.mxu0 0
      %580 = vmatprep.subr.bf16.mxu0 0
      %581 = vmatpush1.bf16.msra.mxu0 0
      %582 = vmatprep.subr.bf16.mxu0 0
      %583 = vmatpush1.bf16.msra.mxu0 0
      %584 = vmatprep.mubr.bf16.mxu0 0
      %585 = vmatmul.mubr.bf16.gmra.mrb[0].mxu0 %v472
      %v586 = vpop.f32.mrb[0].mxu0
      %v587 = vadd.f32 0.0, %v586
      %v588 = vpop.f32.mrb[0].mxu0
      %v589 = vpop.f32.mrb[0].mxu0
      %v590 = vadd.f32 0.0, %v589
      %v591 = vpop.f32.mrb[0].mxu0
      %592 = vmatprep.mubr.bf16.mxu0 0
      %593 = vmatmul.mubr.bf16.gmra.mrb[0].mxu0 %v473
      %v594 = vpop.f32.mrb[0].mxu0
      %v595 = vadd.f32 0.0, %v594
      %v596 = vpop.f32.mrb[0].mxu0
      %v597 = vpop.f32.mrb[0].mxu0
      %v598 = vadd.f32 0.0, %v597
      %v599 = vpop.f32.mrb[0].mxu0
      %600 = vmatprep.mubr.bf16.mxu0 0
      %601 = vmatmul.mubr.bf16.gmra.mrb[0].mxu0 %v474
      %v602 = vpop.f32.mrb[0].mxu0
      %v603 = vadd.f32 0.0, %v602
      %v604 = vpop.f32.mrb[0].mxu0
      %v605 = vpop.f32.mrb[0].mxu0
      %v606 = vadd.f32 0.0, %v605
      %v607 = vpop.f32.mrb[0].mxu0
      %608 = vmatprep.mubr.bf16.mxu0 0
      %609 = vmatmul.mubr.bf16.gmra.mrb[0].mxu0 %v475
      %v610 = vpop.f32.mrb[0].mxu0
      %v611 = vadd.f32 0.0, %v610
      %v612 = vpop.f32.mrb[0].mxu0
      %v613 = vpop.f32.mrb[0].mxu0
      %v614 = vadd.f32 0.0, %v613
      %v615 = vpop.f32.mrb[0].mxu0
      %616 = vmatprep.mubr.bf16.mxu0 0
      %617 = vmatmul.mubr.bf16.gmra.mrb[0].mxu0 %v476
      %v618 = vpop.f32.mrb[0].mxu0
      %v619 = vadd.f32 0.0, %v618
      %v620 = vpop.f32.mrb[0].mxu0
      %v621 = vpop.f32.mrb[0].mxu0
      %v622 = vadd.f32 0.0, %v621
      %v623 = vpop.f32.mrb[0].mxu0
      %624 = vmatprep.mubr.bf16.mxu0 0
      %625 = vmatmul.mubr.bf16.gmra.mrb[0].mxu0 %v477
      %v626 = vpop.f32.mrb[0].mxu0
      %v627 = vadd.f32 0.0, %v626
      %v628 = vpop.f32.mrb[0].mxu0
      %v629 = vpop.f32.mrb[0].mxu0
      %v630 = vadd.f32 0.0, %v629
      %v631 = vpop.f32.mrb[0].mxu0
      %632 = vmatprep.mubr.bf16.mxu0 0
      %633 = vmatmul.mubr.bf16.gmra.mrb[0].mxu0 %v478
      %v634 = vpop.f32.mrb[0].mxu0
      %v635 = vadd.f32 0.0, %v634
      %v636 = vpop.f32.mrb[0].mxu0
      %v637 = vpop.f32.mrb[0].mxu0
      %v638 = vadd.f32 0.0, %v637
      %v639 = vpop.f32.mrb[0].mxu0
      %640 = vmatprep.mubr.bf16.mxu0 0
      %641 = vmatmul.mubr.bf16.gmra.mrb[0].mxu0 %v479
      %v642 = vpop.f32.mrb[0].mxu0
      %v643 = vadd.f32 0.0, %v642
      %v644 = vpop.f32.mrb[0].mxu0
      %v645 = vpop.f32.mrb[0].mxu0
      %v646 = vadd.f32 0.0, %v645
      %v647 = vpop.f32.mrb[0].mxu0
      %648 = vmatprep.mubr.bf16.mxu0 0
      %649 = vmatmul.mubr.bf16.gmra.mrb[0].mxu0 %v480
      %v650 = vpop.f32.mrb[0].mxu0
      %v651 = vadd.f32 0.0, %v650
      %v652 = vpop.f32.mrb[0].mxu0
      %v653 = vpop.f32.mrb[0].mxu0
      %v654 = vadd.f32 0.0, %v653
      %v655 = vpop.f32.mrb[0].mxu0
      %656 = vmatprep.mubr.bf16.mxu0 0
      %657 = vmatmul.mubr.bf16.gmra.mrb[0].mxu0 %v481
      %v658 = vpop.f32.mrb[0].mxu0
      %v659 = vadd.f32 0.0, %v658
      %v660 = vpop.f32.mrb[0].mxu0
      %v661 = vpop.f32.mrb[0].mxu0
      %v662 = vadd.f32 0.0, %v661
      %v663 = vpop.f32.mrb[0].mxu0
      %664 = vmatprep.mubr.bf16.mxu0 0
      %665 = vmatmul.mubr.bf16.gmra.mrb[0].mxu0 %v482
      %v666 = vpop.f32.mrb[0].mxu0
      %v667 = vadd.f32 0.0, %v666
      %v668 = vpop.f32.mrb[0].mxu0
      %v669 = vpop.f32.mrb[0].mxu0
      %v670 = vadd.f32 0.0, %v669
      %v671 = vpop.f32.mrb[0].mxu0
      %672 = vmatprep.mubr.bf16.mxu0 0
      %673 = vmatmul.mubr.bf16.gmra.mrb[0].mxu0 %v483
      %v674 = vpop.f32.mrb[0].mxu0
      %v675 = vadd.f32 0.0, %v674
      %v676 = vpop.f32.mrb[0].mxu0
      %v677 = vpop.f32.mrb[0].mxu0
      %v678 = vadd.f32 0.0, %v677
      %v679 = vpop.f32.mrb[0].mxu0
      %680 = vmatprep.mubr.bf16.mxu0 0
      %681 = vmatmul.mubr.bf16.gmra.mrb[0].mxu0 %v484
      %v682 = vpop.f32.mrb[0].mxu0
      %v683 = vadd.f32 0.0, %v682
      %v684 = vpop.f32.mrb[0].mxu0
      %v685 = vpop.f32.mrb[0].mxu0
      %v686 = vadd.f32 0.0, %v685
      %v687 = vpop.f32.mrb[0].mxu0
      %688 = vmatprep.mubr.bf16.mxu0 0
      %689 = vmatmul.mubr.bf16.gmra.mrb[0].mxu0 %v485
      %v690 = vpop.f32.mrb[0].mxu0
      %v691 = vadd.f32 0.0, %v690
      %v692 = vpop.f32.mrb[0].mxu0
      %v693 = vpop.f32.mrb[0].mxu0
      %v694 = vadd.f32 0.0, %v693
      %v695 = vpop.f32.mrb[0].mxu0
      %696 = vmatprep.mubr.bf16.mxu0 0
      %697 = vmatmul.mubr.bf16.gmra.mrb[0].mxu0 %v486
      %v698 = vpop.f32.mrb[0].mxu0
      %v699 = vadd.f32 0.0, %v698
      %v700 = vpop.f32.mrb[0].mxu0
      %v701 = vpop.f32.mrb[0].mxu0
      %v702 = vadd.f32 0.0, %v701
      %v703 = vpop.f32.mrb[0].mxu0
      %704 = vmatprep.mubr.bf16.mxu0 0
      %705 = vmatmul.mubr.bf16.gmra.mrb[0].mxu0 %v487
      %v706 = vpop.f32.mrb[0].mxu0
      %v707 = vadd.f32 0.0, %v706
      %v708 = vpop.f32.mrb[0].mxu0
      %v709 = vpop.f32.mrb[0].mxu0
      %v710 = vadd.f32 0.0, %v709
      %v711 = vpop.f32.mrb[0].mxu0
      %712 = vdwg.mxu0
      %v713 = vadd.f32 %v360, %v587
      %v714 = vadd.f32 %v361, %v590
      %v715 = vadd.f32 %v362, %v595
      %v716 = vadd.f32 %v363, %v598
      %v717 = vadd.f32 %v364, %v603
      %v718 = vadd.f32 %v365, %v606
      %v719 = vadd.f32 %v366, %v611
      %v720 = vadd.f32 %v367, %v614
      %v721 = vadd.f32 %v368, %v619
      %v722 = vadd.f32 %v369, %v622
      %v723 = vadd.f32 %v370, %v627
      %v724 = vadd.f32 %v371, %v630
      %v725 = vadd.f32 %v372, %v635
      %v726 = vadd.f32 %v373, %v638
      %v727 = vadd.f32 %v374, %v643
      %v728 = vadd.f32 %v375, %v646
      %v729 = vadd.f32 %v376, %v651
      %v730 = vadd.f32 %v377, %v654
      %v731 = vadd.f32 %v378, %v659
      %v732 = vadd.f32 %v379, %v662
      %v733 = vadd.f32 %v380, %v667
      %v734 = vadd.f32 %v381, %v670
      %v735 = vadd.f32 %v382, %v675
      %v736 = vadd.f32 %v383, %v678
      %v737 = vadd.f32 %v384, %v683
      %v738 = vadd.f32 %v385, %v686
      %v739 = vadd.f32 %v386, %v691
      %v740 = vadd.f32 %v387, %v694
      %v741 = vadd.f32 %v388, %v699
      %v742 = vadd.f32 %v389, %v702
      %v743 = vadd.f32 %v390, %v707
      %v744 = vadd.f32 %v391, %v710
      %745 = vst [vmem:[#allocation2] sm:$0xff] %v713
      %746 = vst [vmem:[#allocation2 + $0x8] sm:$0xff] %v714
      %747 = vst [vmem:[#allocation2 + $0x10] sm:$0xff] %v715
      %748 = vst [vmem:[#allocation2 + $0x18] sm:$0xff] %v716
      %749 = vst [vmem:[#allocation2 + $0x20] sm:$0xff] %v717
      %750 = vst [vmem:[#allocation2 + $0x28] sm:$0xff] %v718
      %751 = vst [vmem:[#allocation2 + $0x30] sm:$0xff] %v719
      %752 = vst [vmem:[#allocation2 + $0x38] sm:$0xff] %v720
      %753 = vst [vmem:[#allocation2 + $0x40] sm:$0xff] %v721
      %754 = vst [vmem:[#allocation2 + $0x48] sm:$0xff] %v722
      %755 = vst [vmem:[#allocation2 + $0x50] sm:$0xff] %v723
      %756 = vst [vmem:[#allocation2 + $0x58] sm:$0xff] %v724
      %757 = vst [vmem:[#allocation2 + $0x60] sm:$0xff] %v725
      %758 = vst [vmem:[#allocation2 + $0x68] sm:$0xff] %v726
      %759 = vst [vmem:[#allocation2 + $0x70] sm:$0xff] %v727
      %760 = vst [vmem:[#allocation2 + $0x78] sm:$0xff] %v728
      %761 = vst [vmem:[#allocation2 + $0x80] sm:$0xff] %v729
      %762 = vst [vmem:[#allocation2 + $0x88] sm:$0xff] %v730
      %763 = vst [vmem:[#allocation2 + $0x90] sm:$0xff] %v731
      %764 = vst [vmem:[#allocation2 + $0x98] sm:$0xff] %v732
      %765 = vst [vmem:[#allocation2 + $0xa0] sm:$0xff] %v733
      %766 = vst [vmem:[#allocation2 + $0xa8] sm:$0xff] %v734
      %767 = vst [vmem:[#allocation2 + $0xb0] sm:$0xff] %v735
      %768 = vst [vmem:[#allocation2 + $0xb8] sm:$0xff] %v736
      %769 = vst [vmem:[#allocation2 + $0xc0] sm:$0xff] %v737
      %770 = vst [vmem:[#allocation2 + $0xc8] sm:$0xff] %v738
      %771 = vst [vmem:[#allocation2 + $0xd0] sm:$0xff] %v739
      %772 = vst [vmem:[#allocation2 + $0xd8] sm:$0xff] %v740
      %773 = vst [vmem:[#allocation2 + $0xe0] sm:$0xff] %v741
      %774 = vst [vmem:[#allocation2 + $0xe8] sm:$0xff] %v742
      %775 = vst [vmem:[#allocation2 + $0xf0] sm:$0xff] %v743
      %776 = vst [vmem:[#allocation2 + $0xf8] sm:$0xff] %v744
      // Predicated region
      $region37: #{_lambda_.10} parent=31 // pred_check
        %p777 = pneg %p260
      $region38: #{_lambda_.10} parent=31 // pred_check_branch
        %779 = sbr.rel (%p777) target = $region40
      $region39: #{_lambda_.10} parent=31 // pred_region
        %v780 = vld [vmem:[#allocation2] sm:$0xff]
        %v781 = vld [vmem:[#allocation2 + $0x8] sm:$0xff]
        %v782 = vld [vmem:[#allocation2 + $0x10] sm:$0xff]
        %v783 = vld [vmem:[#allocation2 + $0x18] sm:$0xff]
        %v784 = vld [vmem:[#allocation2 + $0x20] sm:$0xff]
        %v785 = vld [vmem:[#allocation2 + $0x28] sm:$0xff]
        %v786 = vld [vmem:[#allocation2 + $0x30] sm:$0xff]
        %v787 = vld [vmem:[#allocation2 + $0x38] sm:$0xff]
        %v788 = vld [vmem:[#allocation2 + $0x40] sm:$0xff]
        %v789 = vld [vmem:[#allocation2 + $0x48] sm:$0xff]
        %v790 = vld [vmem:[#allocation2 + $0x50] sm:$0xff]
        %v791 = vld [vmem:[#allocation2 + $0x58] sm:$0xff]
        %v792 = vld [vmem:[#allocation2 + $0x60] sm:$0xff]
        %v793 = vld [vmem:[#allocation2 + $0x68] sm:$0xff]
        %v794 = vld [vmem:[#allocation2 + $0x70] sm:$0xff]
        %v795 = vld [vmem:[#allocation2 + $0x78] sm:$0xff]
        %v796 = vld [vmem:[#allocation2 + $0x80] sm:$0xff]
        %v797 = vld [vmem:[#allocation2 + $0x88] sm:$0xff]
        %v798 = vld [vmem:[#allocation2 + $0x90] sm:$0xff]
        %v799 = vld [vmem:[#allocation2 + $0x98] sm:$0xff]
        %v800 = vld [vmem:[#allocation2 + $0xa0] sm:$0xff]
        %v801 = vld [vmem:[#allocation2 + $0xa8] sm:$0xff]
        %v802 = vld [vmem:[#allocation2 + $0xb0] sm:$0xff]
        %v803 = vld [vmem:[#allocation2 + $0xb8] sm:$0xff]
        %v804 = vld [vmem:[#allocation2 + $0xc0] sm:$0xff]
        %v805 = vld [vmem:[#allocation2 + $0xc8] sm:$0xff]
        %v806 = vld [vmem:[#allocation2 + $0xd0] sm:$0xff]
        %v807 = vld [vmem:[#allocation2 + $0xd8] sm:$0xff]
        %v808 = vld [vmem:[#allocation2 + $0xe0] sm:$0xff]
        %v809 = vld [vmem:[#allocation2 + $0xe8] sm:$0xff]
        %v810 = vld [vmem:[#allocation2 + $0xf0] sm:$0xff]
        %v811 = vld [vmem:[#allocation2 + $0xf8] sm:$0xff]
        %v812 = vld [vmem:[%s249] sm:$0x1]
        %v814 = vlaneseq
        %v815 = vshrl.u32 %v814, 7
        %v816 = vsub.s32 0, %v815
        %v817 = vrot.slane %v812, %v816
        %v819 = vadd.f32 %v780, %v817
        %v820 = vadd.f32 %v781, %v817
        %v821 = vadd.f32 %v782, %v817
        %v822 = vadd.f32 %v783, %v817
        %v823 = vadd.f32 %v784, %v817
        %v824 = vadd.f32 %v785, %v817
        %v825 = vadd.f32 %v786, %v817
        %v826 = vadd.f32 %v787, %v817
        %v827 = vadd.f32 %v788, %v817
        %v828 = vadd.f32 %v789, %v817
        %v829 = vadd.f32 %v790, %v817
        %v830 = vadd.f32 %v791, %v817
        %v831 = vadd.f32 %v792, %v817
        %v832 = vadd.f32 %v793, %v817
        %v833 = vadd.f32 %v794, %v817
        %v834 = vadd.f32 %v795, %v817
        %v835 = vadd.f32 %v796, %v817
        %v836 = vadd.f32 %v797, %v817
        %v837 = vadd.f32 %v798, %v817
        %v838 = vadd.f32 %v799, %v817
        %v839 = vadd.f32 %v800, %v817
        %v840 = vadd.f32 %v801, %v817
        %v841 = vadd.f32 %v802, %v817
        %v842 = vadd.f32 %v803, %v817
        %v843 = vadd.f32 %v804, %v817
        %v844 = vadd.f32 %v805, %v817
        %v845 = vadd.f32 %v806, %v817
        %v846 = vadd.f32 %v807, %v817
        %v847 = vadd.f32 %v808, %v817
        %v848 = vadd.f32 %v809, %v817
        %v849 = vadd.f32 %v810, %v817
        %v850 = vadd.f32 %v811, %v817
        %v851 = vtanh.pop %v819
        %v852 = vtanh.pop %v820
        %v853 = vtanh.pop %v821
        %v854 = vtanh.pop %v822
        %v855 = vtanh.pop %v823
        %v856 = vtanh.pop %v824
        %v857 = vtanh.pop %v825
        %v858 = vtanh.pop %v826
        %v859 = vtanh.pop %v827
        %v860 = vtanh.pop %v828
        %v861 = vtanh.pop %v829
        %v862 = vtanh.pop %v830
        %v863 = vtanh.pop %v831
        %v864 = vtanh.pop %v832
        %v865 = vtanh.pop %v833
        %v866 = vtanh.pop %v834
        %v867 = vtanh.pop %v835
        %v868 = vtanh.pop %v836
        %v869 = vtanh.pop %v837
        %v870 = vtanh.pop %v838
        %v871 = vtanh.pop %v839
        %v872 = vtanh.pop %v840
        %v873 = vtanh.pop %v841
        %v874 = vtanh.pop %v842
        %v875 = vtanh.pop %v843
        %v876 = vtanh.pop %v844
        %v877 = vtanh.pop %v845
        %v878 = vtanh.pop %v846
        %v879 = vtanh.pop %v847
        %v880 = vtanh.pop %v848
        %v881 = vtanh.pop %v849
        %v882 = vtanh.pop %v850
        %883 = vst [vmem:[%s257] sm:$0xff] %v851
        %884 = vst [vmem:[%s257 + $0x8] sm:$0xff] %v852
        %885 = vst [vmem:[%s257 + $0x10] sm:$0xff] %v853
        %886 = vst [vmem:[%s257 + $0x18] sm:$0xff] %v854
        %887 = vst [vmem:[%s257 + $0x20] sm:$0xff] %v855
        %888 = vst [vmem:[%s257 + $0x28] sm:$0xff] %v856
        %889 = vst [vmem:[%s257 + $0x30] sm:$0xff] %v857
        %890 = vst [vmem:[%s257 + $0x38] sm:$0xff] %v858
        %891 = vst [vmem:[%s257 + $0x40] sm:$0xff] %v859
        %892 = vst [vmem:[%s257 + $0x48] sm:$0xff] %v860
        %893 = vst [vmem:[%s257 + $0x50] sm:$0xff] %v861
        %894 = vst [vmem:[%s257 + $0x58] sm:$0xff] %v862
        %895 = vst [vmem:[%s257 + $0x60] sm:$0xff] %v863
        %896 = vst [vmem:[%s257 + $0x68] sm:$0xff] %v864
        %897 = vst [vmem:[%s257 + $0x70] sm:$0xff] %v865
        %898 = vst [vmem:[%s257 + $0x78] sm:$0xff] %v866
        %899 = vst [vmem:[%s257 + $0x80] sm:$0xff] %v867
        %900 = vst [vmem:[%s257 + $0x88] sm:$0xff] %v868
        %901 = vst [vmem:[%s257 + $0x90] sm:$0xff] %v869
        %902 = vst [vmem:[%s257 + $0x98] sm:$0xff] %v870
        %903 = vst [vmem:[%s257 + $0xa0] sm:$0xff] %v871
        %904 = vst [vmem:[%s257 + $0xa8] sm:$0xff] %v872
        %905 = vst [vmem:[%s257 + $0xb0] sm:$0xff] %v873
        %906 = vst [vmem:[%s257 + $0xb8] sm:$0xff] %v874
        %907 = vst [vmem:[%s257 + $0xc0] sm:$0xff] %v875
        %908 = vst [vmem:[%s257 + $0xc8] sm:$0xff] %v876
        %909 = vst [vmem:[%s257 + $0xd0] sm:$0xff] %v877
        %910 = vst [vmem:[%s257 + $0xd8] sm:$0xff] %v878
        %911 = vst [vmem:[%s257 + $0xe0] sm:$0xff] %v879
        %912 = vst [vmem:[%s257 + $0xe8] sm:$0xff] %v880
        %913 = vst [vmem:[%s257 + $0xf0] sm:$0xff] %v881
        %914 = vst [vmem:[%s257 + $0xf8] sm:$0xff] %v882
      $region40: #{_lambda_.10} parent=31 // pred_fallthru
        _
      %s915 = smul.u32 32, %s19
      %p916 = scmp.lt.s32.totalorder %s915, 95
      %s917 = scalar_select %p916, %s915, 95
      %p918 = scmp.lt.s32.totalorder %s20, 0
      %s919 = scalar_select %p918, %s20, 0
      %s920 = sadd.s32 %s919, %s917
      %s921 = smul.addr %s920, 8
      %s922 = scalar_lea.vmem %s3, %s921
      // Predicated region
      $region41: #{_lambda_.10} parent=31 // pred_check
        %p923 = pneg %p135
      $region42: #{_lambda_.10} parent=31 // pred_check_branch
        %925 = sbr.rel (%p923) target = $region44
      $region43: #{_lambda_.10} parent=31 // pred_region
        %s926 = smul.u32 32, %s19
      $region44: #{_lambda_.10} parent=31 // pred_fallthru
        _
    $region32: #{_lambda_.10} parent=5 // pred_fallthru
      _
    %p927 = scmp.le.s32.totalorder 2, %s9
    // Predicated region
    $region45: #{_lambda_.10} parent=5 // pred_check
      %p928 = pneg %p927
    $region46: #{_lambda_.10} parent=5 // pred_check_branch
      %930 = sbr.rel (%p928) target = $region48
    $region47: #{_lambda_.10} parent=5 // pred_region
      %s931 = ssub.s32 %s9, 2
      // Predicated region
      $region49: #{_lambda_.10} parent=47 // pred_check
        %p932 = pneg %p141
      $region50: #{_lambda_.10} parent=47 // pred_check_branch
        %934 = sbr.rel (%p932) target = $region52
      $region51: #{_lambda_.10} parent=47 // pred_region
        %s935 = smul.u32 32, %s22
        %p936 = scmp.lt.s32.totalorder %s935, 95
        %s937 = scalar_select %p936, %s935, 95
        %p938 = scmp.lt.s32.totalorder %s23, 0
        %s939 = scalar_select %p938, %s23, 0
        %s940 = sadd.s32 %s939, %s937
        %s941 = smul.addr %s940, 8
        %s942 = scalar_lea.vmem %s3, %s941
      $region52: #{_lambda_.10} parent=47 // pred_fallthru
        _
    $region48: #{_lambda_.10} parent=5 // pred_fallthru
      _
  $region6: #{_lambda_.10} parent=0 // loop_footer
    %s13 = sadd.s32 1, %s9
  $region7: #{_lambda_.10} parent=0 // loop_footer_branch
    %8 = sbr.rel target = $region3
  $region8: #{_lambda_.10} parent=0 // loop_exit
    _

// kernel: _lambda_.11
$region0: #{_lambda_.11}
  #allocation0 [shape = 'u32[]', space=smem, size = 0x4, offset = 0x4, fixed_abs, tag = 'smem constant byte address 0x4 - core index']
  #allocation1 [shape = 'u32[144,128]{1,0:T(1,128)}', space=vmem, size = 0x12000, scoped, tag = 'internal scratch']
  %s0 = inlined_call_operand.vmem [shape: f32[32,128], index: 0, kind: input, shape index: {}]
  %s1 = inlined_call_operand.vmem [shape: f32[32,128], index: 1, kind: input, shape index: {}]
  %s2 = inlined_call_operand.vmem [shape: f32[32,128], index: 2, kind: output, shape index: {}]
  %s3 = sld [smem:[#allocation0]]
  $region18: #{_lambda_.11} parent=0
    _
  %s5 = ssub.s32 1, %s3
  %s6 = scalar_select 0, %s5, %s3
  // Predicated region
  $region2: #{_lambda_.11} parent=0 // pred_check
    _
  $region3: #{_lambda_.11} parent=0 // pred_check_branch
    %8 = sbr.rel (0) target = $region5
  $region4: #{_lambda_.11} parent=0 // pred_region
    _
  $region5: #{_lambda_.11} parent=0 // pred_fallthru
    _
  // Predicated region
  $region6: #{_lambda_.11} parent=0 // pred_check
    _
  $region7: #{_lambda_.11} parent=0 // pred_check_branch
    %10 = sbr.rel (0) target = $region9
  $region8: #{_lambda_.11} parent=0 // pred_region
    _
  $region9: #{_lambda_.11} parent=0 // pred_fallthru
    _
  %v11 = vld [vmem:[%s0] sm:$0xff]
  %v12 = vld [vmem:[%s0 + $0x8] sm:$0xff]
  %v13 = vld [vmem:[%s0 + $0x10] sm:$0xff]
  %v14 = vld [vmem:[%s0 + $0x18] sm:$0xff]
  %v15 = vadd.f32 %v11, 1.0
  %v16 = vadd.f32 %v12, 1.0
  %v17 = vadd.f32 %v13, 1.0
  %v18 = vadd.f32 %v14, 1.0
  %v19 = vld [vmem:[%s1] sm:$0xff]
  %v20 = vld [vmem:[%s1 + $0x8] sm:$0xff]
  %v21 = vld [vmem:[%s1 + $0x10] sm:$0xff]
  %v22 = vld [vmem:[%s1 + $0x18] sm:$0xff]
  %v23 = vmul.f32 %v15, %v19
  %v24 = vmul.f32 %v16, %v20
  %v25 = vmul.f32 %v17, %v21
  %v26 = vmul.f32 %v18, %v22
  %v27 = vsub.f32 %v23, 1.0
  %v28 = vsub.f32 %v24, 1.0
  %v29 = vsub.f32 %v25, 1.0
  %v30 = vsub.f32 %v26, 1.0
  %31 = vst [vmem:[%s2] sm:$0xff] %v27
  %32 = vst [vmem:[%s2 + $0x8] sm:$0xff] %v28
  %33 = vst [vmem:[%s2 + $0x10] sm:$0xff] %v29
  %34 = vst [vmem:[%s2 + $0x18] sm:$0xff] %v30
  // Predicated region
  $region10: #{_lambda_.11} parent=0 // pred_check
    _
  $region11: #{_lambda_.11} parent=0 // pred_check_branch
    %36 = sbr.rel (0) target = $region13
  $region12: #{_lambda_.11} parent=0 // pred_region
    _
  $region13: #{_lambda_.11} parent=0 // pred_fallthru
    _
  // Predicated region
  $region14: #{_lambda_.11} parent=0 // pred_check
    _
  $region15: #{_lambda_.11} parent=0 // pred_check_branch
    %38 = sbr.rel (0) target = $region17
  $region16: #{_lambda_.11} parent=0 // pred_region
    _
  $region17: #{_lambda_.11} parent=0 // pred_fallthru
    _

</llo_original>
